<compile_context>
chip_gen: v6e
topology: v6e:2x2x1
jax: 0.10.0
libtpu: 0.0.40
codegen_flags: <defaults>
</compile_context>

<pallas_src>
import functools

import jax
import jax.numpy as jnp
from jax.experimental import pallas as pl
from jax.experimental.pallas import tpu as pltpu


_BN_EPS = 1e-5
_LRELU_SLOPE = 0.2

# RHS row-block -> conv tap (ki, kj) order implied by the grouped tap copies in
# _conv_stats_kernel (xs channel-slot order holds phases [1, 0, 2, 3]).
_TAP_ORDER = ((0, 1), (0, 0), (1, 0), (1, 1),   # lane offset 0     (slots 0..3)
              (0, 2), (1, 2),                   # lane offset 1     (slots 1..2)
              (2, 1), (2, 0),                   # lane offset wh    (slots 0..1)
              (2, 2))                           # lane offset wh+1  (slot 1)


def _round_up(v, m):
    return (v + m - 1) // m * m


def _vmem_limit_bytes():
    """Generation-aware scoped-VMEM budget (v7x only has 64 MiB physical)."""
    try:
        cap = getattr(pltpu.get_tpu_info(), "vmem_capacity_bytes", None)
        if cap:
            return int(min(cap * 3 // 4, 100 * 1024 * 1024))
    except Exception:
        pass
    return 48 * 1024 * 1024


_VMEM_LIMIT = _vmem_limit_bytes()


# ----------------------------------------------------------------------------
# Kernel A: conv as ONE folded-K MXU matmul + per-step BN stat partials.
# ----------------------------------------------------------------------------
def _conv_stats_kernel(xs_ref, w_ref, valid_ref, y_ref, mean_ref, m2_ref,
                       rhs_sc, *, cin, wh, fo, nb, inv_count):
    """xs_ref   : (NB, 4*Cin, F)   bf16 phase-packed padded input
       w_ref    : (Cout, 9*Cin)    bf16 folded conv taps (resident)
       valid_ref: (1, NB*Fo)       f32 junk-column mask (resident)
       y_ref    : (1, Cout, NB*Fo) bf16 raw conv output
       mean_ref : (1, Cout, 1)     f32 per-step mean partial
       m2_ref   : (1, Cout, 1)     f32 per-step centered second-moment partial
       rhs_sc   : (9*Cin, NB*Fo)   bf16 folded-RHS scratch."""
    c = cin
    for b in range(nb):
        lo = b * fo
        sl = slice(lo, lo + fo)
        # Grouped tap gather: 4 contiguous copies per image build the K=9*Cin
        # RHS (offsets 0, 1, wh, wh+1 of the flattened phase planes).
        rhs_sc[0:4 * c, sl] = xs_ref[b, :, 0:fo]                        # (0,1)(0,0)(1,0)(1,1)
        rhs_sc[4 * c:6 * c, sl] = xs_ref[b, c:3 * c, 1:1 + fo]          # (0,2)(1,2)
        rhs_sc[6 * c:8 * c, sl] = xs_ref[b, 0:2 * c, wh:wh + fo]        # (2,1)(2,0)
        rhs_sc[8 * c:9 * c, sl] = xs_ref[b, c:2 * c, wh + 1:wh + 1 + fo]  # (2,2)

    acc = jnp.dot(w_ref[...], rhs_sc[...],
                  preferred_element_type=jnp.float32)        # (Cout, NB*Fo) f32
    y_ref[0] = acc.astype(y_ref.dtype)

    # Per-step centered moments over the valid output positions only
    # (numerically safe -- no E[x^2] - E[x]^2 cancellation).
    valid = valid_ref[...]
    mu = jnp.sum(acc * valid, axis=1, keepdims=True) * inv_count
    d = (acc - mu) * valid
    mean_ref[0] = mu
    m2_ref[0] = jnp.sum(d * d, axis=1, keepdims=True)


# ----------------------------------------------------------------------------
# Kernel B: BatchNorm apply (scale/shift) + LeakyReLU(0.2), bf16 output.
# ----------------------------------------------------------------------------
def _bn_lrelu_kernel(y_ref, scale_ref, shift_ref, o_ref):
    yh = y_ref[0].astype(jnp.float32) * scale_ref[...] + shift_ref[...]
    o_ref[0] = jnp.where(yh > 0, yh, _LRELU_SLOPE * yh).astype(o_ref.dtype)


# ----------------------------------------------------------------------------
# Kernel C (last block): BN + LeakyReLU + global avg pool + Bottleneck.mu.
# ----------------------------------------------------------------------------
def _bn_lrelu_gap_linear_kernel(y_ref, scale_ref, shift_ref, pool_ref,
                                lw_ref, lb_ref, z_ref):
    yh = y_ref[0].astype(jnp.float32) * scale_ref[...] + shift_ref[...]
    act = jnp.where(yh > 0, yh, _LRELU_SLOPE * yh)           # (Cout, NB*Fo)
    # Pooling as a matmul against a block-diagonal (lanes, NB) matrix that
    # already folds the junk-column mask and the 1/(Ho*Wo) average.
    pooled = jnp.dot(act, pool_ref[...],
                     preferred_element_type=jnp.float32)     # (Cout, NB)
    z_ref[0] = (jnp.dot(lw_ref[...], pooled,
                        preferred_element_type=jnp.float32) + lb_ref[...])


# ----------------------------------------------------------------------------
# Wrappers
# ----------------------------------------------------------------------------
def _space_to_batch(x_nchw):
    """(N, C, H, W) -> (N, 4*C, Hh*Wh) bf16 phase-packed padded layout.

    Row padding (1, 3) / col padding (1, 1) makes every 3x3 stride-2 tap a
    contiguous in-bounds slice of the flattened phase plane.  Channel slots
    hold phases in the order [1, 0, 2, 3] so that every tap-offset group is a
    contiguous channel range inside the kernel."""
    n, c, h, w = x_nchw.shape
    assert h % 2 == 0 and w % 2 == 0, "even spatial dims expected"
    hh, wh = (h + 4) // 2, (w + 2) // 2
    xp = jnp.pad(x_nchw, ((0, 0), (0, 0), (1, 3), (1, 1)))
    x6 = xp.reshape(n, c, hh, 2, wh, 2)
    planes = jnp.stack([x6[:, :, :, 0, :, 1],   # phase 1 -> slot 0
                        x6[:, :, :, 0, :, 0],   # phase 0 -> slot 1
                        x6[:, :, :, 1, :, 0],   # phase 2 -> slot 2
                        x6[:, :, :, 1, :, 1]],  # phase 3 -> slot 3
                       axis=1)                  # (N, 4, C, Hh, Wh)
    xs = planes.reshape(n, 4 * c, hh * wh).astype(jnp.bfloat16)
    return xs, hh, wh


def _pick_nb(n, cin, cout, f, fo, budget):
    """Largest batch-per-step that keeps the per-step VMEM footprint sane."""
    def step_bytes(nb):
        ci4 = _round_up(4 * cin, 8)
        fpad = _round_up(f, 128)
        lanes = _round_up(nb * fo, 128)
        cop = _round_up(cout, 8)
        k9 = _round_up(9 * cin, 8)
        return (2 * nb * ci4 * fpad * 2           # xs in (double-buffered bf16)
                + 2 * cop * lanes * 2             # y out (double-buffered bf16)
                + k9 * lanes * 2                  # RHS scratch (bf16)
                + cop * lanes * 4                 # f32 conv result
                + 2 * cop * _round_up(9 * cin, 128) * 2)   # resident weights
    best = 1
    for nb in range(1, n + 1):
        if n % nb:
            continue
        if step_bytes(nb) > budget:
            break
        best = nb
        if nb * fo >= 2048 or nb >= 64:           # lane-dense enough
            break
    return best


def conv_block(x_nchw, w_oihw, gamma, beta, head=None):
    """One Encoder block.  If `head` is given this is the last block and the
    GAP + Flatten + Bottleneck.mu Linear are fused in (Kernel C)."""
    n, cin, h, w = x_nchw.shape
    cout = w_oihw.shape[0]
    ho, wo = h // 2, w // 2
    xs, hh, wh = _space_to_batch(x_nchw)
    f = hh * wh
    fo = ho * wh

    nb = _pick_nb(n, cin, cout, f, fo, budget=_VMEM_LIMIT // 2)
    n_steps = n // nb
    lanes = nb * fo
    m_step = float(nb * ho * wo)

    # Folded (Cout, 9*Cin) conv weights in RHS row-block order.
    w2 = jnp.concatenate([w_oihw[:, :, ki, kj] for ki, kj in _TAP_ORDER],
                         axis=1).astype(jnp.bfloat16)

    # Junk-column mask (Fo is a multiple of wh, so lane % wh < wo also works
    # for the NB-batched layout).  Precomputed once, resident in VMEM.
    lane = jnp.arange(lanes, dtype=jnp.int32)
    valid = ((lane % wh) < wo).astype(jnp.float32).reshape(1, lanes)

    kern_a = functools.partial(_conv_stats_kernel, cin=cin, wh=wh, fo=fo,
                               nb=nb, inv_count=1.0 / m_step)
    y, mean_p, m2_p = pl.pallas_call(
        kern_a,
        grid=(n_steps,),
        in_specs=[
            pl.BlockSpec((nb, 4 * cin, f), lambda i: (i, 0, 0)),
            pl.BlockSpec((cout, 9 * cin), lambda i: (0, 0)),   # resident W
            pl.BlockSpec((1, lanes), lambda i: (0, 0)),        # resident mask
        ],
        out_specs=[
            pl.BlockSpec((1, cout, lanes), lambda i: (i, 0, 0)),
            pl.BlockSpec((1, cout, 1), lambda i: (i, 0, 0)),
            pl.BlockSpec((1, cout, 1), lambda i: (i, 0, 0)),
        ],
        out_shape=[
            jax.ShapeDtypeStruct((n_steps, cout, lanes), jnp.bfloat16),
            jax.ShapeDtypeStruct((n_steps, cout, 1), jnp.float32),
            jax.ShapeDtypeStruct((n_steps, cout, 1), jnp.float32),
        ],
        scratch_shapes=[pltpu.VMEM((9 * cin, lanes), jnp.bfloat16)],
        compiler_params=pltpu.CompilerParams(
            dimension_semantics=("parallel",),     # per-step partial stats
            vmem_limit_bytes=_VMEM_LIMIT),
        cost_estimate=pl.CostEstimate(
            flops=2 * n * 9 * cin * cout * fo,
            transcendentals=0,
            bytes_accessed=xs.size * 2 + w2.size * 2 + n_steps * cout * lanes * 2),
    )(xs, w2, valid)

    # Parallel-variance merge of the equal-count per-step partials (wrapper
    # side, tiny), then fold the BN affine into one scale/shift pair.
    mean_t = mean_p[:, :, 0]                       # (n_steps, Cout)
    m2_t = m2_p[:, :, 0]
    mean = jnp.mean(mean_t, axis=0)
    m2 = jnp.sum(m2_t, axis=0) + m_step * jnp.sum((mean_t - mean) ** 2, axis=0)
    var = m2 / (m_step * n_steps)                  # biased var (train-mode BN)
    inv_std = jax.lax.rsqrt(var + _BN_EPS)
    scale = (gamma * inv_std).reshape(cout, 1).astype(jnp.float32)
    shift = (beta - mean * gamma * inv_std).reshape(cout, 1).astype(jnp.float32)

    if head is None:
        act = pl.pallas_call(
            _bn_lrelu_kernel,
            grid=(n_steps,),
            in_specs=[
                pl.BlockSpec((1, cout, lanes), lambda i: (i, 0, 0)),
                pl.BlockSpec((cout, 1), lambda i: (0, 0)),
                pl.BlockSpec((cout, 1), lambda i: (0, 0)),
            ],
            out_specs=pl.BlockSpec((1, cout, lanes), lambda i: (i, 0, 0)),
            out_shape=jax.ShapeDtypeStruct((n_steps, cout, lanes), jnp.bfloat16),
            compiler_params=pltpu.CompilerParams(
                dimension_semantics=("parallel",),
                vmem_limit_bytes=_VMEM_LIMIT),
            cost_estimate=pl.CostEstimate(
                flops=3 * n_steps * cout * lanes, transcendentals=0,
                bytes_accessed=n_steps * cout * lanes * 4),
        )(y, scale, shift)
        # TODO(synk): remaining inter-block glue (bf16 unflatten + next-block
        # phase decomposition) runs in XLA as one fused pass.
        act = act.reshape(n_steps, cout, nb, ho, wh)
        act = act.transpose(0, 2, 1, 3, 4).reshape(n, cout, ho, wh)
        return act[:, :, :, :wo]                   # bf16 NCHW for next block

    lw, lb = head                                  # lw: (L, C), lb: (L,)
    latent = lw.shape[0]
    # Block-diagonal pooling matrix: folds junk-column mask + 1/(Ho*Wo).
    img = lane // fo
    pool = ((img[:, None] == jnp.arange(nb, dtype=jnp.int32)[None, :])
            .astype(jnp.float32)) * (valid.reshape(lanes, 1) / float(ho * wo))
    z3 = pl.pallas_call(
        _bn_lrelu_gap_linear_kernel,
        grid=(n_steps,),
        in_specs=[
            pl.BlockSpec((1, cout, lanes), lambda i: (i, 0, 0)),
            pl.BlockSpec((cout, 1), lambda i: (0, 0)),
            pl.BlockSpec((cout, 1), lambda i: (0, 0)),
            pl.BlockSpec((lanes, nb), lambda i: (0, 0)),
            pl.BlockSpec((latent, cout), lambda i: (0, 0)),
            pl.BlockSpec((latent, 1), lambda i: (0, 0)),
        ],
        out_specs=pl.BlockSpec((1, latent, nb), lambda i: (i, 0, 0)),
        out_shape=jax.ShapeDtypeStruct((n_steps, latent, nb), jnp.float32),
        compiler_params=pltpu.CompilerParams(
            dimension_semantics=("parallel",),
            vmem_limit_bytes=_VMEM_LIMIT),
        cost_estimate=pl.CostEstimate(
            flops=n_steps * (4 * cout * lanes + 2 * cout * latent * nb),
            transcendentals=0,
            bytes_accessed=n_steps * cout * lanes * 2 + latent * cout * 4),
    )(y, scale, shift, pool, lw.astype(jnp.float32), lb.reshape(latent, 1))
    return jnp.transpose(z3, (0, 2, 1)).reshape(n, latent)


def encoder_forward(x_nchw, conv_params, head_params):
    """Full Encoder: 4 conv blocks -> GAP -> Flatten -> Bottleneck.mu."""
    x = x_nchw.astype(jnp.float32)
    num_blocks = len(conv_params)
    for i, (w, gamma, beta) in enumerate(conv_params):
        head = head_params if i == num_blocks - 1 else None
        x = conv_block(x, w, gamma, beta, head=head)
    return x


# ----------------------------------------------------------------------------
# Deterministic parameter construction (matches the module's shapes)
# ----------------------------------------------------------------------------
def init_encoder_params(key, in_channels, out_channels, latent_dim,
                        num_blocks=4):
    # make_layers channel schedule: in -> C/8 -> C/4 -> C/2 -> C (num_blocks=4)
    chans = [out_channels // (2 ** (num_blocks - 1 - i))
             for i in range(num_blocks)]
    conv_params = []
    cin = in_channels
    for cout in chans:
        key, kw, kg, kb = jax.random.split(key, 4)
        w = jax.random.normal(kw, (cout, cin, 3, 3), jnp.float32) / jnp.sqrt(
            9.0 * cin)                               # torch OIHW layout
        gamma = 1.0 + 0.1 * jax.random.normal(kg, (cout,), jnp.float32)
        beta = 0.1 * jax.random.normal(kb, (cout,), jnp.float32)
        conv_params.append((w, gamma, beta))
        cin = cout
    key, k1, k2 = jax.random.split(key, 3)
    lw = jax.random.normal(k1, (latent_dim, out_channels),
                           jnp.float32) / jnp.sqrt(float(out_channels))
    lb = 0.01 * jax.random.normal(k2, (latent_dim,), jnp.float32)
    return conv_params, (lw, lb)


# ----------------------------------------------------------------------------
if __name__ == "__main__":
    key = jax.random.PRNGKey(0)
    n, cin, h, w = 2, 4, 16, 16          # input_shape = (4, 16, 16)
    out_channels, latent_dim, num_blocks = 32, 16, 4

    kx, kp = jax.random.split(key)
    x = jax.random.normal(kx, (n, cin, h, w), jnp.float32)
    conv_params, head_params = init_encoder_params(
        kp, cin, out_channels, latent_dim, num_blocks)

    z = jax.jit(encoder_forward)(x, conv_params, head_params)
    z = jax.block_until_ready(z)

    assert z.shape == (n, latent_dim), z.shape
    assert bool(jnp.all(jnp.isfinite(z)))
    print("KERNEL_OK")
</pallas_src>

<mosaic_0001>
module attributes {stable_mosaic.version = 11 : i64} {
  func.func @_conv_stats_kernel(%arg0: i32, %arg1: memref<2x16x90xbf16, #tpu.memory_space<vmem>>, %arg2: memref<4x36xbf16, #tpu.memory_space<vmem>>, %arg3: memref<1x144xf32, #tpu.memory_space<vmem>>, %arg4: memref<1x4x144xbf16, #tpu.memory_space<vmem>>, %arg5: memref<1x4x1xf32, #tpu.memory_space<vmem>>, %arg6: memref<1x4x1xf32, #tpu.memory_space<vmem>>, %arg7: memref<36x144xbf16, #tpu.memory_space<vmem>>) attributes {dimension_semantics = [#tpu.dimension_semantics<parallel>], iteration_bounds = array<i64: 1>, scalar_prefetch = 0 : i64, scratch_operands = 1 : i64, tpu.core_type = #tpu.core_type<tc>, window_params = [{transform_indices = @transform_0, window_bounds = array<i64: 2, 16, 90>}, {pipeline_mode = #tpu.pipeline_mode<synchronous>, transform_indices = @transform_1, window_bounds = array<i64: 4, 36>}, {pipeline_mode = #tpu.pipeline_mode<synchronous>, transform_indices = @transform_2, window_bounds = array<i64: 1, 144>}, {transform_indices = @transform_3, window_bounds = array<i64: 1, 4, 144>}, {transform_indices = @transform_4, window_bounds = array<i64: 1, 4, 1>}, {transform_indices = @transform_5, window_bounds = array<i64: 1, 4, 1>}]} {
    %c0 = arith.constant 0 : index
    %c0_0 = arith.constant 0 : index
    %c0_1 = arith.constant 0 : index
    %0 = vector.load %arg1[%c0, %c0_0, %c0_1] : memref<2x16x90xbf16, #tpu.memory_space<vmem>>, vector<1x16x72xbf16>
    %1 = vector.shape_cast %0 : vector<1x16x72xbf16> to vector<16x72xbf16>
    %c0_2 = arith.constant 0 : index
    %c0_3 = arith.constant 0 : index
    %2 = vector.load %arg7[%c0_2, %c0_3] : memref<36x144xbf16, #tpu.memory_space<vmem>>, vector<16x72xbf16>
    tpu.vector_store %arg7[%c0_2, %c0_3], %1 {strides = array<i32>} : memref<36x144xbf16, #tpu.memory_space<vmem>>, vector<16x72xbf16>,
    %c0_4 = arith.constant 0 : index
    %c4 = arith.constant 4 : index
    %c1 = arith.constant 1 : index
    %3 = vector.load %arg1[%c0_4, %c4, %c1] : memref<2x16x90xbf16, #tpu.memory_space<vmem>>, vector<1x8x72xbf16>
    %4 = vector.shape_cast %3 : vector<1x8x72xbf16> to vector<8x72xbf16>
    %c16 = arith.constant 16 : index
    %c0_5 = arith.constant 0 : index
    %5 = vector.load %arg7[%c16, %c0_5] : memref<36x144xbf16, #tpu.memory_space<vmem>>, vector<8x72xbf16>
    tpu.vector_store %arg7[%c16, %c0_5], %4 {strides = array<i32>} : memref<36x144xbf16, #tpu.memory_space<vmem>>, vector<8x72xbf16>,
    %c0_6 = arith.constant 0 : index
    %c0_7 = arith.constant 0 : index
    %c9 = arith.constant 9 : index
    %6 = vector.load %arg1[%c0_6, %c0_7, %c9] : memref<2x16x90xbf16, #tpu.memory_space<vmem>>, vector<1x8x72xbf16>
    %7 = vector.shape_cast %6 : vector<1x8x72xbf16> to vector<8x72xbf16>
    %c24 = arith.constant 24 : index
    %c0_8 = arith.constant 0 : index
    %8 = vector.load %arg7[%c24, %c0_8] : memref<36x144xbf16, #tpu.memory_space<vmem>>, vector<8x72xbf16>
    tpu.vector_store %arg7[%c24, %c0_8], %7 {strides = array<i32>} : memref<36x144xbf16, #tpu.memory_space<vmem>>, vector<8x72xbf16>,
    %c0_9 = arith.constant 0 : index
    %c4_10 = arith.constant 4 : index
    %c10 = arith.constant 10 : index
    %9 = vector.load %arg1[%c0_9, %c4_10, %c10] : memref<2x16x90xbf16, #tpu.memory_space<vmem>>, vector<1x4x72xbf16>
    %10 = vector.shape_cast %9 : vector<1x4x72xbf16> to vector<4x72xbf16>
    %c32 = arith.constant 32 : index
    %c0_11 = arith.constant 0 : index
    %11 = vector.load %arg7[%c32, %c0_11] : memref<36x144xbf16, #tpu.memory_space<vmem>>, vector<4x72xbf16>
    tpu.vector_store %arg7[%c32, %c0_11], %10 {strides = array<i32>} : memref<36x144xbf16, #tpu.memory_space<vmem>>, vector<4x72xbf16>,
    %c1_12 = arith.constant 1 : index
    %c0_13 = arith.constant 0 : index
    %c0_14 = arith.constant 0 : index
    %12 = vector.load %arg1[%c1_12, %c0_13, %c0_14] : memref<2x16x90xbf16, #tpu.memory_space<vmem>>, vector<1x16x72xbf16>
    %13 = vector.shape_cast %12 : vector<1x16x72xbf16> to vector<16x72xbf16>
    %c0_15 = arith.constant 0 : index
    %c72 = arith.constant 72 : index
    %14 = vector.load %arg7[%c0_15, %c72] : memref<36x144xbf16, #tpu.memory_space<vmem>>, vector<16x72xbf16>
    tpu.vector_store %arg7[%c0_15, %c72], %13 {strides = array<i32>} : memref<36x144xbf16, #tpu.memory_space<vmem>>, vector<16x72xbf16>,
    %c1_16 = arith.constant 1 : index
    %c4_17 = arith.constant 4 : index
    %c1_18 = arith.constant 1 : index
    %15 = vector.load %arg1[%c1_16, %c4_17, %c1_18] : memref<2x16x90xbf16, #tpu.memory_space<vmem>>, vector<1x8x72xbf16>
    %16 = vector.shape_cast %15 : vector<1x8x72xbf16> to vector<8x72xbf16>
    %c16_19 = arith.constant 16 : index
    %c72_20 = arith.constant 72 : index
    %17 = vector.load %arg7[%c16_19, %c72_20] : memref<36x144xbf16, #tpu.memory_space<vmem>>, vector<8x72xbf16>
    tpu.vector_store %arg7[%c16_19, %c72_20], %16 {strides = array<i32>} : memref<36x144xbf16, #tpu.memory_space<vmem>>, vector<8x72xbf16>,
    %c1_21 = arith.constant 1 : index
    %c0_22 = arith.constant 0 : index
    %c9_23 = arith.constant 9 : index
    %18 = vector.load %arg1[%c1_21, %c0_22, %c9_23] : memref<2x16x90xbf16, #tpu.memory_space<vmem>>, vector<1x8x72xbf16>
    %19 = vector.shape_cast %18 : vector<1x8x72xbf16> to vector<8x72xbf16>
    %c24_24 = arith.constant 24 : index
    %c72_25 = arith.constant 72 : index
    %20 = vector.load %arg7[%c24_24, %c72_25] : memref<36x144xbf16, #tpu.memory_space<vmem>>, vector<8x72xbf16>
    tpu.vector_store %arg7[%c24_24, %c72_25], %19 {strides = array<i32>} : memref<36x144xbf16, #tpu.memory_space<vmem>>, vector<8x72xbf16>,
    %c1_26 = arith.constant 1 : index
    %c4_27 = arith.constant 4 : index
    %c10_28 = arith.constant 10 : index
    %21 = vector.load %arg1[%c1_26, %c4_27, %c10_28] : memref<2x16x90xbf16, #tpu.memory_space<vmem>>, vector<1x4x72xbf16>
    %22 = vector.shape_cast %21 : vector<1x4x72xbf16> to vector<4x72xbf16>
    %c32_29 = arith.constant 32 : index
    %c72_30 = arith.constant 72 : index
    %23 = vector.load %arg7[%c32_29, %c72_30] : memref<36x144xbf16, #tpu.memory_space<vmem>>, vector<4x72xbf16>
    tpu.vector_store %arg7[%c32_29, %c72_30], %22 {strides = array<i32>} : memref<36x144xbf16, #tpu.memory_space<vmem>>, vector<4x72xbf16>,
    %c0_31 = arith.constant 0 : index
    %c0_32 = arith.constant 0 : index
    %24 = vector.load %arg2[%c0_31, %c0_32] : memref<4x36xbf16, #tpu.memory_space<vmem>>, vector<4x36xbf16>
    %c0_33 = arith.constant 0 : index
    %c0_34 = arith.constant 0 : index
    %25 = vector.load %arg7[%c0_33, %c0_34] : memref<36x144xbf16, #tpu.memory_space<vmem>>, vector<36x144xbf16>
    %cst = arith.constant dense<0.000000e+00> : vector<4x144xf32>
    %26 = tpu.matmul %24, %25, %cst {dimension_numbers = #tpu.dot_dimension_numbers<[1], [0], [0], [1], [0, 0, 1, 1], [], []>} : vector<4x36xbf16>, vector<36x144xbf16>, vector<4x144xf32> -> vector<4x144xf32>
    %27 = arith.truncf %26 : vector<4x144xf32> to vector<4x144xbf16>
    %c0_35 = arith.constant 0 : index
    %c0_36 = arith.constant 0 : index
    %c0_37 = arith.constant 0 : index
    %28 = vector.load %arg4[%c0_35, %c0_36, %c0_37] : memref<1x4x144xbf16, #tpu.memory_space<vmem>>, vector<1x4x144xbf16>
    %29 = vector.shape_cast %28 : vector<1x4x144xbf16> to vector<4x144xbf16>
    %30 = vector.shape_cast %27 : vector<4x144xbf16> to vector<1x4x144xbf16>
    tpu.vector_store %arg4[%c0_35, %c0_36, %c0_37], %30 {strides = array<i32>} : memref<1x4x144xbf16, #tpu.memory_space<vmem>>, vector<1x4x144xbf16>,
    %c0_38 = arith.constant 0 : index
    %c0_39 = arith.constant 0 : index
    %31 = vector.load %arg3[%c0_38, %c0_39] : memref<1x144xf32, #tpu.memory_space<vmem>>, vector<1x144xf32>
    %32 = vector.broadcast %31 : vector<1x144xf32> to vector<4x144xf32>
    %33 = arith.mulf %26, %32 : vector<4x144xf32>
    %cst_40 = arith.constant dense<0.000000e+00> : vector<4xf32>
    %34 = vector.multi_reduction <add>, %33, %cst_40 [1] : vector<4x144xf32> to vector<4xf32>
    %35 = vector.shape_cast %34 : vector<4xf32> to vector<4x1xf32>
    %cst_41 = arith.constant 7.812500e-03 : f32
    %36 = vector.broadcast %cst_41 : f32 to vector<4x1xf32>
    %37 = arith.mulf %35, %36 : vector<4x1xf32>
    %38 = vector.broadcast %37 : vector<4x1xf32> to vector<4x144xf32>
    %39 = arith.subf %26, %38 : vector<4x144xf32>
    %40 = vector.broadcast %31 : vector<1x144xf32> to vector<4x144xf32>
    %41 = arith.mulf %39, %40 : vector<4x144xf32>
    %c0_42 = arith.constant 0 : index
    %c0_43 = arith.constant 0 : index
    %c0_44 = arith.constant 0 : index
    %42 = vector.load %arg5[%c0_42, %c0_43, %c0_44] : memref<1x4x1xf32, #tpu.memory_space<vmem>>, vector<1x4x1xf32>
    %43 = vector.shape_cast %42 : vector<1x4x1xf32> to vector<4x1xf32>
    %44 = vector.shape_cast %37 : vector<4x1xf32> to vector<1x4x1xf32>
    tpu.vector_store %arg5[%c0_42, %c0_43, %c0_44], %44 {strides = array<i32>} : memref<1x4x1xf32, #tpu.memory_space<vmem>>, vector<1x4x1xf32>,
    %45 = arith.mulf %41, %41 : vector<4x144xf32>
    %cst_45 = arith.constant dense<0.000000e+00> : vector<4xf32>
    %46 = vector.multi_reduction <add>, %45, %cst_45 [1] : vector<4x144xf32> to vector<4xf32>
    %47 = vector.shape_cast %46 : vector<4xf32> to vector<4x1xf32>
    %c0_46 = arith.constant 0 : index
    %c0_47 = arith.constant 0 : index
    %c0_48 = arith.constant 0 : index
    %48 = vector.load %arg6[%c0_46, %c0_47, %c0_48] : memref<1x4x1xf32, #tpu.memory_space<vmem>>, vector<1x4x1xf32>
    %49 = vector.shape_cast %48 : vector<1x4x1xf32> to vector<4x1xf32>
    %50 = vector.shape_cast %47 : vector<4x1xf32> to vector<1x4x1xf32>
    tpu.vector_store %arg6[%c0_46, %c0_47, %c0_48], %50 {strides = array<i32>} : memref<1x4x1xf32, #tpu.memory_space<vmem>>, vector<1x4x1xf32>,
    return
  }
  func.func @transform_0(%arg0: i32) -> (i32, i32, i32) {
    %c0_i32 = arith.constant 0 : i32
    %c0_i32_0 = arith.constant 0 : i32
    %c0_i32_1 = arith.constant 0 : i32
    return %arg0, %c0_i32, %c0_i32_0 : i32, i32, i32
  }
  func.func @transform_1(%arg0: i32) -> (i32, i32) {
    %c0_i32 = arith.constant 0 : i32
    %c0_i32_0 = arith.constant 0 : i32
    %c0_i32_1 = arith.constant 0 : i32
    return %c0_i32, %c0_i32_0 : i32, i32
  }
  func.func @transform_2(%arg0: i32) -> (i32, i32) {
    %c0_i32 = arith.constant 0 : i32
    %c0_i32_0 = arith.constant 0 : i32
    %c0_i32_1 = arith.constant 0 : i32
    return %c0_i32, %c0_i32_0 : i32, i32
  }
  func.func @transform_3(%arg0: i32) -> (i32, i32, i32) {
    %c0_i32 = arith.constant 0 : i32
    %c0_i32_0 = arith.constant 0 : i32
    %c0_i32_1 = arith.constant 0 : i32
    return %arg0, %c0_i32, %c0_i32_0 : i32, i32, i32
  }
  func.func @transform_4(%arg0: i32) -> (i32, i32, i32) {
    %c0_i32 = arith.constant 0 : i32
    %c0_i32_0 = arith.constant 0 : i32
    %c0_i32_1 = arith.constant 0 : i32
    return %arg0, %c0_i32, %c0_i32_0 : i32, i32, i32
  }
  func.func @transform_5(%arg0: i32) -> (i32, i32, i32) {
    %c0_i32 = arith.constant 0 : i32
    %c0_i32_0 = arith.constant 0 : i32
    %c0_i32_1 = arith.constant 0 : i32
    return %arg0, %c0_i32, %c0_i32_0 : i32, i32, i32
  }
}

module attributes {stable_mosaic.version = 11 : i64} {
  func.func @_bn_lrelu_kernel(%arg0: i32, %arg1: memref<1x4x144xbf16, #tpu.memory_space<vmem>>, %arg2: memref<4x1xf32, #tpu.memory_space<vmem>>, %arg3: memref<4x1xf32, #tpu.memory_space<vmem>>, %arg4: memref<1x4x144xbf16, #tpu.memory_space<vmem>>) attributes {dimension_semantics = [#tpu.dimension_semantics<parallel>], iteration_bounds = array<i64: 1>, scalar_prefetch = 0 : i64, scratch_operands = 0 : i64, tpu.core_type = #tpu.core_type<tc>, window_params = [{transform_indices = @transform_0, window_bounds = array<i64: 1, 4, 144>}, {pipeline_mode = #tpu.pipeline_mode<synchronous>, transform_indices = @transform_1, window_bounds = array<i64: 4, 1>}, {pipeline_mode = #tpu.pipeline_mode<synchronous>, transform_indices = @transform_2, window_bounds = array<i64: 4, 1>}, {transform_indices = @transform_3, window_bounds = array<i64: 1, 4, 144>}]} {
    %c0 = arith.constant 0 : index
    %c0_0 = arith.constant 0 : index
    %c0_1 = arith.constant 0 : index
    %0 = vector.load %arg1[%c0, %c0_0, %c0_1] : memref<1x4x144xbf16, #tpu.memory_space<vmem>>, vector<1x4x144xbf16>
    %1 = vector.shape_cast %0 : vector<1x4x144xbf16> to vector<4x144xbf16>
    %2 = arith.extf %1 : vector<4x144xbf16> to vector<4x144xf32>
    %c0_2 = arith.constant 0 : index
    %c0_3 = arith.constant 0 : index
    %3 = vector.load %arg2[%c0_2, %c0_3] : memref<4x1xf32, #tpu.memory_space<vmem>>, vector<4x1xf32>
    %4 = vector.broadcast %3 : vector<4x1xf32> to vector<4x144xf32>
    %5 = arith.mulf %2, %4 : vector<4x144xf32>
    %c0_4 = arith.constant 0 : index
    %c0_5 = arith.constant 0 : index
    %6 = vector.load %arg3[%c0_4, %c0_5] : memref<4x1xf32, #tpu.memory_space<vmem>>, vector<4x1xf32>
    %7 = vector.broadcast %6 : vector<4x1xf32> to vector<4x144xf32>
    %8 = arith.addf %5, %7 : vector<4x144xf32>
    %cst = arith.constant 0.000000e+00 : f32
    %9 = vector.broadcast %cst : f32 to vector<4x144xf32>
    %10 = arith.cmpf ogt, %8, %9 : vector<4x144xf32>
    %cst_6 = arith.constant 2.000000e-01 : f32
    %11 = vector.broadcast %cst_6 : f32 to vector<4x144xf32>
    %12 = arith.mulf %11, %8 : vector<4x144xf32>
    %13 = arith.select %10, %8, %12 : vector<4x144xi1>, vector<4x144xf32>
    %14 = arith.truncf %13 : vector<4x144xf32> to vector<4x144xbf16>
    %c0_7 = arith.constant 0 : index
    %c0_8 = arith.constant 0 : index
    %c0_9 = arith.constant 0 : index
    %15 = vector.load %arg4[%c0_7, %c0_8, %c0_9] : memref<1x4x144xbf16, #tpu.memory_space<vmem>>, vector<1x4x144xbf16>
    %16 = vector.shape_cast %15 : vector<1x4x144xbf16> to vector<4x144xbf16>
    %17 = vector.shape_cast %14 : vector<4x144xbf16> to vector<1x4x144xbf16>
    tpu.vector_store %arg4[%c0_7, %c0_8, %c0_9], %17 {strides = array<i32>} : memref<1x4x144xbf16, #tpu.memory_space<vmem>>, vector<1x4x144xbf16>,
    return
  }
  func.func @transform_0(%arg0: i32) -> (i32, i32, i32) {
    %c0_i32 = arith.constant 0 : i32
    %c0_i32_0 = arith.constant 0 : i32
    %c0_i32_1 = arith.constant 0 : i32
    return %arg0, %c0_i32, %c0_i32_0 : i32, i32, i32
  }
  func.func @transform_1(%arg0: i32) -> (i32, i32) {
    %c0_i32 = arith.constant 0 : i32
    %c0_i32_0 = arith.constant 0 : i32
    %c0_i32_1 = arith.constant 0 : i32
    return %c0_i32, %c0_i32_0 : i32, i32
  }
  func.func @transform_2(%arg0: i32) -> (i32, i32) {
    %c0_i32 = arith.constant 0 : i32
    %c0_i32_0 = arith.constant 0 : i32
    %c0_i32_1 = arith.constant 0 : i32
    return %c0_i32, %c0_i32_0 : i32, i32
  }
  func.func @transform_3(%arg0: i32) -> (i32, i32, i32) {
    %c0_i32 = arith.constant 0 : i32
    %c0_i32_0 = arith.constant 0 : i32
    %c0_i32_1 = arith.constant 0 : i32
    return %arg0, %c0_i32, %c0_i32_0 : i32, i32, i32
  }
}

module attributes {stable_mosaic.version = 11 : i64} {
  func.func @_bn_lrelu_kernel(%arg0: i32, %arg1: memref<1x8x40xbf16, #tpu.memory_space<vmem>>, %arg2: memref<8x1xf32, #tpu.memory_space<vmem>>, %arg3: memref<8x1xf32, #tpu.memory_space<vmem>>, %arg4: memref<1x8x40xbf16, #tpu.memory_space<vmem>>) attributes {dimension_semantics = [#tpu.dimension_semantics<parallel>], iteration_bounds = array<i64: 1>, scalar_prefetch = 0 : i64, scratch_operands = 0 : i64, tpu.core_type = #tpu.core_type<tc>, window_params = [{transform_indices = @transform_0, window_bounds = array<i64: 1, 8, 40>}, {pipeline_mode = #tpu.pipeline_mode<synchronous>, transform_indices = @transform_1, window_bounds = array<i64: 8, 1>}, {pipeline_mode = #tpu.pipeline_mode<synchronous>, transform_indices = @transform_2, window_bounds = array<i64: 8, 1>}, {transform_indices = @transform_3, window_bounds = array<i64: 1, 8, 40>}]} {
    %c0 = arith.constant 0 : index
    %c0_0 = arith.constant 0 : index
    %c0_1 = arith.constant 0 : index
    %0 = vector.load %arg1[%c0, %c0_0, %c0_1] : memref<1x8x40xbf16, #tpu.memory_space<vmem>>, vector<1x8x40xbf16>
    %1 = vector.shape_cast %0 : vector<1x8x40xbf16> to vector<8x40xbf16>
    %2 = arith.extf %1 : vector<8x40xbf16> to vector<8x40xf32>
    %c0_2 = arith.constant 0 : index
    %c0_3 = arith.constant 0 : index
    %3 = vector.load %arg2[%c0_2, %c0_3] : memref<8x1xf32, #tpu.memory_space<vmem>>, vector<8x1xf32>
    %4 = vector.broadcast %3 : vector<8x1xf32> to vector<8x40xf32>
    %5 = arith.mulf %2, %4 : vector<8x40xf32>
    %c0_4 = arith.constant 0 : index
    %c0_5 = arith.constant 0 : index
    %6 = vector.load %arg3[%c0_4, %c0_5] : memref<8x1xf32, #tpu.memory_space<vmem>>, vector<8x1xf32>
    %7 = vector.broadcast %6 : vector<8x1xf32> to vector<8x40xf32>
    %8 = arith.addf %5, %7 : vector<8x40xf32>
    %cst = arith.constant 0.000000e+00 : f32
    %9 = vector.broadcast %cst : f32 to vector<8x40xf32>
    %10 = arith.cmpf ogt, %8, %9 : vector<8x40xf32>
    %cst_6 = arith.constant 2.000000e-01 : f32
    %11 = vector.broadcast %cst_6 : f32 to vector<8x40xf32>
    %12 = arith.mulf %11, %8 : vector<8x40xf32>
    %13 = arith.select %10, %8, %12 : vector<8x40xi1>, vector<8x40xf32>
    %14 = arith.truncf %13 : vector<8x40xf32> to vector<8x40xbf16>
    %c0_7 = arith.constant 0 : index
    %c0_8 = arith.constant 0 : index
    %c0_9 = arith.constant 0 : index
    %15 = vector.load %arg4[%c0_7, %c0_8, %c0_9] : memref<1x8x40xbf16, #tpu.memory_space<vmem>>, vector<1x8x40xbf16>
    %16 = vector.shape_cast %15 : vector<1x8x40xbf16> to vector<8x40xbf16>
    %17 = vector.shape_cast %14 : vector<8x40xbf16> to vector<1x8x40xbf16>
    tpu.vector_store %arg4[%c0_7, %c0_8, %c0_9], %17 {strides = array<i32>} : memref<1x8x40xbf16, #tpu.memory_space<vmem>>, vector<1x8x40xbf16>,
    return
  }
  func.func @transform_0(%arg0: i32) -> (i32, i32, i32) {
    %c0_i32 = arith.constant 0 : i32
    %c0_i32_0 = arith.constant 0 : i32
    %c0_i32_1 = arith.constant 0 : i32
    return %arg0, %c0_i32, %c0_i32_0 : i32, i32, i32
  }
  func.func @transform_1(%arg0: i32) -> (i32, i32) {
    %c0_i32 = arith.constant 0 : i32
    %c0_i32_0 = arith.constant 0 : i32
    %c0_i32_1 = arith.constant 0 : i32
    return %c0_i32, %c0_i32_0 : i32, i32
  }
  func.func @transform_2(%arg0: i32) -> (i32, i32) {
    %c0_i32 = arith.constant 0 : i32
    %c0_i32_0 = arith.constant 0 : i32
    %c0_i32_1 = arith.constant 0 : i32
    return %c0_i32, %c0_i32_0 : i32, i32
  }
  func.func @transform_3(%arg0: i32) -> (i32, i32, i32) {
    %c0_i32 = arith.constant 0 : i32
    %c0_i32_0 = arith.constant 0 : i32
    %c0_i32_1 = arith.constant 0 : i32
    return %arg0, %c0_i32, %c0_i32_0 : i32, i32, i32
  }
}

module attributes {stable_mosaic.version = 11 : i64} {
  func.func @_conv_stats_kernel(%arg0: i32, %arg1: memref<2x16x30xbf16, #tpu.memory_space<vmem>>, %arg2: memref<8x36xbf16, #tpu.memory_space<vmem>>, %arg3: memref<1x40xf32, #tpu.memory_space<vmem>>, %arg4: memref<1x8x40xbf16, #tpu.memory_space<vmem>>, %arg5: memref<1x8x1xf32, #tpu.memory_space<vmem>>, %arg6: memref<1x8x1xf32, #tpu.memory_space<vmem>>, %arg7: memref<36x40xbf16, #tpu.memory_space<vmem>>) attributes {dimension_semantics = [#tpu.dimension_semantics<parallel>], iteration_bounds = array<i64: 1>, scalar_prefetch = 0 : i64, scratch_operands = 1 : i64, tpu.core_type = #tpu.core_type<tc>, window_params = [{transform_indices = @transform_0, window_bounds = array<i64: 2, 16, 30>}, {pipeline_mode = #tpu.pipeline_mode<synchronous>, transform_indices = @transform_1, window_bounds = array<i64: 8, 36>}, {pipeline_mode = #tpu.pipeline_mode<synchronous>, transform_indices = @transform_2, window_bounds = array<i64: 1, 40>}, {transform_indices = @transform_3, window_bounds = array<i64: 1, 8, 40>}, {transform_indices = @transform_4, window_bounds = array<i64: 1, 8, 1>}, {transform_indices = @transform_5, window_bounds = array<i64: 1, 8, 1>}]} {
    %c0 = arith.constant 0 : index
    %c0_0 = arith.constant 0 : index
    %c0_1 = arith.constant 0 : index
    %0 = vector.load %arg1[%c0, %c0_0, %c0_1] : memref<2x16x30xbf16, #tpu.memory_space<vmem>>, vector<1x16x20xbf16>
    %1 = vector.shape_cast %0 : vector<1x16x20xbf16> to vector<16x20xbf16>
    %c0_2 = arith.constant 0 : index
    %c0_3 = arith.constant 0 : index
    %2 = vector.load %arg7[%c0_2, %c0_3] : memref<36x40xbf16, #tpu.memory_space<vmem>>, vector<16x20xbf16>
    tpu.vector_store %arg7[%c0_2, %c0_3], %1 {strides = array<i32>} : memref<36x40xbf16, #tpu.memory_space<vmem>>, vector<16x20xbf16>,
    %c0_4 = arith.constant 0 : index
    %c4 = arith.constant 4 : index
    %c1 = arith.constant 1 : index
    %3 = vector.load %arg1[%c0_4, %c4, %c1] : memref<2x16x30xbf16, #tpu.memory_space<vmem>>, vector<1x8x20xbf16>
    %4 = vector.shape_cast %3 : vector<1x8x20xbf16> to vector<8x20xbf16>
    %c16 = arith.constant 16 : index
    %c0_5 = arith.constant 0 : index
    %5 = vector.load %arg7[%c16, %c0_5] : memref<36x40xbf16, #tpu.memory_space<vmem>>, vector<8x20xbf16>
    tpu.vector_store %arg7[%c16, %c0_5], %4 {strides = array<i32>} : memref<36x40xbf16, #tpu.memory_space<vmem>>, vector<8x20xbf16>,
    %c0_6 = arith.constant 0 : index
    %c0_7 = arith.constant 0 : index
    %c5 = arith.constant 5 : index
    %6 = vector.load %arg1[%c0_6, %c0_7, %c5] : memref<2x16x30xbf16, #tpu.memory_space<vmem>>, vector<1x8x20xbf16>
    %7 = vector.shape_cast %6 : vector<1x8x20xbf16> to vector<8x20xbf16>
    %c24 = arith.constant 24 : index
    %c0_8 = arith.constant 0 : index
    %8 = vector.load %arg7[%c24, %c0_8] : memref<36x40xbf16, #tpu.memory_space<vmem>>, vector<8x20xbf16>
    tpu.vector_store %arg7[%c24, %c0_8], %7 {strides = array<i32>} : memref<36x40xbf16, #tpu.memory_space<vmem>>, vector<8x20xbf16>,
    %c0_9 = arith.constant 0 : index
    %c4_10 = arith.constant 4 : index
    %c6 = arith.constant 6 : index
    %9 = vector.load %arg1[%c0_9, %c4_10, %c6] : memref<2x16x30xbf16, #tpu.memory_space<vmem>>, vector<1x4x20xbf16>
    %10 = vector.shape_cast %9 : vector<1x4x20xbf16> to vector<4x20xbf16>
    %c32 = arith.constant 32 : index
    %c0_11 = arith.constant 0 : index
    %11 = vector.load %arg7[%c32, %c0_11] : memref<36x40xbf16, #tpu.memory_space<vmem>>, vector<4x20xbf16>
    tpu.vector_store %arg7[%c32, %c0_11], %10 {strides = array<i32>} : memref<36x40xbf16, #tpu.memory_space<vmem>>, vector<4x20xbf16>,
    %c1_12 = arith.constant 1 : index
    %c0_13 = arith.constant 0 : index
    %c0_14 = arith.constant 0 : index
    %12 = vector.load %arg1[%c1_12, %c0_13, %c0_14] : memref<2x16x30xbf16, #tpu.memory_space<vmem>>, vector<1x16x20xbf16>
    %13 = vector.shape_cast %12 : vector<1x16x20xbf16> to vector<16x20xbf16>
    %c0_15 = arith.constant 0 : index
    %c20 = arith.constant 20 : index
    %14 = vector.load %arg7[%c0_15, %c20] : memref<36x40xbf16, #tpu.memory_space<vmem>>, vector<16x20xbf16>
    tpu.vector_store %arg7[%c0_15, %c20], %13 {strides = array<i32>} : memref<36x40xbf16, #tpu.memory_space<vmem>>, vector<16x20xbf16>,
    %c1_16 = arith.constant 1 : index
    %c4_17 = arith.constant 4 : index
    %c1_18 = arith.constant 1 : index
    %15 = vector.load %arg1[%c1_16, %c4_17, %c1_18] : memref<2x16x30xbf16, #tpu.memory_space<vmem>>, vector<1x8x20xbf16>
    %16 = vector.shape_cast %15 : vector<1x8x20xbf16> to vector<8x20xbf16>
    %c16_19 = arith.constant 16 : index
    %c20_20 = arith.constant 20 : index
    %17 = vector.load %arg7[%c16_19, %c20_20] : memref<36x40xbf16, #tpu.memory_space<vmem>>, vector<8x20xbf16>
    tpu.vector_store %arg7[%c16_19, %c20_20], %16 {strides = array<i32>} : memref<36x40xbf16, #tpu.memory_space<vmem>>, vector<8x20xbf16>,
    %c1_21 = arith.constant 1 : index
    %c0_22 = arith.constant 0 : index
    %c5_23 = arith.constant 5 : index
    %18 = vector.load %arg1[%c1_21, %c0_22, %c5_23] : memref<2x16x30xbf16, #tpu.memory_space<vmem>>, vector<1x8x20xbf16>
    %19 = vector.shape_cast %18 : vector<1x8x20xbf16> to vector<8x20xbf16>
    %c24_24 = arith.constant 24 : index
    %c20_25 = arith.constant 20 : index
    %20 = vector.load %arg7[%c24_24, %c20_25] : memref<36x40xbf16, #tpu.memory_space<vmem>>, vector<8x20xbf16>
    tpu.vector_store %arg7[%c24_24, %c20_25], %19 {strides = array<i32>} : memref<36x40xbf16, #tpu.memory_space<vmem>>, vector<8x20xbf16>,
    %c1_26 = arith.constant 1 : index
    %c4_27 = arith.constant 4 : index
    %c6_28 = arith.constant 6 : index
    %21 = vector.load %arg1[%c1_26, %c4_27, %c6_28] : memref<2x16x30xbf16, #tpu.memory_space<vmem>>, vector<1x4x20xbf16>
    %22 = vector.shape_cast %21 : vector<1x4x20xbf16> to vector<4x20xbf16>
    %c32_29 = arith.constant 32 : index
    %c20_30 = arith.constant 20 : index
    %23 = vector.load %arg7[%c32_29, %c20_30] : memref<36x40xbf16, #tpu.memory_space<vmem>>, vector<4x20xbf16>
    tpu.vector_store %arg7[%c32_29, %c20_30], %22 {strides = array<i32>} : memref<36x40xbf16, #tpu.memory_space<vmem>>, vector<4x20xbf16>,
    %c0_31 = arith.constant 0 : index
    %c0_32 = arith.constant 0 : index
    %24 = vector.load %arg2[%c0_31, %c0_32] : memref<8x36xbf16, #tpu.memory_space<vmem>>, vector<8x36xbf16>
    %c0_33 = arith.constant 0 : index
    %c0_34 = arith.constant 0 : index
    %25 = vector.load %arg7[%c0_33, %c0_34] : memref<36x40xbf16, #tpu.memory_space<vmem>>, vector<36x40xbf16>
    %cst = arith.constant dense<0.000000e+00> : vector<8x40xf32>
    %26 = tpu.matmul %24, %25, %cst {dimension_numbers = #tpu.dot_dimension_numbers<[1], [0], [0], [1], [0, 0, 1, 1], [], []>} : vector<8x36xbf16>, vector<36x40xbf16>, vector<8x40xf32> -> vector<8x40xf32>
    %27 = arith.truncf %26 : vector<8x40xf32> to vector<8x40xbf16>
    %c0_35 = arith.constant 0 : index
    %c0_36 = arith.constant 0 : index
    %c0_37 = arith.constant 0 : index
    %28 = vector.load %arg4[%c0_35, %c0_36, %c0_37] : memref<1x8x40xbf16, #tpu.memory_space<vmem>>, vector<1x8x40xbf16>
    %29 = vector.shape_cast %28 : vector<1x8x40xbf16> to vector<8x40xbf16>
    %30 = vector.shape_cast %27 : vector<8x40xbf16> to vector<1x8x40xbf16>
    tpu.vector_store %arg4[%c0_35, %c0_36, %c0_37], %30 {strides = array<i32>} : memref<1x8x40xbf16, #tpu.memory_space<vmem>>, vector<1x8x40xbf16>,
    %c0_38 = arith.constant 0 : index
    %c0_39 = arith.constant 0 : index
    %31 = vector.load %arg3[%c0_38, %c0_39] : memref<1x40xf32, #tpu.memory_space<vmem>>, vector<1x40xf32>
    %32 = vector.broadcast %31 : vector<1x40xf32> to vector<8x40xf32>
    %33 = arith.mulf %26, %32 : vector<8x40xf32>
    %cst_40 = arith.constant dense<0.000000e+00> : vector<8xf32>
    %34 = vector.multi_reduction <add>, %33, %cst_40 [1] : vector<8x40xf32> to vector<8xf32>
    %35 = vector.shape_cast %34 : vector<8xf32> to vector<8x1xf32>
    %cst_41 = arith.constant 3.125000e-02 : f32
    %36 = vector.broadcast %cst_41 : f32 to vector<8x1xf32>
    %37 = arith.mulf %35, %36 : vector<8x1xf32>
    %38 = vector.broadcast %37 : vector<8x1xf32> to vector<8x40xf32>
    %39 = arith.subf %26, %38 : vector<8x40xf32>
    %40 = vector.broadcast %31 : vector<1x40xf32> to vector<8x40xf32>
    %41 = arith.mulf %39, %40 : vector<8x40xf32>
    %c0_42 = arith.constant 0 : index
    %c0_43 = arith.constant 0 : index
    %c0_44 = arith.constant 0 : index
    %42 = vector.load %arg5[%c0_42, %c0_43, %c0_44] : memref<1x8x1xf32, #tpu.memory_space<vmem>>, vector<1x8x1xf32>
    %43 = vector.shape_cast %42 : vector<1x8x1xf32> to vector<8x1xf32>
    %44 = vector.shape_cast %37 : vector<8x1xf32> to vector<1x8x1xf32>
    tpu.vector_store %arg5[%c0_42, %c0_43, %c0_44], %44 {strides = array<i32>} : memref<1x8x1xf32, #tpu.memory_space<vmem>>, vector<1x8x1xf32>,
    %45 = arith.mulf %41, %41 : vector<8x40xf32>
    %cst_45 = arith.constant dense<0.000000e+00> : vector<8xf32>
    %46 = vector.multi_reduction <add>, %45, %cst_45 [1] : vector<8x40xf32> to vector<8xf32>
    %47 = vector.shape_cast %46 : vector<8xf32> to vector<8x1xf32>
    %c0_46 = arith.constant 0 : index
    %c0_47 = arith.constant 0 : index
    %c0_48 = arith.constant 0 : index
    %48 = vector.load %arg6[%c0_46, %c0_47, %c0_48] : memref<1x8x1xf32, #tpu.memory_space<vmem>>, vector<1x8x1xf32>
    %49 = vector.shape_cast %48 : vector<1x8x1xf32> to vector<8x1xf32>
    %50 = vector.shape_cast %47 : vector<8x1xf32> to vector<1x8x1xf32>
    tpu.vector_store %arg6[%c0_46, %c0_47, %c0_48], %50 {strides = array<i32>} : memref<1x8x1xf32, #tpu.memory_space<vmem>>, vector<1x8x1xf32>,
    return
  }
  func.func @transform_0(%arg0: i32) -> (i32, i32, i32) {
    %c0_i32 = arith.constant 0 : i32
    %c0_i32_0 = arith.constant 0 : i32
    %c0_i32_1 = arith.constant 0 : i32
    return %arg0, %c0_i32, %c0_i32_0 : i32, i32, i32
  }
  func.func @transform_1(%arg0: i32) -> (i32, i32) {
    %c0_i32 = arith.constant 0 : i32
    %c0_i32_0 = arith.constant 0 : i32
    %c0_i32_1 = arith.constant 0 : i32
    return %c0_i32, %c0_i32_0 : i32, i32
  }
  func.func @transform_2(%arg0: i32) -> (i32, i32) {
    %c0_i32 = arith.constant 0 : i32
    %c0_i32_0 = arith.constant 0 : i32
    %c0_i32_1 = arith.constant 0 : i32
    return %c0_i32, %c0_i32_0 : i32, i32
  }
  func.func @transform_3(%arg0: i32) -> (i32, i32, i32) {
    %c0_i32 = arith.constant 0 : i32
    %c0_i32_0 = arith.constant 0 : i32
    %c0_i32_1 = arith.constant 0 : i32
    return %arg0, %c0_i32, %c0_i32_0 : i32, i32, i32
  }
  func.func @transform_4(%arg0: i32) -> (i32, i32, i32) {
    %c0_i32 = arith.constant 0 : i32
    %c0_i32_0 = arith.constant 0 : i32
    %c0_i32_1 = arith.constant 0 : i32
    return %arg0, %c0_i32, %c0_i32_0 : i32, i32, i32
  }
  func.func @transform_5(%arg0: i32) -> (i32, i32, i32) {
    %c0_i32 = arith.constant 0 : i32
    %c0_i32_0 = arith.constant 0 : i32
    %c0_i32_1 = arith.constant 0 : i32
    return %arg0, %c0_i32, %c0_i32_0 : i32, i32, i32
  }
}

module attributes {stable_mosaic.version = 11 : i64} {
  func.func @_conv_stats_kernel(%arg0: i32, %arg1: memref<2x32x12xbf16, #tpu.memory_space<vmem>>, %arg2: memref<16x72xbf16, #tpu.memory_space<vmem>>, %arg3: memref<1x12xf32, #tpu.memory_space<vmem>>, %arg4: memref<1x16x12xbf16, #tpu.memory_space<vmem>>, %arg5: memref<1x16x1xf32, #tpu.memory_space<vmem>>, %arg6: memref<1x16x1xf32, #tpu.memory_space<vmem>>, %arg7: memref<72x12xbf16, #tpu.memory_space<vmem>>) attributes {dimension_semantics = [#tpu.dimension_semantics<parallel>], iteration_bounds = array<i64: 1>, scalar_prefetch = 0 : i64, scratch_operands = 1 : i64, tpu.core_type = #tpu.core_type<tc>, window_params = [{transform_indices = @transform_0, window_bounds = array<i64: 2, 32, 12>}, {pipeline_mode = #tpu.pipeline_mode<synchronous>, transform_indices = @transform_1, window_bounds = array<i64: 16, 72>}, {pipeline_mode = #tpu.pipeline_mode<synchronous>, transform_indices = @transform_2, window_bounds = array<i64: 1, 12>}, {transform_indices = @transform_3, window_bounds = array<i64: 1, 16, 12>}, {transform_indices = @transform_4, window_bounds = array<i64: 1, 16, 1>}, {transform_indices = @transform_5, window_bounds = array<i64: 1, 16, 1>}]} {
    %c0 = arith.constant 0 : index
    %c0_0 = arith.constant 0 : index
    %c0_1 = arith.constant 0 : index
    %0 = vector.load %arg1[%c0, %c0_0, %c0_1] : memref<2x32x12xbf16, #tpu.memory_space<vmem>>, vector<1x32x6xbf16>
    %1 = vector.shape_cast %0 : vector<1x32x6xbf16> to vector<32x6xbf16>
    %c0_2 = arith.constant 0 : index
    %c0_3 = arith.constant 0 : index
    %2 = vector.load %arg7[%c0_2, %c0_3] : memref<72x12xbf16, #tpu.memory_space<vmem>>, vector<32x6xbf16>
    tpu.vector_store %arg7[%c0_2, %c0_3], %1 {strides = array<i32>} : memref<72x12xbf16, #tpu.memory_space<vmem>>, vector<32x6xbf16>,
    %c0_4 = arith.constant 0 : index
    %c8 = arith.constant 8 : index
    %c1 = arith.constant 1 : index
    %3 = vector.load %arg1[%c0_4, %c8, %c1] : memref<2x32x12xbf16, #tpu.memory_space<vmem>>, vector<1x16x6xbf16>
    %4 = vector.shape_cast %3 : vector<1x16x6xbf16> to vector<16x6xbf16>
    %c32 = arith.constant 32 : index
    %c0_5 = arith.constant 0 : index
    %5 = vector.load %arg7[%c32, %c0_5] : memref<72x12xbf16, #tpu.memory_space<vmem>>, vector<16x6xbf16>
    tpu.vector_store %arg7[%c32, %c0_5], %4 {strides = array<i32>} : memref<72x12xbf16, #tpu.memory_space<vmem>>, vector<16x6xbf16>,
    %c0_6 = arith.constant 0 : index
    %c0_7 = arith.constant 0 : index
    %c3 = arith.constant 3 : index
    %6 = vector.load %arg1[%c0_6, %c0_7, %c3] : memref<2x32x12xbf16, #tpu.memory_space<vmem>>, vector<1x16x6xbf16>
    %7 = vector.shape_cast %6 : vector<1x16x6xbf16> to vector<16x6xbf16>
    %c48 = arith.constant 48 : index
    %c0_8 = arith.constant 0 : index
    %8 = vector.load %arg7[%c48, %c0_8] : memref<72x12xbf16, #tpu.memory_space<vmem>>, vector<16x6xbf16>
    tpu.vector_store %arg7[%c48, %c0_8], %7 {strides = array<i32>} : memref<72x12xbf16, #tpu.memory_space<vmem>>, vector<16x6xbf16>,
    %c0_9 = arith.constant 0 : index
    %c8_10 = arith.constant 8 : index
    %c4 = arith.constant 4 : index
    %9 = vector.load %arg1[%c0_9, %c8_10, %c4] : memref<2x32x12xbf16, #tpu.memory_space<vmem>>, vector<1x8x6xbf16>
    %10 = vector.shape_cast %9 : vector<1x8x6xbf16> to vector<8x6xbf16>
    %c64 = arith.constant 64 : index
    %c0_11 = arith.constant 0 : index
    %11 = vector.load %arg7[%c64, %c0_11] : memref<72x12xbf16, #tpu.memory_space<vmem>>, vector<8x6xbf16>
    tpu.vector_store %arg7[%c64, %c0_11], %10 {strides = array<i32>} : memref<72x12xbf16, #tpu.memory_space<vmem>>, vector<8x6xbf16>,
    %c1_12 = arith.constant 1 : index
    %c0_13 = arith.constant 0 : index
    %c0_14 = arith.constant 0 : index
    %12 = vector.load %arg1[%c1_12, %c0_13, %c0_14] : memref<2x32x12xbf16, #tpu.memory_space<vmem>>, vector<1x32x6xbf16>
    %13 = vector.shape_cast %12 : vector<1x32x6xbf16> to vector<32x6xbf16>
    %c0_15 = arith.constant 0 : index
    %c6 = arith.constant 6 : index
    %14 = vector.load %arg7[%c0_15, %c6] : memref<72x12xbf16, #tpu.memory_space<vmem>>, vector<32x6xbf16>
    tpu.vector_store %arg7[%c0_15, %c6], %13 {strides = array<i32>} : memref<72x12xbf16, #tpu.memory_space<vmem>>, vector<32x6xbf16>,
    %c1_16 = arith.constant 1 : index
    %c8_17 = arith.constant 8 : index
    %c1_18 = arith.constant 1 : index
    %15 = vector.load %arg1[%c1_16, %c8_17, %c1_18] : memref<2x32x12xbf16, #tpu.memory_space<vmem>>, vector<1x16x6xbf16>
    %16 = vector.shape_cast %15 : vector<1x16x6xbf16> to vector<16x6xbf16>
    %c32_19 = arith.constant 32 : index
    %c6_20 = arith.constant 6 : index
    %17 = vector.load %arg7[%c32_19, %c6_20] : memref<72x12xbf16, #tpu.memory_space<vmem>>, vector<16x6xbf16>
    tpu.vector_store %arg7[%c32_19, %c6_20], %16 {strides = array<i32>} : memref<72x12xbf16, #tpu.memory_space<vmem>>, vector<16x6xbf16>,
    %c1_21 = arith.constant 1 : index
    %c0_22 = arith.constant 0 : index
    %c3_23 = arith.constant 3 : index
    %18 = vector.load %arg1[%c1_21, %c0_22, %c3_23] : memref<2x32x12xbf16, #tpu.memory_space<vmem>>, vector<1x16x6xbf16>
    %19 = vector.shape_cast %18 : vector<1x16x6xbf16> to vector<16x6xbf16>
    %c48_24 = arith.constant 48 : index
    %c6_25 = arith.constant 6 : index
    %20 = vector.load %arg7[%c48_24, %c6_25] : memref<72x12xbf16, #tpu.memory_space<vmem>>, vector<16x6xbf16>
    tpu.vector_store %arg7[%c48_24, %c6_25], %19 {strides = array<i32>} : memref<72x12xbf16, #tpu.memory_space<vmem>>, vector<16x6xbf16>,
    %c1_26 = arith.constant 1 : index
    %c8_27 = arith.constant 8 : index
    %c4_28 = arith.constant 4 : index
    %21 = vector.load %arg1[%c1_26, %c8_27, %c4_28] : memref<2x32x12xbf16, #tpu.memory_space<vmem>>, vector<1x8x6xbf16>
    %22 = vector.shape_cast %21 : vector<1x8x6xbf16> to vector<8x6xbf16>
    %c64_29 = arith.constant 64 : index
    %c6_30 = arith.constant 6 : index
    %23 = vector.load %arg7[%c64_29, %c6_30] : memref<72x12xbf16, #tpu.memory_space<vmem>>, vector<8x6xbf16>
    tpu.vector_store %arg7[%c64_29, %c6_30], %22 {strides = array<i32>} : memref<72x12xbf16, #tpu.memory_space<vmem>>, vector<8x6xbf16>,
    %c0_31 = arith.constant 0 : index
    %c0_32 = arith.constant 0 : index
    %24 = vector.load %arg2[%c0_31, %c0_32] : memref<16x72xbf16, #tpu.memory_space<vmem>>, vector<16x72xbf16>
    %c0_33 = arith.constant 0 : index
    %c0_34 = arith.constant 0 : index
    %25 = vector.load %arg7[%c0_33, %c0_34] : memref<72x12xbf16, #tpu.memory_space<vmem>>, vector<72x12xbf16>
    %cst = arith.constant dense<0.000000e+00> : vector<16x12xf32>
    %26 = tpu.matmul %24, %25, %cst {dimension_numbers = #tpu.dot_dimension_numbers<[1], [0], [0], [1], [0, 0, 1, 1], [], []>} : vector<16x72xbf16>, vector<72x12xbf16>, vector<16x12xf32> -> vector<16x12xf32>
    %27 = arith.truncf %26 : vector<16x12xf32> to vector<16x12xbf16>
    %c0_35 = arith.constant 0 : index
    %c0_36 = arith.constant 0 : index
    %c0_37 = arith.constant 0 : index
    %28 = vector.load %arg4[%c0_35, %c0_36, %c0_37] : memref<1x16x12xbf16, #tpu.memory_space<vmem>>, vector<1x16x12xbf16>
    %29 = vector.shape_cast %28 : vector<1x16x12xbf16> to vector<16x12xbf16>
    %30 = vector.shape_cast %27 : vector<16x12xbf16> to vector<1x16x12xbf16>
    tpu.vector_store %arg4[%c0_35, %c0_36, %c0_37], %30 {strides = array<i32>} : memref<1x16x12xbf16, #tpu.memory_space<vmem>>, vector<1x16x12xbf16>,
    %c0_38 = arith.constant 0 : index
    %c0_39 = arith.constant 0 : index
    %31 = vector.load %arg3[%c0_38, %c0_39] : memref<1x12xf32, #tpu.memory_space<vmem>>, vector<1x12xf32>
    %32 = vector.broadcast %31 : vector<1x12xf32> to vector<16x12xf32>
    %33 = arith.mulf %26, %32 : vector<16x12xf32>
    %cst_40 = arith.constant dense<0.000000e+00> : vector<16xf32>
    %34 = vector.multi_reduction <add>, %33, %cst_40 [1] : vector<16x12xf32> to vector<16xf32>
    %35 = vector.shape_cast %34 : vector<16xf32> to vector<16x1xf32>
    %cst_41 = arith.constant 1.250000e-01 : f32
    %36 = vector.broadcast %cst_41 : f32 to vector<16x1xf32>
    %37 = arith.mulf %35, %36 : vector<16x1xf32>
    %38 = vector.broadcast %37 : vector<16x1xf32> to vector<16x12xf32>
    %39 = arith.subf %26, %38 : vector<16x12xf32>
    %40 = vector.broadcast %31 : vector<1x12xf32> to vector<16x12xf32>
    %41 = arith.mulf %39, %40 : vector<16x12xf32>
    %c0_42 = arith.constant 0 : index
    %c0_43 = arith.constant 0 : index
    %c0_44 = arith.constant 0 : index
    %42 = vector.load %arg5[%c0_42, %c0_43, %c0_44] : memref<1x16x1xf32, #tpu.memory_space<vmem>>, vector<1x16x1xf32>
    %43 = vector.shape_cast %42 : vector<1x16x1xf32> to vector<16x1xf32>
    %44 = vector.shape_cast %37 : vector<16x1xf32> to vector<1x16x1xf32>
    tpu.vector_store %arg5[%c0_42, %c0_43, %c0_44], %44 {strides = array<i32>} : memref<1x16x1xf32, #tpu.memory_space<vmem>>, vector<1x16x1xf32>,
    %45 = arith.mulf %41, %41 : vector<16x12xf32>
    %cst_45 = arith.constant dense<0.000000e+00> : vector<16xf32>
    %46 = vector.multi_reduction <add>, %45, %cst_45 [1] : vector<16x12xf32> to vector<16xf32>
    %47 = vector.shape_cast %46 : vector<16xf32> to vector<16x1xf32>
    %c0_46 = arith.constant 0 : index
    %c0_47 = arith.constant 0 : index
    %c0_48 = arith.constant 0 : index
    %48 = vector.load %arg6[%c0_46, %c0_47, %c0_48] : memref<1x16x1xf32, #tpu.memory_space<vmem>>, vector<1x16x1xf32>
    %49 = vector.shape_cast %48 : vector<1x16x1xf32> to vector<16x1xf32>
    %50 = vector.shape_cast %47 : vector<16x1xf32> to vector<1x16x1xf32>
    tpu.vector_store %arg6[%c0_46, %c0_47, %c0_48], %50 {strides = array<i32>} : memref<1x16x1xf32, #tpu.memory_space<vmem>>, vector<1x16x1xf32>,
    return
  }
  func.func @transform_0(%arg0: i32) -> (i32, i32, i32) {
    %c0_i32 = arith.constant 0 : i32
    %c0_i32_0 = arith.constant 0 : i32
    %c0_i32_1 = arith.constant 0 : i32
    return %arg0, %c0_i32, %c0_i32_0 : i32, i32, i32
  }
  func.func @transform_1(%arg0: i32) -> (i32, i32) {
    %c0_i32 = arith.constant 0 : i32
    %c0_i32_0 = arith.constant 0 : i32
    %c0_i32_1 = arith.constant 0 : i32
    return %c0_i32, %c0_i32_0 : i32, i32
  }
  func.func @transform_2(%arg0: i32) -> (i32, i32) {
    %c0_i32 = arith.constant 0 : i32
    %c0_i32_0 = arith.constant 0 : i32
    %c0_i32_1 = arith.constant 0 : i32
    return %c0_i32, %c0_i32_0 : i32, i32
  }
  func.func @transform_3(%arg0: i32) -> (i32, i32, i32) {
    %c0_i32 = arith.constant 0 : i32
    %c0_i32_0 = arith.constant 0 : i32
    %c0_i32_1 = arith.constant 0 : i32
    return %arg0, %c0_i32, %c0_i32_0 : i32, i32, i32
  }
  func.func @transform_4(%arg0: i32) -> (i32, i32, i32) {
    %c0_i32 = arith.constant 0 : i32
    %c0_i32_0 = arith.constant 0 : i32
    %c0_i32_1 = arith.constant 0 : i32
    return %arg0, %c0_i32, %c0_i32_0 : i32, i32, i32
  }
  func.func @transform_5(%arg0: i32) -> (i32, i32, i32) {
    %c0_i32 = arith.constant 0 : i32
    %c0_i32_0 = arith.constant 0 : i32
    %c0_i32_1 = arith.constant 0 : i32
    return %arg0, %c0_i32, %c0_i32_0 : i32, i32, i32
  }
}

module attributes {stable_mosaic.version = 11 : i64} {
  func.func @_bn_lrelu_kernel(%arg0: i32, %arg1: memref<1x16x12xbf16, #tpu.memory_space<vmem>>, %arg2: memref<16x1xf32, #tpu.memory_space<vmem>>, %arg3: memref<16x1xf32, #tpu.memory_space<vmem>>, %arg4: memref<1x16x12xbf16, #tpu.memory_space<vmem>>) attributes {dimension_semantics = [#tpu.dimension_semantics<parallel>], iteration_bounds = array<i64: 1>, scalar_prefetch = 0 : i64, scratch_operands = 0 : i64, tpu.core_type = #tpu.core_type<tc>, window_params = [{transform_indices = @transform_0, window_bounds = array<i64: 1, 16, 12>}, {pipeline_mode = #tpu.pipeline_mode<synchronous>, transform_indices = @transform_1, window_bounds = array<i64: 16, 1>}, {pipeline_mode = #tpu.pipeline_mode<synchronous>, transform_indices = @transform_2, window_bounds = array<i64: 16, 1>}, {transform_indices = @transform_3, window_bounds = array<i64: 1, 16, 12>}]} {
    %c0 = arith.constant 0 : index
    %c0_0 = arith.constant 0 : index
    %c0_1 = arith.constant 0 : index
    %0 = vector.load %arg1[%c0, %c0_0, %c0_1] : memref<1x16x12xbf16, #tpu.memory_space<vmem>>, vector<1x16x12xbf16>
    %1 = vector.shape_cast %0 : vector<1x16x12xbf16> to vector<16x12xbf16>
    %2 = arith.extf %1 : vector<16x12xbf16> to vector<16x12xf32>
    %c0_2 = arith.constant 0 : index
    %c0_3 = arith.constant 0 : index
    %3 = vector.load %arg2[%c0_2, %c0_3] : memref<16x1xf32, #tpu.memory_space<vmem>>, vector<16x1xf32>
    %4 = vector.broadcast %3 : vector<16x1xf32> to vector<16x12xf32>
    %5 = arith.mulf %2, %4 : vector<16x12xf32>
    %c0_4 = arith.constant 0 : index
    %c0_5 = arith.constant 0 : index
    %6 = vector.load %arg3[%c0_4, %c0_5] : memref<16x1xf32, #tpu.memory_space<vmem>>, vector<16x1xf32>
    %7 = vector.broadcast %6 : vector<16x1xf32> to vector<16x12xf32>
    %8 = arith.addf %5, %7 : vector<16x12xf32>
    %cst = arith.constant 0.000000e+00 : f32
    %9 = vector.broadcast %cst : f32 to vector<16x12xf32>
    %10 = arith.cmpf ogt, %8, %9 : vector<16x12xf32>
    %cst_6 = arith.constant 2.000000e-01 : f32
    %11 = vector.broadcast %cst_6 : f32 to vector<16x12xf32>
    %12 = arith.mulf %11, %8 : vector<16x12xf32>
    %13 = arith.select %10, %8, %12 : vector<16x12xi1>, vector<16x12xf32>
    %14 = arith.truncf %13 : vector<16x12xf32> to vector<16x12xbf16>
    %c0_7 = arith.constant 0 : index
    %c0_8 = arith.constant 0 : index
    %c0_9 = arith.constant 0 : index
    %15 = vector.load %arg4[%c0_7, %c0_8, %c0_9] : memref<1x16x12xbf16, #tpu.memory_space<vmem>>, vector<1x16x12xbf16>
    %16 = vector.shape_cast %15 : vector<1x16x12xbf16> to vector<16x12xbf16>
    %17 = vector.shape_cast %14 : vector<16x12xbf16> to vector<1x16x12xbf16>
    tpu.vector_store %arg4[%c0_7, %c0_8, %c0_9], %17 {strides = array<i32>} : memref<1x16x12xbf16, #tpu.memory_space<vmem>>, vector<1x16x12xbf16>,
    return
  }
  func.func @transform_0(%arg0: i32) -> (i32, i32, i32) {
    %c0_i32 = arith.constant 0 : i32
    %c0_i32_0 = arith.constant 0 : i32
    %c0_i32_1 = arith.constant 0 : i32
    return %arg0, %c0_i32, %c0_i32_0 : i32, i32, i32
  }
  func.func @transform_1(%arg0: i32) -> (i32, i32) {
    %c0_i32 = arith.constant 0 : i32
    %c0_i32_0 = arith.constant 0 : i32
    %c0_i32_1 = arith.constant 0 : i32
    return %c0_i32, %c0_i32_0 : i32, i32
  }
  func.func @transform_2(%arg0: i32) -> (i32, i32) {
    %c0_i32 = arith.constant 0 : i32
    %c0_i32_0 = arith.constant 0 : i32
    %c0_i32_1 = arith.constant 0 : i32
    return %c0_i32, %c0_i32_0 : i32, i32
  }
  func.func @transform_3(%arg0: i32) -> (i32, i32, i32) {
    %c0_i32 = arith.constant 0 : i32
    %c0_i32_0 = arith.constant 0 : i32
    %c0_i32_1 = arith.constant 0 : i32
    return %arg0, %c0_i32, %c0_i32_0 : i32, i32, i32
  }
}

module attributes {stable_mosaic.version = 11 : i64} {
  func.func @_conv_stats_kernel(%arg0: i32, %arg1: memref<2x64x6xbf16, #tpu.memory_space<vmem>>, %arg2: memref<32x144xbf16, #tpu.memory_space<vmem>>, %arg3: memref<1x4xf32, #tpu.memory_space<vmem>>, %arg4: memref<1x32x4xbf16, #tpu.memory_space<vmem>>, %arg5: memref<1x32x1xf32, #tpu.memory_space<vmem>>, %arg6: memref<1x32x1xf32, #tpu.memory_space<vmem>>, %arg7: memref<144x4xbf16, #tpu.memory_space<vmem>>) attributes {dimension_semantics = [#tpu.dimension_semantics<parallel>], iteration_bounds = array<i64: 1>, scalar_prefetch = 0 : i64, scratch_operands = 1 : i64, tpu.core_type = #tpu.core_type<tc>, window_params = [{transform_indices = @transform_0, window_bounds = array<i64: 2, 64, 6>}, {pipeline_mode = #tpu.pipeline_mode<synchronous>, transform_indices = @transform_1, window_bounds = array<i64: 32, 144>}, {pipeline_mode = #tpu.pipeline_mode<synchronous>, transform_indices = @transform_2, window_bounds = array<i64: 1, 4>}, {transform_indices = @transform_3, window_bounds = array<i64: 1, 32, 4>}, {transform_indices = @transform_4, window_bounds = array<i64: 1, 32, 1>}, {transform_indices = @transform_5, window_bounds = array<i64: 1, 32, 1>}]} {
    %c0 = arith.constant 0 : index
    %c0_0 = arith.constant 0 : index
    %c0_1 = arith.constant 0 : index
    %0 = vector.load %arg1[%c0, %c0_0, %c0_1] : memref<2x64x6xbf16, #tpu.memory_space<vmem>>, vector<1x64x2xbf16>
    %1 = vector.shape_cast %0 : vector<1x64x2xbf16> to vector<64x2xbf16>
    %c0_2 = arith.constant 0 : index
    %c0_3 = arith.constant 0 : index
    %2 = vector.load %arg7[%c0_2, %c0_3] : memref<144x4xbf16, #tpu.memory_space<vmem>>, vector<64x2xbf16>
    tpu.vector_store %arg7[%c0_2, %c0_3], %1 {strides = array<i32>} : memref<144x4xbf16, #tpu.memory_space<vmem>>, vector<64x2xbf16>,
    %c0_4 = arith.constant 0 : index
    %c16 = arith.constant 16 : index
    %c1 = arith.constant 1 : index
    %3 = vector.load %arg1[%c0_4, %c16, %c1] : memref<2x64x6xbf16, #tpu.memory_space<vmem>>, vector<1x32x2xbf16>
    %4 = vector.shape_cast %3 : vector<1x32x2xbf16> to vector<32x2xbf16>
    %c64 = arith.constant 64 : index
    %c0_5 = arith.constant 0 : index
    %5 = vector.load %arg7[%c64, %c0_5] : memref<144x4xbf16, #tpu.memory_space<vmem>>, vector<32x2xbf16>
    tpu.vector_store %arg7[%c64, %c0_5], %4 {strides = array<i32>} : memref<144x4xbf16, #tpu.memory_space<vmem>>, vector<32x2xbf16>,
    %c0_6 = arith.constant 0 : index
    %c0_7 = arith.constant 0 : index
    %c2 = arith.constant 2 : index
    %6 = vector.load %arg1[%c0_6, %c0_7, %c2] : memref<2x64x6xbf16, #tpu.memory_space<vmem>>, vector<1x32x2xbf16>
    %7 = vector.shape_cast %6 : vector<1x32x2xbf16> to vector<32x2xbf16>
    %c96 = arith.constant 96 : index
    %c0_8 = arith.constant 0 : index
    %8 = vector.load %arg7[%c96, %c0_8] : memref<144x4xbf16, #tpu.memory_space<vmem>>, vector<32x2xbf16>
    tpu.vector_store %arg7[%c96, %c0_8], %7 {strides = array<i32>} : memref<144x4xbf16, #tpu.memory_space<vmem>>, vector<32x2xbf16>,
    %c0_9 = arith.constant 0 : index
    %c16_10 = arith.constant 16 : index
    %c3 = arith.constant 3 : index
    %9 = vector.load %arg1[%c0_9, %c16_10, %c3] : memref<2x64x6xbf16, #tpu.memory_space<vmem>>, vector<1x16x2xbf16>
    %10 = vector.shape_cast %9 : vector<1x16x2xbf16> to vector<16x2xbf16>
    %c128 = arith.constant 128 : index
    %c0_11 = arith.constant 0 : index
    %11 = vector.load %arg7[%c128, %c0_11] : memref<144x4xbf16, #tpu.memory_space<vmem>>, vector<16x2xbf16>
    tpu.vector_store %arg7[%c128, %c0_11], %10 {strides = array<i32>} : memref<144x4xbf16, #tpu.memory_space<vmem>>, vector<16x2xbf16>,
    %c1_12 = arith.constant 1 : index
    %c0_13 = arith.constant 0 : index
    %c0_14 = arith.constant 0 : index
    %12 = vector.load %arg1[%c1_12, %c0_13, %c0_14] : memref<2x64x6xbf16, #tpu.memory_space<vmem>>, vector<1x64x2xbf16>
    %13 = vector.shape_cast %12 : vector<1x64x2xbf16> to vector<64x2xbf16>
    %c0_15 = arith.constant 0 : index
    %c2_16 = arith.constant 2 : index
    %14 = vector.load %arg7[%c0_15, %c2_16] : memref<144x4xbf16, #tpu.memory_space<vmem>>, vector<64x2xbf16>
    tpu.vector_store %arg7[%c0_15, %c2_16], %13 {strides = array<i32>} : memref<144x4xbf16, #tpu.memory_space<vmem>>, vector<64x2xbf16>,
    %c1_17 = arith.constant 1 : index
    %c16_18 = arith.constant 16 : index
    %c1_19 = arith.constant 1 : index
    %15 = vector.load %arg1[%c1_17, %c16_18, %c1_19] : memref<2x64x6xbf16, #tpu.memory_space<vmem>>, vector<1x32x2xbf16>
    %16 = vector.shape_cast %15 : vector<1x32x2xbf16> to vector<32x2xbf16>
    %c64_20 = arith.constant 64 : index
    %c2_21 = arith.constant 2 : index
    %17 = vector.load %arg7[%c64_20, %c2_21] : memref<144x4xbf16, #tpu.memory_space<vmem>>, vector<32x2xbf16>
    tpu.vector_store %arg7[%c64_20, %c2_21], %16 {strides = array<i32>} : memref<144x4xbf16, #tpu.memory_space<vmem>>, vector<32x2xbf16>,
    %c1_22 = arith.constant 1 : index
    %c0_23 = arith.constant 0 : index
    %c2_24 = arith.constant 2 : index
    %18 = vector.load %arg1[%c1_22, %c0_23, %c2_24] : memref<2x64x6xbf16, #tpu.memory_space<vmem>>, vector<1x32x2xbf16>
    %19 = vector.shape_cast %18 : vector<1x32x2xbf16> to vector<32x2xbf16>
    %c96_25 = arith.constant 96 : index
    %c2_26 = arith.constant 2 : index
    %20 = vector.load %arg7[%c96_25, %c2_26] : memref<144x4xbf16, #tpu.memory_space<vmem>>, vector<32x2xbf16>
    tpu.vector_store %arg7[%c96_25, %c2_26], %19 {strides = array<i32>} : memref<144x4xbf16, #tpu.memory_space<vmem>>, vector<32x2xbf16>,
    %c1_27 = arith.constant 1 : index
    %c16_28 = arith.constant 16 : index
    %c3_29 = arith.constant 3 : index
    %21 = vector.load %arg1[%c1_27, %c16_28, %c3_29] : memref<2x64x6xbf16, #tpu.memory_space<vmem>>, vector<1x16x2xbf16>
    %22 = vector.shape_cast %21 : vector<1x16x2xbf16> to vector<16x2xbf16>
    %c128_30 = arith.constant 128 : index
    %c2_31 = arith.constant 2 : index
    %23 = vector.load %arg7[%c128_30, %c2_31] : memref<144x4xbf16, #tpu.memory_space<vmem>>, vector<16x2xbf16>
    tpu.vector_store %arg7[%c128_30, %c2_31], %22 {strides = array<i32>} : memref<144x4xbf16, #tpu.memory_space<vmem>>, vector<16x2xbf16>,
    %c0_32 = arith.constant 0 : index
    %c0_33 = arith.constant 0 : index
    %24 = vector.load %arg2[%c0_32, %c0_33] : memref<32x144xbf16, #tpu.memory_space<vmem>>, vector<32x144xbf16>
    %c0_34 = arith.constant 0 : index
    %c0_35 = arith.constant 0 : index
    %25 = vector.load %arg7[%c0_34, %c0_35] : memref<144x4xbf16, #tpu.memory_space<vmem>>, vector<144x4xbf16>
    %cst = arith.constant dense<0.000000e+00> : vector<32x4xf32>
    %26 = tpu.matmul %24, %25, %cst {dimension_numbers = #tpu.dot_dimension_numbers<[1], [0], [0], [1], [0, 0, 1, 1], [], []>} : vector<32x144xbf16>, vector<144x4xbf16>, vector<32x4xf32> -> vector<32x4xf32>
    %27 = arith.truncf %26 : vector<32x4xf32> to vector<32x4xbf16>
    %c0_36 = arith.constant 0 : index
    %c0_37 = arith.constant 0 : index
    %c0_38 = arith.constant 0 : index
    %28 = vector.load %arg4[%c0_36, %c0_37, %c0_38] : memref<1x32x4xbf16, #tpu.memory_space<vmem>>, vector<1x32x4xbf16>
    %29 = vector.shape_cast %28 : vector<1x32x4xbf16> to vector<32x4xbf16>
    %30 = vector.shape_cast %27 : vector<32x4xbf16> to vector<1x32x4xbf16>
    tpu.vector_store %arg4[%c0_36, %c0_37, %c0_38], %30 {strides = array<i32>} : memref<1x32x4xbf16, #tpu.memory_space<vmem>>, vector<1x32x4xbf16>,
    %c0_39 = arith.constant 0 : index
    %c0_40 = arith.constant 0 : index
    %31 = vector.load %arg3[%c0_39, %c0_40] : memref<1x4xf32, #tpu.memory_space<vmem>>, vector<1x4xf32>
    %32 = vector.broadcast %31 : vector<1x4xf32> to vector<32x4xf32>
    %33 = arith.mulf %26, %32 : vector<32x4xf32>
    %cst_41 = arith.constant dense<0.000000e+00> : vector<32xf32>
    %34 = vector.multi_reduction <add>, %33, %cst_41 [1] : vector<32x4xf32> to vector<32xf32>
    %35 = vector.shape_cast %34 : vector<32xf32> to vector<32x1xf32>
    %cst_42 = arith.constant 5.000000e-01 : f32
    %36 = vector.broadcast %cst_42 : f32 to vector<32x1xf32>
    %37 = arith.mulf %35, %36 : vector<32x1xf32>
    %38 = vector.broadcast %37 : vector<32x1xf32> to vector<32x4xf32>
    %39 = arith.subf %26, %38 : vector<32x4xf32>
    %40 = vector.broadcast %31 : vector<1x4xf32> to vector<32x4xf32>
    %41 = arith.mulf %39, %40 : vector<32x4xf32>
    %c0_43 = arith.constant 0 : index
    %c0_44 = arith.constant 0 : index
    %c0_45 = arith.constant 0 : index
    %42 = vector.load %arg5[%c0_43, %c0_44, %c0_45] : memref<1x32x1xf32, #tpu.memory_space<vmem>>, vector<1x32x1xf32>
    %43 = vector.shape_cast %42 : vector<1x32x1xf32> to vector<32x1xf32>
    %44 = vector.shape_cast %37 : vector<32x1xf32> to vector<1x32x1xf32>
    tpu.vector_store %arg5[%c0_43, %c0_44, %c0_45], %44 {strides = array<i32>} : memref<1x32x1xf32, #tpu.memory_space<vmem>>, vector<1x32x1xf32>,
    %45 = arith.mulf %41, %41 : vector<32x4xf32>
    %cst_46 = arith.constant dense<0.000000e+00> : vector<32xf32>
    %46 = vector.multi_reduction <add>, %45, %cst_46 [1] : vector<32x4xf32> to vector<32xf32>
    %47 = vector.shape_cast %46 : vector<32xf32> to vector<32x1xf32>
    %c0_47 = arith.constant 0 : index
    %c0_48 = arith.constant 0 : index
    %c0_49 = arith.constant 0 : index
    %48 = vector.load %arg6[%c0_47, %c0_48, %c0_49] : memref<1x32x1xf32, #tpu.memory_space<vmem>>, vector<1x32x1xf32>
    %49 = vector.shape_cast %48 : vector<1x32x1xf32> to vector<32x1xf32>
    %50 = vector.shape_cast %47 : vector<32x1xf32> to vector<1x32x1xf32>
    tpu.vector_store %arg6[%c0_47, %c0_48, %c0_49], %50 {strides = array<i32>} : memref<1x32x1xf32, #tpu.memory_space<vmem>>, vector<1x32x1xf32>,
    return
  }
  func.func @transform_0(%arg0: i32) -> (i32, i32, i32) {
    %c0_i32 = arith.constant 0 : i32
    %c0_i32_0 = arith.constant 0 : i32
    %c0_i32_1 = arith.constant 0 : i32
    return %arg0, %c0_i32, %c0_i32_0 : i32, i32, i32
  }
  func.func @transform_1(%arg0: i32) -> (i32, i32) {
    %c0_i32 = arith.constant 0 : i32
    %c0_i32_0 = arith.constant 0 : i32
    %c0_i32_1 = arith.constant 0 : i32
    return %c0_i32, %c0_i32_0 : i32, i32
  }
  func.func @transform_2(%arg0: i32) -> (i32, i32) {
    %c0_i32 = arith.constant 0 : i32
    %c0_i32_0 = arith.constant 0 : i32
    %c0_i32_1 = arith.constant 0 : i32
    return %c0_i32, %c0_i32_0 : i32, i32
  }
  func.func @transform_3(%arg0: i32) -> (i32, i32, i32) {
    %c0_i32 = arith.constant 0 : i32
    %c0_i32_0 = arith.constant 0 : i32
    %c0_i32_1 = arith.constant 0 : i32
    return %arg0, %c0_i32, %c0_i32_0 : i32, i32, i32
  }
  func.func @transform_4(%arg0: i32) -> (i32, i32, i32) {
    %c0_i32 = arith.constant 0 : i32
    %c0_i32_0 = arith.constant 0 : i32
    %c0_i32_1 = arith.constant 0 : i32
    return %arg0, %c0_i32, %c0_i32_0 : i32, i32, i32
  }
  func.func @transform_5(%arg0: i32) -> (i32, i32, i32) {
    %c0_i32 = arith.constant 0 : i32
    %c0_i32_0 = arith.constant 0 : i32
    %c0_i32_1 = arith.constant 0 : i32
    return %arg0, %c0_i32, %c0_i32_0 : i32, i32, i32
  }
}

module attributes {stable_mosaic.version = 11 : i64} {
  func.func @_bn_lrelu_gap_linear_kernel(%arg0: i32, %arg1: memref<1x32x4xbf16, #tpu.memory_space<vmem>>, %arg2: memref<32x1xf32, #tpu.memory_space<vmem>>, %arg3: memref<32x1xf32, #tpu.memory_space<vmem>>, %arg4: memref<4x2xf32, #tpu.memory_space<vmem>>, %arg5: memref<16x32xf32, #tpu.memory_space<vmem>>, %arg6: memref<16x1xf32, #tpu.memory_space<vmem>>, %arg7: memref<1x16x2xf32, #tpu.memory_space<vmem>>) attributes {dimension_semantics = [#tpu.dimension_semantics<parallel>], iteration_bounds = array<i64: 1>, scalar_prefetch = 0 : i64, scratch_operands = 0 : i64, tpu.core_type = #tpu.core_type<tc>, window_params = [{transform_indices = @transform_0, window_bounds = array<i64: 1, 32, 4>}, {pipeline_mode = #tpu.pipeline_mode<synchronous>, transform_indices = @transform_1, window_bounds = array<i64: 32, 1>}, {pipeline_mode = #tpu.pipeline_mode<synchronous>, transform_indices = @transform_2, window_bounds = array<i64: 32, 1>}, {pipeline_mode = #tpu.pipeline_mode<synchronous>, transform_indices = @transform_3, window_bounds = array<i64: 4, 2>}, {pipeline_mode = #tpu.pipeline_mode<synchronous>, transform_indices = @transform_4, window_bounds = array<i64: 16, 32>}, {pipeline_mode = #tpu.pipeline_mode<synchronous>, transform_indices = @transform_5, window_bounds = array<i64: 16, 1>}, {transform_indices = @transform_6, window_bounds = array<i64: 1, 16, 2>}]} {
    %c0 = arith.constant 0 : index
    %c0_0 = arith.constant 0 : index
    %c0_1 = arith.constant 0 : index
    %0 = vector.load %arg1[%c0, %c0_0, %c0_1] : memref<1x32x4xbf16, #tpu.memory_space<vmem>>, vector<1x32x4xbf16>
    %1 = vector.shape_cast %0 : vector<1x32x4xbf16> to vector<32x4xbf16>
    %2 = arith.extf %1 : vector<32x4xbf16> to vector<32x4xf32>
    %c0_2 = arith.constant 0 : index
    %c0_3 = arith.constant 0 : index
    %3 = vector.load %arg2[%c0_2, %c0_3] : memref<32x1xf32, #tpu.memory_space<vmem>>, vector<32x1xf32>
    %4 = vector.broadcast %3 : vector<32x1xf32> to vector<32x4xf32>
    %5 = arith.mulf %2, %4 : vector<32x4xf32>
    %c0_4 = arith.constant 0 : index
    %c0_5 = arith.constant 0 : index
    %6 = vector.load %arg3[%c0_4, %c0_5] : memref<32x1xf32, #tpu.memory_space<vmem>>, vector<32x1xf32>
    %7 = vector.broadcast %6 : vector<32x1xf32> to vector<32x4xf32>
    %8 = arith.addf %5, %7 : vector<32x4xf32>
    %cst = arith.constant 0.000000e+00 : f32
    %9 = vector.broadcast %cst : f32 to vector<32x4xf32>
    %10 = arith.cmpf ogt, %8, %9 : vector<32x4xf32>
    %cst_6 = arith.constant 2.000000e-01 : f32
    %11 = vector.broadcast %cst_6 : f32 to vector<32x4xf32>
    %12 = arith.mulf %11, %8 : vector<32x4xf32>
    %13 = arith.select %10, %8, %12 : vector<32x4xi1>, vector<32x4xf32>
    %c0_7 = arith.constant 0 : index
    %c0_8 = arith.constant 0 : index
    %14 = vector.load %arg4[%c0_7, %c0_8] : memref<4x2xf32, #tpu.memory_space<vmem>>, vector<4x2xf32>
    %cst_9 = arith.constant dense<0.000000e+00> : vector<32x2xf32>
    %15 = tpu.matmul %13, %14, %cst_9 {dimension_numbers = #tpu.dot_dimension_numbers<[1], [0], [0], [1], [0, 0, 1, 1], [], []>} : vector<32x4xf32>, vector<4x2xf32>, vector<32x2xf32> -> vector<32x2xf32>
    %c0_10 = arith.constant 0 : index
    %c0_11 = arith.constant 0 : index
    %16 = vector.load %arg5[%c0_10, %c0_11] : memref<16x32xf32, #tpu.memory_space<vmem>>, vector<16x32xf32>
    %cst_12 = arith.constant dense<0.000000e+00> : vector<16x2xf32>
    %17 = tpu.matmul %16, %15, %cst_12 {dimension_numbers = #tpu.dot_dimension_numbers<[1], [0], [0], [1], [0, 0, 1, 1], [], []>} : vector<16x32xf32>, vector<32x2xf32>, vector<16x2xf32> -> vector<16x2xf32>
    %c0_13 = arith.constant 0 : index
    %c0_14 = arith.constant 0 : index
    %18 = vector.load %arg6[%c0_13, %c0_14] : memref<16x1xf32, #tpu.memory_space<vmem>>, vector<16x1xf32>
    %19 = vector.broadcast %18 : vector<16x1xf32> to vector<16x2xf32>
    %20 = arith.addf %17, %19 : vector<16x2xf32>
    %c0_15 = arith.constant 0 : index
    %c0_16 = arith.constant 0 : index
    %c0_17 = arith.constant 0 : index
    %21 = vector.load %arg7[%c0_15, %c0_16, %c0_17] : memref<1x16x2xf32, #tpu.memory_space<vmem>>, vector<1x16x2xf32>
    %22 = vector.shape_cast %21 : vector<1x16x2xf32> to vector<16x2xf32>
    %23 = vector.shape_cast %20 : vector<16x2xf32> to vector<1x16x2xf32>
    tpu.vector_store %arg7[%c0_15, %c0_16, %c0_17], %23 {strides = array<i32>} : memref<1x16x2xf32, #tpu.memory_space<vmem>>, vector<1x16x2xf32>,
    return
  }
  func.func @transform_0(%arg0: i32) -> (i32, i32, i32) {
    %c0_i32 = arith.constant 0 : i32
    %c0_i32_0 = arith.constant 0 : i32
    %c0_i32_1 = arith.constant 0 : i32
    return %arg0, %c0_i32, %c0_i32_0 : i32, i32, i32
  }
  func.func @transform_1(%arg0: i32) -> (i32, i32) {
    %c0_i32 = arith.constant 0 : i32
    %c0_i32_0 = arith.constant 0 : i32
    %c0_i32_1 = arith.constant 0 : i32
    return %c0_i32, %c0_i32_0 : i32, i32
  }
  func.func @transform_2(%arg0: i32) -> (i32, i32) {
    %c0_i32 = arith.constant 0 : i32
    %c0_i32_0 = arith.constant 0 : i32
    %c0_i32_1 = arith.constant 0 : i32
    return %c0_i32, %c0_i32_0 : i32, i32
  }
  func.func @transform_3(%arg0: i32) -> (i32, i32) {
    %c0_i32 = arith.constant 0 : i32
    %c0_i32_0 = arith.constant 0 : i32
    %c0_i32_1 = arith.constant 0 : i32
    return %c0_i32, %c0_i32_0 : i32, i32
  }
  func.func @transform_4(%arg0: i32) -> (i32, i32) {
    %c0_i32 = arith.constant 0 : i32
    %c0_i32_0 = arith.constant 0 : i32
    %c0_i32_1 = arith.constant 0 : i32
    return %c0_i32, %c0_i32_0 : i32, i32
  }
  func.func @transform_5(%arg0: i32) -> (i32, i32) {
    %c0_i32 = arith.constant 0 : i32
    %c0_i32_0 = arith.constant 0 : i32
    %c0_i32_1 = arith.constant 0 : i32
    return %c0_i32, %c0_i32_0 : i32, i32
  }
  func.func @transform_6(%arg0: i32) -> (i32, i32, i32) {
    %c0_i32 = arith.constant 0 : i32
    %c0_i32_0 = arith.constant 0 : i32
    %c0_i32_1 = arith.constant 0 : i32
    return %arg0, %c0_i32, %c0_i32_0 : i32, i32, i32
  }
}

</mosaic_0001>

<llo_original>
// kernel: encoder_forward.9
$region0: #{encoder_forward.9}
  #allocation0 [shape = 'u32[]', space=smem, size = 0x4, offset = 0x4, fixed_abs, tag = 'smem constant byte address 0x4 - core index']
  #allocation1 [shape = 'u32[144,128]{1,0:T(1,128)}', space=vmem, size = 0x12000, scoped, tag = 'internal scratch']
  %s0 = inlined_call_operand.vmem [shape: bf16[1,4,144], index: 0, kind: input, shape index: {}]
  %s1 = inlined_call_operand.vmem [shape: f32[4,1], index: 1, kind: input, shape index: {}]
  %s2 = inlined_call_operand.vmem [shape: f32[4,1], index: 2, kind: input, shape index: {}]
  %s3 = inlined_call_operand.vmem [shape: bf16[1,4,144], index: 3, kind: output, shape index: {}]
  %s4 = sld [smem:[#allocation0]]
  $region22: #{encoder_forward.9} parent=0
    _
  %s6 = ssub.s32 1, %s4
  %s7 = scalar_select 0, %s6, %s4
  // Predicated region
  $region2: #{encoder_forward.9} parent=0 // pred_check
    _
  $region3: #{encoder_forward.9} parent=0 // pred_check_branch
    %9 = sbr.rel (0) target = $region5
  $region4: #{encoder_forward.9} parent=0 // pred_region
    _
  $region5: #{encoder_forward.9} parent=0 // pred_fallthru
    _
  // Predicated region
  $region6: #{encoder_forward.9} parent=0 // pred_check
    _
  $region7: #{encoder_forward.9} parent=0 // pred_check_branch
    %11 = sbr.rel (0) target = $region9
  $region8: #{encoder_forward.9} parent=0 // pred_region
    _
  $region9: #{encoder_forward.9} parent=0 // pred_fallthru
    _
  // Predicated region
  $region10: #{encoder_forward.9} parent=0 // pred_check
    _
  $region11: #{encoder_forward.9} parent=0 // pred_check_branch
    %13 = sbr.rel (0) target = $region13
  $region12: #{encoder_forward.9} parent=0 // pred_region
    _
  $region13: #{encoder_forward.9} parent=0 // pred_fallthru
    _
  %v14 = vld [vmem:[%s0] sm:$0xf]
  %v15 = vunpack.c.l.bf16 %v14
  %v16 = vld [vmem:[%s1] sm:$0xf]
  %18 = vset.pattern.permute.xlu0 0
  %19 = vperm.xlu0 %18, %v16
  %v20 = vpop.permute.xlu0 %19
  %v22 = vunpack.c.l.s4 839922192
  %v23 = vunpack.c.0.s8 %v22
  %v24 = vlaneseq
  %v25 = vshrl.u32 %v24, 7
  %v26 = vsub.s32 %v23, %v25
  %v27 = vrot.slane %v20, %v26
  %v29 = vmul.f32 %v15, %v27
  %v30 = vld [vmem:[%s2] sm:$0xf]
  %32 = vset.pattern.permute.xlu0 0
  %33 = vperm.xlu0 %32, %v30
  %v34 = vpop.permute.xlu0 %33
  %v36 = vunpack.c.l.s4 839922192
  %v37 = vunpack.c.0.s8 %v36
  %v38 = vlaneseq
  %v39 = vshrl.u32 %v38, 7
  %v40 = vsub.s32 %v37, %v39
  %v41 = vrot.slane %v34, %v40
  %v43 = vadd.f32 %v29, %v41
  %vm44 = vcmp.gt.f32.partialorder %v43, 0.0
  %v45 = vmul.f32 %v43, 0.2
  %v46 = vsel %vm44, %v43, %v45
  %v48 = vcombine.high %v46, %v46
  %v50 = vpack.c.bf16 %v46, %v46
  %v51 = vpack.c.bf16 %v48, %v48
  %v54 = vcombine.low %v50, %v51
  %v56 = vunpack.c.l.s4 1983009808
  %v57 = vunpack.c.0.s8 %v56
  %v58 = vlaneseq
  %v59 = vshrl.u32 %v58, 7
  %v60 = vsub.s32 %v57, %v59
  %v61 = vrot.slane %v54, %v60
  %vm63 = vcmask 1041408
  %vm64 = vcmask 125954
  %vm65 = vmor %vm64, %vm63
  %66 = vst.msk [vmem:[%s3] sm:$0xf] %vm65, %v61
  // Predicated region
  $region14: #{encoder_forward.9} parent=0 // pred_check
    _
  $region15: #{encoder_forward.9} parent=0 // pred_check_branch
    %68 = sbr.rel (0) target = $region17
  $region16: #{encoder_forward.9} parent=0 // pred_region
    _
  $region17: #{encoder_forward.9} parent=0 // pred_fallthru
    _
  // Predicated region
  $region18: #{encoder_forward.9} parent=0 // pred_check
    _
  $region19: #{encoder_forward.9} parent=0 // pred_check_branch
    %70 = sbr.rel (0) target = $region21
  $region20: #{encoder_forward.9} parent=0 // pred_region
    _
  $region21: #{encoder_forward.9} parent=0 // pred_fallthru
    _

// kernel: encoder_forward.8
$region0: #{encoder_forward.8}
  #allocation0 [shape = 'u32[]', space=smem, size = 0x4, offset = 0x4, fixed_abs, tag = 'smem constant byte address 0x4 - core index']
  #allocation1 [shape = 'u32[144,128]{1,0:T(1,128)}', space=vmem, size = 0x12000, scoped, tag = 'internal scratch']
  #allocation2 [shape = 'bf16[36,144]{1,0:T(8,128)(2,1)}', space=vmem, size = 0x5000, scoped, tag = 'scratch operand']
  %s0 = inlined_call_operand.vmem [shape: bf16[2,16,90], index: 0, kind: input, shape index: {}]
  %s1 = inlined_call_operand.vmem [shape: bf16[4,36], index: 1, kind: input, shape index: {}]
  %s2 = inlined_call_operand.vmem [shape: f32[1,144], index: 2, kind: input, shape index: {}]
  %s3 = inlined_call_operand.vmem [shape: bf16[1,4,144], index: 3, kind: output, shape index: {0}]
  %s4 = inlined_call_operand.vmem [shape: f32[1,4,1], index: 4, kind: output, shape index: {1}]
  %s5 = inlined_call_operand.vmem [shape: f32[1,4,1], index: 5, kind: output, shape index: {2}]
  %6 = xla_tuple %s3, %s4, %s5
  %s7 = sld [smem:[#allocation0]]
  $region38: #{encoder_forward.8} parent=0
    _
  %s9 = ssub.s32 1, %s7
  %s10 = scalar_select 0, %s9, %s7
  // Predicated region
  $region2: #{encoder_forward.8} parent=0 // pred_check
    _
  $region3: #{encoder_forward.8} parent=0 // pred_check_branch
    %12 = sbr.rel (0) target = $region5
  $region4: #{encoder_forward.8} parent=0 // pred_region
    _
  $region5: #{encoder_forward.8} parent=0 // pred_fallthru
    _
  // Predicated region
  $region6: #{encoder_forward.8} parent=0 // pred_check
    _
  $region7: #{encoder_forward.8} parent=0 // pred_check_branch
    %14 = sbr.rel (0) target = $region9
  $region8: #{encoder_forward.8} parent=0 // pred_region
    _
  $region9: #{encoder_forward.8} parent=0 // pred_fallthru
    _
  // Predicated region
  $region10: #{encoder_forward.8} parent=0 // pred_check
    _
  $region11: #{encoder_forward.8} parent=0 // pred_check_branch
    %16 = sbr.rel (0) target = $region13
  $region12: #{encoder_forward.8} parent=0 // pred_region
    _
  $region13: #{encoder_forward.8} parent=0 // pred_fallthru
    _
  %v18 = vld [vmem:[%s0] sm:$0xf]
  %v19 = vld [vmem:[%s0 + $0x4] sm:$0xf]
  %vm20 = vcmask 584704
  %21 = vst.msk [vmem:[#allocation2] sm:$0xf] %vm20, %v18
  %22 = vst.msk [vmem:[#allocation2 + $0x8] sm:$0xf] %vm20, %v19
  %v23 = vld [vmem:[%s0] sm:$0xc]
  %v24 = vld [vmem:[%s0 + $0x4] sm:$0x3]
  %vm27 = vcmask 1041408
  %vm28 = vcmask 1045508
  %vm29 = vmor %vm27, %vm28
  %v30 = vrot.slane %v23, 6
  %v31 = vrot.slane %v30, 4
  %v32 = vrot.slane %v24, 6
  %v33 = vsel %vm29, %v31, %v32
  %34 = vrot.lane.b32.xlu0 %v33, 127
  %v35 = vpop.permute.xlu0 %34
  %37 = vst.msk [vmem:[#allocation2 + $0x10] sm:$0xf] %vm20, %v35
  %v38 = vld [vmem:[%s0] sm:$0xf]
  %40 = vrot.lane.b32.xlu0 %v38, 119
  %v41 = vpop.permute.xlu0 %40
  %43 = vst.msk [vmem:[#allocation2 + $0x18] sm:$0xf] %vm20, %v41
  %v44 = vld [vmem:[%s0] sm:$0xc]
  %v46 = vrot.slane %v44, 6
  %v47 = vrot.slane %v46, 4
  %48 = vrot.lane.b32.xlu0 %v47, 118
  %v49 = vpop.permute.xlu0 %48
  %vm51 = vcmask 582656
  %52 = vst.msk [vmem:[#allocation2 + $0x20] sm:$0x3] %vm51, %v49
  %s53 = scalar_lea.vmem %s0, 8
  %v54 = vld [vmem:[%s53] sm:$0xf]
  %v55 = vld [vmem:[%s53 + $0x4] sm:$0xf]
  %58 = vrot.lane.b32.xlu0 %v54, 72
  %v59 = vpop.permute.xlu0 %58
  %60 = vrot.lane.b32.xlu0 %v55, 72
  %v61 = vpop.permute.xlu0 %60
  %v62 = vrot.slane %v59, 4
  %v63 = vrot.slane %v61, 4
  %vm64 = vcmask 588800
  %v65 = vsel %vm64, %v62, %v59
  %v66 = vsel %vm64, %v63, %v61
  %vm69 = vcmask 1044032
  %vm70 = vcmask 130052
  %vm71 = vmor %vm70, %vm69
  %72 = vst.msk [vmem:[#allocation2] sm:$0xff] %vm71, %v65
  %73 = vst.msk [vmem:[#allocation2 + $0x8] sm:$0xff] %vm71, %v66
  %v74 = vld [vmem:[%s53] sm:$0xc]
  %v75 = vld [vmem:[%s53 + $0x4] sm:$0x3]
  %v78 = vrot.slane %v74, 6
  %v79 = vrot.slane %v78, 4
  %v80 = vrot.slane %v75, 6
  %v81 = vsel %vm29, %v79, %v80
  %82 = vrot.lane.b32.xlu0 %v81, 71
  %v83 = vpop.permute.xlu0 %82
  %v84 = vrot.slane %v83, 4
  %vm85 = vcmask 580608
  %v86 = vsel %vm85, %v84, %v83
  %88 = vst.msk [vmem:[#allocation2 + $0x10] sm:$0xff] %vm71, %v86
  %v89 = vld [vmem:[%s53] sm:$0xf]
  %91 = vrot.lane.b32.xlu0 %v89, 63
  %v92 = vpop.permute.xlu0 %91
  %v93 = vrot.slane %v92, 4
  %vm94 = vcmask 515072
  %v95 = vsel %vm94, %v93, %v92
  %97 = vst.msk [vmem:[#allocation2 + $0x18] sm:$0xff] %vm71, %v95
  %v98 = vld [vmem:[%s53] sm:$0xc]
  %v100 = vrot.slane %v98, 6
  %v101 = vrot.slane %v100, 4
  %102 = vrot.lane.b32.xlu0 %v101, 62
  %v103 = vpop.permute.xlu0 %102
  %v104 = vrot.slane %v103, 4
  %vm105 = vcmask 506880
  %v106 = vsel %vm105, %v104, %v103
  %vm108 = vcmask 1041984
  %vm109 = vcmask 128004
  %vm110 = vmor %vm109, %vm108
  %111 = vst.msk [vmem:[#allocation2 + $0x20] sm:$0x33] %vm110, %v106
  %v112 = vld [vmem:[%s1] sm:$0x3]
  %v113 = vld [vmem:[#allocation2] sm:$0xff]
  %v114 = vld [vmem:[#allocation2 + $0x8] sm:$0xff]
  %v115 = vld [vmem:[#allocation2 + $0x10] sm:$0xff]
  %v116 = vld [vmem:[#allocation2 + $0x18] sm:$0xff]
  %v117 = vld [vmem:[#allocation2 + $0x20] sm:$0x33]
  %v123 = vunpack.c.l.b16 %v113
  %v124 = vunpack.c.h.b16 %v113
  %v125 = vunpack.c.l.b16 %v114
  %v126 = vunpack.c.h.b16 %v114
  %v127 = vunpack.c.l.b16 %v115
  %v128 = vunpack.c.h.b16 %v115
  %v129 = vunpack.c.l.b16 %v116
  %v130 = vunpack.c.h.b16 %v116
  %v131 = vunpack.c.l.b16 %v117
  %v132 = vunpack.c.h.b16 %v117
  %v133 = vpack.c.b16 %v125, %v123
  %v134 = vpack.c.b16 %v126, %v124
  %v135 = vpack.c.b16 %v129, %v127
  %v136 = vpack.c.b16 %v130, %v128
  %v137 = vpack.c.b16 %v131, %v131
  %v138 = vpack.c.b16 %v132, %v132
  %vm143 = vcmask 293888
  %v145 = vsel %vm143, %v112, 0
  %vm147 = vcmask 1041408
  %v149 = vsel %vm147, %v137, 0
  %v152 = vsel %vm147, %v138, 0
  %154 = vmatprep.subr.bf16.mxu0 0
  %155 = vmatpush1.bf16.msra.mxu0 0
  %156 = vmatprep.subr.bf16.mxu0 0
  %157 = vmatpush1.bf16.msra.mxu0 0
  %158 = vmatprep.subr.bf16.mxu0 0
  %159 = vmatpush1.bf16.msra.mxu0 0
  %160 = vmatprep.subr.bf16.mxu0 0
  %161 = vmatpush1.bf16.msra.mxu0 0
  %162 = vmatprep.subr.bf16.mxu0 0
  %163 = vmatpush1.bf16.msra.mxu0 0
  %164 = vmatprep.subr.bf16.mxu0 %v152
  %165 = vmatpush1.bf16.msra.mxu0 %v149
  %166 = vmatprep.subr.bf16.mxu0 %v136
  %167 = vmatpush1.bf16.msra.mxu0 %v135
  %168 = vmatprep.subr.bf16.mxu0 %v134
  %169 = vmatpush1.bf16.msra.mxu0 %v133
  %170 = vmatprep.subr.bf16.mxu0 0
  %171 = vmatpush2.bf16.msra.mxu0 0
  %172 = vmatprep.subr.bf16.mxu0 0
  %173 = vmatpush2.bf16.msra.mxu0 0
  %174 = vmatprep.subr.bf16.mxu0 0
  %175 = vmatpush2.bf16.msra.mxu0 0
  %176 = vmatprep.subr.bf16.mxu0 0
  %177 = vmatpush2.bf16.msra.mxu0 0
  %178 = vmatprep.subr.bf16.mxu0 0
  %179 = vmatpush2.bf16.msra.mxu0 0
  %180 = vmatprep.subr.bf16.mxu0 0
  %181 = vmatpush2.bf16.msra.mxu0 0
  %182 = vmatprep.subr.bf16.mxu0 0
  %183 = vmatpush2.bf16.msra.mxu0 0
  %184 = vmatprep.subr.bf16.mxu0 0
  %185 = vmatpush2.bf16.msra.mxu0 0
  %186 = vmatprep.mubr.bf16.mxu0 0
  %187 = vmatmul.mubr.bf16.gmra.mxu0 %v145
  %v188 = vpop.f32.mrf.mxu0
  %v189 = vadd.f32 0.0, %v188
  %v190 = vpop.f32.mrf.mxu0
  %v191 = vadd.f32 0.0, %v190
  %v192 = vpop.f32.mrf.mxu0
  %v193 = vpop.f32.mrf.mxu0
  %194 = vdwg.mxu0
  %v195 = vpack.c.bf16 %v189, %v189
  %v196 = vpack.c.bf16 %v191, %v191
  %v199 = vcombine.low %v195, %v196
  %v201 = vunpack.c.l.s4 1983009808
  %v202 = vunpack.c.0.s8 %v201
  %v203 = vlaneseq
  %v204 = vshrl.u32 %v203, 7
  %v205 = vsub.s32 %v202, %v204
  %v206 = vrot.slane %v199, %v205
  %vm208 = vcmask 125954
  %vm209 = vmor %vm208, %vm147
  %210 = vst.msk [vmem:[%s3] sm:$0xf] %vm209, %v206
  %v211 = vld [vmem:[%s2] sm:$0x3]
  %v213 = vlaneseq
  %v214 = vshrl.u32 %v213, 7
  %v215 = vsub.s32 0, %v214
  %v216 = vrot.slane %v211, %v215
  %v217 = vlaneseq
  %v218 = vshrl.u32 %v217, 7
  %v219 = vsub.s32 1, %v218
  %v220 = vrot.slane %v211, %v219
  %v223 = vmul.f32 %v189, %v216
  %v224 = vmul.f32 %v191, %v220
  %vm225 = vcmask 1043456
  %v226 = vsel %vm225, %v223, 0.0
  %vm227 = vcmask 125952
  %v228 = vsel %vm227, %v224, 0.0
  %v229 = vadd.f32 %v226, %v228
  %230 = vadd.xlane.f32.xlu0 %v229
  %v231 = vpop.xlane.xlu0 %230
  %v232 = vmul.f32 %v231, 0.0078125
  %v233 = vsub.f32 %v189, %v232
  %v234 = vsub.f32 %v191, %v232
  %v235 = vmul.f32 %v233, %v216
  %v236 = vmul.f32 %v234, %v220
  %vm237 = vcmask 3072
  %238 = vst.msk [vmem:[%s4] sm:$0xf] %vm237, %v232
  %v239 = vmul.f32 %v235, %v235
  %v240 = vmul.f32 %v236, %v236
  %v241 = vsel %vm225, %v239, 0.0
  %v242 = vsel %vm227, %v240, 0.0
  %v243 = vadd.f32 %v241, %v242
  %244 = vadd.xlane.f32.xlu0 %v243
  %v245 = vpop.xlane.xlu0 %244
  %246 = vst.msk [vmem:[%s5] sm:$0xf] %vm237, %v245
  // Predicated region
  $region14: #{encoder_forward.8} parent=0 // pred_check
    _
  $region15: #{encoder_forward.8} parent=0 // pred_check_branch
    %248 = sbr.rel (0) target = $region17
  $region16: #{encoder_forward.8} parent=0 // pred_region
    _
  $region17: #{encoder_forward.8} parent=0 // pred_fallthru
    _
  // Predicated region
  $region18: #{encoder_forward.8} parent=0 // pred_check
    _
  $region19: #{encoder_forward.8} parent=0 // pred_check_branch
    %250 = sbr.rel (0) target = $region21
  $region20: #{encoder_forward.8} parent=0 // pred_region
    _
  $region21: #{encoder_forward.8} parent=0 // pred_fallthru
    _
  // Predicated region
  $region22: #{encoder_forward.8} parent=0 // pred_check
    _
  $region23: #{encoder_forward.8} parent=0 // pred_check_branch
    %252 = sbr.rel (0) target = $region25
  $region24: #{encoder_forward.8} parent=0 // pred_region
    _
  $region25: #{encoder_forward.8} parent=0 // pred_fallthru
    _
  // Predicated region
  $region26: #{encoder_forward.8} parent=0 // pred_check
    _
  $region27: #{encoder_forward.8} parent=0 // pred_check_branch
    %254 = sbr.rel (0) target = $region29
  $region28: #{encoder_forward.8} parent=0 // pred_region
    _
  $region29: #{encoder_forward.8} parent=0 // pred_fallthru
    _
  // Predicated region
  $region30: #{encoder_forward.8} parent=0 // pred_check
    _
  $region31: #{encoder_forward.8} parent=0 // pred_check_branch
    %256 = sbr.rel (0) target = $region33
  $region32: #{encoder_forward.8} parent=0 // pred_region
    _
  $region33: #{encoder_forward.8} parent=0 // pred_fallthru
    _
  // Predicated region
  $region34: #{encoder_forward.8} parent=0 // pred_check
    _
  $region35: #{encoder_forward.8} parent=0 // pred_check_branch
    %258 = sbr.rel (0) target = $region37
  $region36: #{encoder_forward.8} parent=0 // pred_region
    _
  $region37: #{encoder_forward.8} parent=0 // pred_fallthru
    _

// kernel: encoder_forward.11
$region0: #{encoder_forward.11}
  #allocation0 [shape = 'u32[]', space=smem, size = 0x4, offset = 0x4, fixed_abs, tag = 'smem constant byte address 0x4 - core index']
  #allocation1 [shape = 'u32[144,128]{1,0:T(1,128)}', space=vmem, size = 0x12000, scoped, tag = 'internal scratch']
  %s0 = inlined_call_operand.vmem [shape: bf16[1,8,40], index: 0, kind: input, shape index: {}]
  %s1 = inlined_call_operand.vmem [shape: f32[8,1], index: 1, kind: input, shape index: {}]
  %s2 = inlined_call_operand.vmem [shape: f32[8,1], index: 2, kind: input, shape index: {}]
  %s3 = inlined_call_operand.vmem [shape: bf16[1,8,40], index: 3, kind: output, shape index: {}]
  %s4 = sld [smem:[#allocation0]]
  $region22: #{encoder_forward.11} parent=0
    _
  %s6 = ssub.s32 1, %s4
  %s7 = scalar_select 0, %s6, %s4
  // Predicated region
  $region2: #{encoder_forward.11} parent=0 // pred_check
    _
  $region3: #{encoder_forward.11} parent=0 // pred_check_branch
    %9 = sbr.rel (0) target = $region5
  $region4: #{encoder_forward.11} parent=0 // pred_region
    _
  $region5: #{encoder_forward.11} parent=0 // pred_fallthru
    _
  // Predicated region
  $region6: #{encoder_forward.11} parent=0 // pred_check
    _
  $region7: #{encoder_forward.11} parent=0 // pred_check_branch
    %11 = sbr.rel (0) target = $region9
  $region8: #{encoder_forward.11} parent=0 // pred_region
    _
  $region9: #{encoder_forward.11} parent=0 // pred_fallthru
    _
  // Predicated region
  $region10: #{encoder_forward.11} parent=0 // pred_check
    _
  $region11: #{encoder_forward.11} parent=0 // pred_check_branch
    %13 = sbr.rel (0) target = $region13
  $region12: #{encoder_forward.11} parent=0 // pred_region
    _
  $region13: #{encoder_forward.11} parent=0 // pred_fallthru
    _
  %v14 = vld [vmem:[%s0] sm:$0xf]
  %v15 = vunpack.c.l.bf16 %v14
  %v16 = vld [vmem:[%s1] sm:$0xff]
  %18 = vset.pattern.permute.xlu0 0
  %19 = vperm.xlu0 %18, %v16
  %v20 = vpop.permute.xlu0 %19
  %v22 = vmul.f32 %v15, %v20
  %v23 = vld [vmem:[%s2] sm:$0xff]
  %25 = vset.pattern.permute.xlu0 0
  %26 = vperm.xlu0 %25, %v23
  %v27 = vpop.permute.xlu0 %26
  %v29 = vadd.f32 %v22, %v27
  %vm30 = vcmp.gt.f32.partialorder %v29, 0.0
  %v31 = vmul.f32 %v29, 0.2
  %v32 = vsel %vm30, %v29, %v31
  %v33 = vpack.c.bf16 %v32, %v32
  %vm34 = vcmask 322560
  %35 = vst.msk [vmem:[%s3] sm:$0xf] %vm34, %v33
  // Predicated region
  $region14: #{encoder_forward.11} parent=0 // pred_check
    _
  $region15: #{encoder_forward.11} parent=0 // pred_check_branch
    %37 = sbr.rel (0) target = $region17
  $region16: #{encoder_forward.11} parent=0 // pred_region
    _
  $region17: #{encoder_forward.11} parent=0 // pred_fallthru
    _
  // Predicated region
  $region18: #{encoder_forward.11} parent=0 // pred_check
    _
  $region19: #{encoder_forward.11} parent=0 // pred_check_branch
    %39 = sbr.rel (0) target = $region21
  $region20: #{encoder_forward.11} parent=0 // pred_region
    _
  $region21: #{encoder_forward.11} parent=0 // pred_fallthru
    _

// kernel: encoder_forward.10
$region0: #{encoder_forward.10}
  #allocation0 [shape = 'u32[]', space=smem, size = 0x4, offset = 0x4, fixed_abs, tag = 'smem constant byte address 0x4 - core index']
  #allocation1 [shape = 'u32[144,128]{1,0:T(1,128)}', space=vmem, size = 0x12000, scoped, tag = 'internal scratch']
  #allocation2 [shape = 'bf16[36,40]{1,0:T(8,128)(2,1)}', space=vmem, size = 0x2800, scoped, tag = 'scratch operand']
  %s0 = inlined_call_operand.vmem [shape: bf16[2,16,30], index: 0, kind: input, shape index: {}]
  %s1 = inlined_call_operand.vmem [shape: bf16[8,36], index: 1, kind: input, shape index: {}]
  %s2 = inlined_call_operand.vmem [shape: f32[1,40], index: 2, kind: input, shape index: {}]
  %s3 = inlined_call_operand.vmem [shape: bf16[1,8,40], index: 3, kind: output, shape index: {0}]
  %s4 = inlined_call_operand.vmem [shape: f32[1,8,1], index: 4, kind: output, shape index: {1}]
  %s5 = inlined_call_operand.vmem [shape: f32[1,8,1], index: 5, kind: output, shape index: {2}]
  %6 = xla_tuple %s3, %s4, %s5
  %s7 = sld [smem:[#allocation0]]
  $region38: #{encoder_forward.10} parent=0
    _
  %s9 = ssub.s32 1, %s7
  %s10 = scalar_select 0, %s9, %s7
  // Predicated region
  $region2: #{encoder_forward.10} parent=0 // pred_check
    _
  $region3: #{encoder_forward.10} parent=0 // pred_check_branch
    %12 = sbr.rel (0) target = $region5
  $region4: #{encoder_forward.10} parent=0 // pred_region
    _
  $region5: #{encoder_forward.10} parent=0 // pred_fallthru
    _
  // Predicated region
  $region6: #{encoder_forward.10} parent=0 // pred_check
    _
  $region7: #{encoder_forward.10} parent=0 // pred_check_branch
    %14 = sbr.rel (0) target = $region9
  $region8: #{encoder_forward.10} parent=0 // pred_region
    _
  $region9: #{encoder_forward.10} parent=0 // pred_fallthru
    _
  // Predicated region
  $region10: #{encoder_forward.10} parent=0 // pred_check
    _
  $region11: #{encoder_forward.10} parent=0 // pred_check_branch
    %16 = sbr.rel (0) target = $region13
  $region12: #{encoder_forward.10} parent=0 // pred_region
    _
  $region13: #{encoder_forward.10} parent=0 // pred_fallthru
    _
  %v18 = vld [vmem:[%s0] sm:$0xf]
  %v19 = vld [vmem:[%s0 + $0x4] sm:$0xf]
  %vm20 = vcmask 158720
  %21 = vst.msk [vmem:[#allocation2] sm:$0xf] %vm20, %v18
  %22 = vst.msk [vmem:[#allocation2 + $0x4] sm:$0xf] %vm20, %v19
  %v23 = vld [vmem:[%s0] sm:$0xc]
  %v24 = vld [vmem:[%s0 + $0x4] sm:$0x3]
  %vm27 = vcmask 1041408
  %vm28 = vcmask 1045508
  %vm29 = vmor %vm27, %vm28
  %v30 = vrot.slane %v23, 6
  %v31 = vrot.slane %v30, 4
  %v32 = vrot.slane %v24, 6
  %v33 = vsel %vm29, %v31, %v32
  %34 = vrot.lane.b32.xlu0 %v33, 127
  %v35 = vpop.permute.xlu0 %34
  %37 = vst.msk [vmem:[#allocation2 + $0x8] sm:$0xf] %vm20, %v35
  %v38 = vld [vmem:[%s0] sm:$0xf]
  %40 = vrot.lane.b32.xlu0 %v38, 123
  %v41 = vpop.permute.xlu0 %40
  %43 = vst.msk [vmem:[#allocation2 + $0xc] sm:$0xf] %vm20, %v41
  %v44 = vld [vmem:[%s0] sm:$0xc]
  %v46 = vrot.slane %v44, 6
  %v47 = vrot.slane %v46, 4
  %48 = vrot.lane.b32.xlu0 %v47, 122
  %v49 = vpop.permute.xlu0 %48
  %vm51 = vcmask 156672
  %52 = vst.msk [vmem:[#allocation2 + $0x10] sm:$0x3] %vm51, %v49
  %s53 = scalar_lea.vmem %s0, 8
  %v54 = vld [vmem:[%s53] sm:$0xf]
  %v55 = vld [vmem:[%s53 + $0x4] sm:$0xf]
  %58 = vrot.lane.b32.xlu0 %v54, 20
  %v59 = vpop.permute.xlu0 %58
  %60 = vrot.lane.b32.xlu0 %v55, 20
  %v61 = vpop.permute.xlu0 %60
  %vm64 = vcmask 322720
  %65 = vst.msk [vmem:[#allocation2] sm:$0xf] %vm64, %v59
  %66 = vst.msk [vmem:[#allocation2 + $0x4] sm:$0xf] %vm64, %v61
  %v67 = vld [vmem:[%s53] sm:$0xc]
  %v68 = vld [vmem:[%s53 + $0x4] sm:$0x3]
  %v71 = vrot.slane %v67, 6
  %v72 = vrot.slane %v71, 4
  %v73 = vrot.slane %v68, 6
  %v74 = vsel %vm29, %v72, %v73
  %75 = vrot.lane.b32.xlu0 %v74, 19
  %v76 = vpop.permute.xlu0 %75
  %78 = vst.msk [vmem:[#allocation2 + $0x8] sm:$0xf] %vm64, %v76
  %v79 = vld [vmem:[%s53] sm:$0xf]
  %81 = vrot.lane.b32.xlu0 %v79, 15
  %v82 = vpop.permute.xlu0 %81
  %84 = vst.msk [vmem:[#allocation2 + $0xc] sm:$0xf] %vm64, %v82
  %v85 = vld [vmem:[%s53] sm:$0xc]
  %v87 = vrot.slane %v85, 6
  %v88 = vrot.slane %v87, 4
  %89 = vrot.lane.b32.xlu0 %v88, 14
  %v90 = vpop.permute.xlu0 %89
  %vm92 = vcmask 320672
  %93 = vst.msk [vmem:[#allocation2 + $0x10] sm:$0x3] %vm92, %v90
  %v94 = vld [vmem:[%s1] sm:$0xf]
  %v95 = vld [vmem:[#allocation2] sm:$0xf]
  %v96 = vld [vmem:[#allocation2 + $0x4] sm:$0xf]
  %v97 = vld [vmem:[#allocation2 + $0x8] sm:$0xf]
  %v98 = vld [vmem:[#allocation2 + $0xc] sm:$0xf]
  %v99 = vld [vmem:[#allocation2 + $0x10] sm:$0x3]
  %v105 = vunpack.c.l.b16 %v95
  %v106 = vunpack.c.l.b16 %v96
  %v107 = vunpack.c.l.b16 %v97
  %v108 = vunpack.c.l.b16 %v98
  %v109 = vunpack.c.l.b16 %v99
  %v110 = vpack.c.b16 %v106, %v105
  %v111 = vpack.c.b16 %v108, %v107
  %v112 = vpack.c.b16 %v109, %v109
  %vm115 = vcmask 293888
  %v117 = vsel %vm115, %v94, 0
  %vm119 = vcmask 1041408
  %v121 = vsel %vm119, %v112, 0
  %123 = vmatprep.subr.bf16.mxu0 0
  %124 = vmatpush1.bf16.msra.mxu0 0
  %125 = vmatprep.subr.bf16.mxu0 0
  %126 = vmatpush1.bf16.msra.mxu0 0
  %127 = vmatprep.subr.bf16.mxu0 0
  %128 = vmatpush1.bf16.msra.mxu0 0
  %129 = vmatprep.subr.bf16.mxu0 0
  %130 = vmatpush1.bf16.msra.mxu0 0
  %131 = vmatprep.subr.bf16.mxu0 0
  %132 = vmatpush1.bf16.msra.mxu0 0
  %133 = vmatprep.subr.bf16.mxu0 0
  %134 = vmatpush1.bf16.msra.mxu0 %v121
  %135 = vmatprep.subr.bf16.mxu0 0
  %136 = vmatpush1.bf16.msra.mxu0 %v111
  %137 = vmatprep.subr.bf16.mxu0 0
  %138 = vmatpush1.bf16.msra.mxu0 %v110
  %139 = vmatprep.subr.bf16.mxu0 0
  %140 = vmatpush2.bf16.msra.mxu0 0
  %141 = vmatprep.subr.bf16.mxu0 0
  %142 = vmatpush2.bf16.msra.mxu0 0
  %143 = vmatprep.subr.bf16.mxu0 0
  %144 = vmatpush2.bf16.msra.mxu0 0
  %145 = vmatprep.subr.bf16.mxu0 0
  %146 = vmatpush2.bf16.msra.mxu0 0
  %147 = vmatprep.subr.bf16.mxu0 0
  %148 = vmatpush2.bf16.msra.mxu0 0
  %149 = vmatprep.subr.bf16.mxu0 0
  %150 = vmatpush2.bf16.msra.mxu0 0
  %151 = vmatprep.subr.bf16.mxu0 0
  %152 = vmatpush2.bf16.msra.mxu0 0
  %153 = vmatprep.subr.bf16.mxu0 0
  %154 = vmatpush2.bf16.msra.mxu0 0
  %155 = vmatprep.mubr.bf16.mxu0 0
  %156 = vmatmul.mubr.bf16.gmra.mxu0 %v117
  %v157 = vpop.f32.mrf.mxu0
  %v158 = vadd.f32 0.0, %v157
  %v159 = vpop.f32.mrf.mxu0
  %v160 = vpop.f32.mrf.mxu0
  %v161 = vpop.f32.mrf.mxu0
  %162 = vdwg.mxu0
  %v163 = vpack.c.bf16 %v158, %v158
  %vm164 = vcmask 322560
  %165 = vst.msk [vmem:[%s3] sm:$0xf] %vm164, %v163
  %v166 = vld [vmem:[%s2] sm:$0x1]
  %v168 = vlaneseq
  %v169 = vshrl.u32 %v168, 7
  %v170 = vsub.s32 0, %v169
  %v171 = vrot.slane %v166, %v170
  %v173 = vmul.f32 %v158, %v171
  %vm174 = vcmask 326656
  %v175 = vsel %vm174, %v173, 0.0
  %176 = vadd.xlane.f32.xlu0 %v175
  %v177 = vpop.xlane.xlu0 %176
  %v178 = vmul.f32 %v177, 0.03125
  %v179 = vsub.f32 %v158, %v178
  %v180 = vmul.f32 %v179, %v171
  %vm181 = vcmask 7168
  %182 = vst.msk [vmem:[%s4] sm:$0xff] %vm181, %v178
  %v183 = vmul.f32 %v180, %v180
  %v184 = vsel %vm174, %v183, 0.0
  %185 = vadd.xlane.f32.xlu0 %v184
  %v186 = vpop.xlane.xlu0 %185
  %187 = vst.msk [vmem:[%s5] sm:$0xff] %vm181, %v186
  // Predicated region
  $region14: #{encoder_forward.10} parent=0 // pred_check
    _
  $region15: #{encoder_forward.10} parent=0 // pred_check_branch
    %189 = sbr.rel (0) target = $region17
  $region16: #{encoder_forward.10} parent=0 // pred_region
    _
  $region17: #{encoder_forward.10} parent=0 // pred_fallthru
    _
  // Predicated region
  $region18: #{encoder_forward.10} parent=0 // pred_check
    _
  $region19: #{encoder_forward.10} parent=0 // pred_check_branch
    %191 = sbr.rel (0) target = $region21
  $region20: #{encoder_forward.10} parent=0 // pred_region
    _
  $region21: #{encoder_forward.10} parent=0 // pred_fallthru
    _
  // Predicated region
  $region22: #{encoder_forward.10} parent=0 // pred_check
    _
  $region23: #{encoder_forward.10} parent=0 // pred_check_branch
    %193 = sbr.rel (0) target = $region25
  $region24: #{encoder_forward.10} parent=0 // pred_region
    _
  $region25: #{encoder_forward.10} parent=0 // pred_fallthru
    _
  // Predicated region
  $region26: #{encoder_forward.10} parent=0 // pred_check
    _
  $region27: #{encoder_forward.10} parent=0 // pred_check_branch
    %195 = sbr.rel (0) target = $region29
  $region28: #{encoder_forward.10} parent=0 // pred_region
    _
  $region29: #{encoder_forward.10} parent=0 // pred_fallthru
    _
  // Predicated region
  $region30: #{encoder_forward.10} parent=0 // pred_check
    _
  $region31: #{encoder_forward.10} parent=0 // pred_check_branch
    %197 = sbr.rel (0) target = $region33
  $region32: #{encoder_forward.10} parent=0 // pred_region
    _
  $region33: #{encoder_forward.10} parent=0 // pred_fallthru
    _
  // Predicated region
  $region34: #{encoder_forward.10} parent=0 // pred_check
    _
  $region35: #{encoder_forward.10} parent=0 // pred_check_branch
    %199 = sbr.rel (0) target = $region37
  $region36: #{encoder_forward.10} parent=0 // pred_region
    _
  $region37: #{encoder_forward.10} parent=0 // pred_fallthru
    _

// kernel: encoder_forward.13
$region0: #{encoder_forward.13}
  #allocation0 [shape = 'u32[]', space=smem, size = 0x4, offset = 0x4, fixed_abs, tag = 'smem constant byte address 0x4 - core index']
  #allocation1 [shape = 'u32[144,128]{1,0:T(1,128)}', space=vmem, size = 0x12000, scoped, tag = 'internal scratch']
  %s0 = inlined_call_operand.vmem [shape: bf16[1,16,12], index: 0, kind: input, shape index: {}]
  %s1 = inlined_call_operand.vmem [shape: f32[16,1], index: 1, kind: input, shape index: {}]
  %s2 = inlined_call_operand.vmem [shape: f32[16,1], index: 2, kind: input, shape index: {}]
  %s3 = inlined_call_operand.vmem [shape: bf16[1,16,12], index: 3, kind: output, shape index: {}]
  %s4 = sld [smem:[#allocation0]]
  $region22: #{encoder_forward.13} parent=0
    _
  %s6 = ssub.s32 1, %s4
  %s7 = scalar_select 0, %s6, %s4
  // Predicated region
  $region2: #{encoder_forward.13} parent=0 // pred_check
    _
  $region3: #{encoder_forward.13} parent=0 // pred_check_branch
    %9 = sbr.rel (0) target = $region5
  $region4: #{encoder_forward.13} parent=0 // pred_region
    _
  $region5: #{encoder_forward.13} parent=0 // pred_fallthru
    _
  // Predicated region
  $region6: #{encoder_forward.13} parent=0 // pred_check
    _
  $region7: #{encoder_forward.13} parent=0 // pred_check_branch
    %11 = sbr.rel (0) target = $region9
  $region8: #{encoder_forward.13} parent=0 // pred_region
    _
  $region9: #{encoder_forward.13} parent=0 // pred_fallthru
    _
  // Predicated region
  $region10: #{encoder_forward.13} parent=0 // pred_check
    _
  $region11: #{encoder_forward.13} parent=0 // pred_check_branch
    %13 = sbr.rel (0) target = $region13
  $region12: #{encoder_forward.13} parent=0 // pred_region
    _
  $region13: #{encoder_forward.13} parent=0 // pred_fallthru
    _
  %v14 = vld [vmem:[%s0] sm:$0xf]
  %v15 = vld [vmem:[%s0 + $0x4] sm:$0xf]
  %v16 = vunpack.c.l.bf16 %v14
  %v17 = vunpack.c.l.bf16 %v15
  %v18 = vld [vmem:[%s1] sm:$0xff]
  %v19 = vld [vmem:[%s1 + $0x8] sm:$0xff]
  %21 = vset.pattern.permute.xlu0 0
  %22 = vperm.xlu0 %21, %v18
  %v23 = vpop.permute.xlu0 %22
  %26 = vset.pattern.permute.xlu0 0
  %27 = vperm.xlu0 %26, %v19
  %v28 = vpop.permute.xlu0 %27
  %v30 = vmul.f32 %v16, %v23
  %v31 = vmul.f32 %v17, %v28
  %v32 = vld [vmem:[%s2] sm:$0xff]
  %v33 = vld [vmem:[%s2 + $0x8] sm:$0xff]
  %35 = vset.pattern.permute.xlu0 0
  %36 = vperm.xlu0 %35, %v32
  %v37 = vpop.permute.xlu0 %36
  %40 = vset.pattern.permute.xlu0 0
  %41 = vperm.xlu0 %40, %v33
  %v42 = vpop.permute.xlu0 %41
  %v44 = vadd.f32 %v30, %v37
  %v45 = vadd.f32 %v31, %v42
  %vm46 = vcmp.gt.f32.partialorder %v44, 0.0
  %vm47 = vcmp.gt.f32.partialorder %v45, 0.0
  %v48 = vmul.f32 %v44, 0.2
  %v49 = vmul.f32 %v45, 0.2
  %v50 = vsel %vm46, %v44, %v48
  %v51 = vsel %vm47, %v45, %v49
  %v52 = vpack.c.bf16 %v51, %v50
  %v54 = vunpack.c.l.b16 %v52
  %v55 = vunpack.c.h.b16 %v52
  %v56 = vpack.c.b16 %v54, %v54
  %v57 = vpack.c.b16 %v55, %v55
  %vm60 = vcmask 93184
  %61 = vst.msk [vmem:[%s3] sm:$0xf] %vm60, %v56
  %62 = vst.msk [vmem:[%s3 + $0x4] sm:$0xf] %vm60, %v57
  // Predicated region
  $region14: #{encoder_forward.13} parent=0 // pred_check
    _
  $region15: #{encoder_forward.13} parent=0 // pred_check_branch
    %64 = sbr.rel (0) target = $region17
  $region16: #{encoder_forward.13} parent=0 // pred_region
    _
  $region17: #{encoder_forward.13} parent=0 // pred_fallthru
    _
  // Predicated region
  $region18: #{encoder_forward.13} parent=0 // pred_check
    _
  $region19: #{encoder_forward.13} parent=0 // pred_check_branch
    %66 = sbr.rel (0) target = $region21
  $region20: #{encoder_forward.13} parent=0 // pred_region
    _
  $region21: #{encoder_forward.13} parent=0 // pred_fallthru
    _

// kernel: encoder_forward.12
$region0: #{encoder_forward.12}
  #allocation0 [shape = 'u32[]', space=smem, size = 0x4, offset = 0x4, fixed_abs, tag = 'smem constant byte address 0x4 - core index']
  #allocation1 [shape = 'u32[144,128]{1,0:T(1,128)}', space=vmem, size = 0x12000, scoped, tag = 'internal scratch']
  #allocation2 [shape = 'bf16[72,12]{1,0:T(8,128)(2,1)}', space=vmem, size = 0x4800, scoped, tag = 'scratch operand']
  %s0 = inlined_call_operand.vmem [shape: bf16[2,32,12], index: 0, kind: input, shape index: {}]
  %s1 = inlined_call_operand.vmem [shape: bf16[16,72], index: 1, kind: input, shape index: {}]
  %s2 = inlined_call_operand.vmem [shape: f32[1,12], index: 2, kind: input, shape index: {}]
  %s3 = inlined_call_operand.vmem [shape: bf16[1,16,12], index: 3, kind: output, shape index: {0}]
  %s4 = inlined_call_operand.vmem [shape: f32[1,16,1], index: 4, kind: output, shape index: {1}]
  %s5 = inlined_call_operand.vmem [shape: f32[1,16,1], index: 5, kind: output, shape index: {2}]
  %6 = xla_tuple %s3, %s4, %s5
  %s7 = sld [smem:[#allocation0]]
  $region38: #{encoder_forward.12} parent=0
    _
  %s9 = ssub.s32 1, %s7
  %s10 = scalar_select 0, %s9, %s7
  // Predicated region
  $region2: #{encoder_forward.12} parent=0 // pred_check
    _
  $region3: #{encoder_forward.12} parent=0 // pred_check_branch
    %12 = sbr.rel (0) target = $region5
  $region4: #{encoder_forward.12} parent=0 // pred_region
    _
  $region5: #{encoder_forward.12} parent=0 // pred_fallthru
    _
  // Predicated region
  $region6: #{encoder_forward.12} parent=0 // pred_check
    _
  $region7: #{encoder_forward.12} parent=0 // pred_check_branch
    %14 = sbr.rel (0) target = $region9
  $region8: #{encoder_forward.12} parent=0 // pred_region
    _
  $region9: #{encoder_forward.12} parent=0 // pred_fallthru
    _
  // Predicated region
  $region10: #{encoder_forward.12} parent=0 // pred_check
    _
  $region11: #{encoder_forward.12} parent=0 // pred_check_branch
    %16 = sbr.rel (0) target = $region13
  $region12: #{encoder_forward.12} parent=0 // pred_region
    _
  $region13: #{encoder_forward.12} parent=0 // pred_fallthru
    _
  %v18 = vld [vmem:[%s0] sm:$0xf]
  %v19 = vld [vmem:[%s0 + $0x4] sm:$0xf]
  %v20 = vld [vmem:[%s0 + $0x8] sm:$0xf]
  %v21 = vld [vmem:[%s0 + $0xc] sm:$0xf]
  %vm22 = vcmask 44032
  %23 = vst.msk [vmem:[#allocation2] sm:$0xf] %vm22, %v18
  %24 = vst.msk [vmem:[#allocation2 + $0x4] sm:$0xf] %vm22, %v19
  %25 = vst.msk [vmem:[#allocation2 + $0x8] sm:$0xf] %vm22, %v20
  %26 = vst.msk [vmem:[#allocation2 + $0xc] sm:$0xf] %vm22, %v21
  %v27 = vld [vmem:[%s0 + $0x4] sm:$0xf]
  %v28 = vld [vmem:[%s0 + $0x8] sm:$0xf]
  %31 = vrot.lane.b32.xlu0 %v27, 127
  %v32 = vpop.permute.xlu0 %31
  %33 = vrot.lane.b32.xlu0 %v28, 127
  %v34 = vpop.permute.xlu0 %33
  %37 = vst.msk [vmem:[#allocation2 + $0x10] sm:$0xf] %vm22, %v32
  %38 = vst.msk [vmem:[#allocation2 + $0x14] sm:$0xf] %vm22, %v34
  %v39 = vld [vmem:[%s0] sm:$0xf]
  %v40 = vld [vmem:[%s0 + $0x4] sm:$0xf]
  %43 = vrot.lane.b32.xlu0 %v39, 125
  %v44 = vpop.permute.xlu0 %43
  %45 = vrot.lane.b32.xlu0 %v40, 125
  %v46 = vpop.permute.xlu0 %45
  %49 = vst.msk [vmem:[#allocation2 + $0x18] sm:$0xf] %vm22, %v44
  %50 = vst.msk [vmem:[#allocation2 + $0x1c] sm:$0xf] %vm22, %v46
  %v51 = vld [vmem:[%s0 + $0x4] sm:$0xf]
  %53 = vrot.lane.b32.xlu0 %v51, 124
  %v54 = vpop.permute.xlu0 %53
  %56 = vst.msk [vmem:[#allocation2 + $0x20] sm:$0xf] %vm22, %v54
  %s57 = scalar_lea.vmem %s0, 16
  %v58 = vld [vmem:[%s57] sm:$0xf]
  %v59 = vld [vmem:[%s57 + $0x4] sm:$0xf]
  %v60 = vld [vmem:[%s57 + $0x8] sm:$0xf]
  %v61 = vld [vmem:[%s57 + $0xc] sm:$0xf]
  %66 = vrot.lane.b32.xlu0 %v58, 6
  %v67 = vpop.permute.xlu0 %66
  %68 = vrot.lane.b32.xlu0 %v59, 6
  %v69 = vpop.permute.xlu0 %68
  %70 = vrot.lane.b32.xlu0 %v60, 6
  %v71 = vpop.permute.xlu0 %70
  %72 = vrot.lane.b32.xlu0 %v61, 6
  %v73 = vpop.permute.xlu0 %72
  %vm78 = vcmask 93232
  %79 = vst.msk [vmem:[#allocation2] sm:$0xf] %vm78, %v67
  %80 = vst.msk [vmem:[#allocation2 + $0x4] sm:$0xf] %vm78, %v69
  %81 = vst.msk [vmem:[#allocation2 + $0x8] sm:$0xf] %vm78, %v71
  %82 = vst.msk [vmem:[#allocation2 + $0xc] sm:$0xf] %vm78, %v73
  %v83 = vld [vmem:[%s57 + $0x4] sm:$0xf]
  %v84 = vld [vmem:[%s57 + $0x8] sm:$0xf]
  %87 = vrot.lane.b32.xlu0 %v83, 5
  %v88 = vpop.permute.xlu0 %87
  %89 = vrot.lane.b32.xlu0 %v84, 5
  %v90 = vpop.permute.xlu0 %89
  %93 = vst.msk [vmem:[#allocation2 + $0x10] sm:$0xf] %vm78, %v88
  %94 = vst.msk [vmem:[#allocation2 + $0x14] sm:$0xf] %vm78, %v90
  %v95 = vld [vmem:[%s57] sm:$0xf]
  %v96 = vld [vmem:[%s57 + $0x4] sm:$0xf]
  %99 = vrot.lane.b32.xlu0 %v95, 3
  %v100 = vpop.permute.xlu0 %99
  %101 = vrot.lane.b32.xlu0 %v96, 3
  %v102 = vpop.permute.xlu0 %101
  %105 = vst.msk [vmem:[#allocation2 + $0x18] sm:$0xf] %vm78, %v100
  %106 = vst.msk [vmem:[#allocation2 + $0x1c] sm:$0xf] %vm78, %v102
  %v107 = vld [vmem:[%s57 + $0x4] sm:$0xf]
  %109 = vrot.lane.b32.xlu0 %v107, 2
  %v110 = vpop.permute.xlu0 %109
  %112 = vst.msk [vmem:[#allocation2 + $0x20] sm:$0xf] %vm78, %v110
  %v113 = vld [vmem:[%s1] sm:$0xf]
  %v114 = vld [vmem:[%s1 + $0x4] sm:$0xf]
  %v115 = vld [vmem:[#allocation2] sm:$0xf]
  %v116 = vld [vmem:[#allocation2 + $0x4] sm:$0xf]
  %v117 = vld [vmem:[#allocation2 + $0x8] sm:$0xf]
  %v118 = vld [vmem:[#allocation2 + $0xc] sm:$0xf]
  %v119 = vld [vmem:[#allocation2 + $0x10] sm:$0xf]
  %v120 = vld [vmem:[#allocation2 + $0x14] sm:$0xf]
  %v121 = vld [vmem:[#allocation2 + $0x18] sm:$0xf]
  %v122 = vld [vmem:[#allocation2 + $0x1c] sm:$0xf]
  %v123 = vld [vmem:[#allocation2 + $0x20] sm:$0xf]
  %v126 = vunpack.c.l.b16 %v113
  %v127 = vunpack.c.l.b16 %v114
  %v128 = vpack.c.b16 %v127, %v126
  %v138 = vunpack.c.l.b16 %v115
  %v139 = vunpack.c.l.b16 %v116
  %v140 = vunpack.c.l.b16 %v117
  %v141 = vunpack.c.l.b16 %v118
  %v142 = vunpack.c.l.b16 %v119
  %v143 = vunpack.c.l.b16 %v120
  %v144 = vunpack.c.l.b16 %v121
  %v145 = vunpack.c.l.b16 %v122
  %v146 = vunpack.c.l.b16 %v123
  %v147 = vpack.c.b16 %v139, %v138
  %v148 = vpack.c.b16 %v141, %v140
  %v149 = vpack.c.b16 %v143, %v142
  %v150 = vpack.c.b16 %v145, %v144
  %v151 = vpack.c.b16 %v146, %v146
  %vm156 = vcmask 588800
  %v158 = vsel %vm156, %v128, 0
  %vm160 = vcmask 1043456
  %v162 = vsel %vm160, %v151, 0
  %164 = vmatprep.subr.bf16.mxu0 0
  %165 = vmatpush1.bf16.msra.mxu0 0
  %166 = vmatprep.subr.bf16.mxu0 0
  %167 = vmatpush1.bf16.msra.mxu0 0
  %168 = vmatprep.subr.bf16.mxu0 0
  %169 = vmatpush1.bf16.msra.mxu0 0
  %170 = vmatprep.subr.bf16.mxu0 0
  %171 = vmatpush1.bf16.msra.mxu0 %v162
  %172 = vmatprep.subr.bf16.mxu0 0
  %173 = vmatpush1.bf16.msra.mxu0 %v150
  %174 = vmatprep.subr.bf16.mxu0 0
  %175 = vmatpush1.bf16.msra.mxu0 %v149
  %176 = vmatprep.subr.bf16.mxu0 0
  %177 = vmatpush1.bf16.msra.mxu0 %v148
  %178 = vmatprep.subr.bf16.mxu0 0
  %179 = vmatpush1.bf16.msra.mxu0 %v147
  %180 = vmatprep.subr.bf16.mxu0 0
  %181 = vmatpush2.bf16.msra.mxu0 0
  %182 = vmatprep.subr.bf16.mxu0 0
  %183 = vmatpush2.bf16.msra.mxu0 0
  %184 = vmatprep.subr.bf16.mxu0 0
  %185 = vmatpush2.bf16.msra.mxu0 0
  %186 = vmatprep.subr.bf16.mxu0 0
  %187 = vmatpush2.bf16.msra.mxu0 0
  %188 = vmatprep.subr.bf16.mxu0 0
  %189 = vmatpush2.bf16.msra.mxu0 0
  %190 = vmatprep.subr.bf16.mxu0 0
  %191 = vmatpush2.bf16.msra.mxu0 0
  %192 = vmatprep.subr.bf16.mxu0 0
  %193 = vmatpush2.bf16.msra.mxu0 0
  %194 = vmatprep.subr.bf16.mxu0 0
  %195 = vmatpush2.bf16.msra.mxu0 0
  %196 = vmatprep.mubr.bf16.mxu0 0
  %197 = vmatmul.mubr.bf16.gmra.mxu0 %v158
  %v198 = vpop.f32.mrf.mxu0
  %v199 = vadd.f32 0.0, %v198
  %v200 = vpop.f32.mrf.mxu0
  %v201 = vpop.f32.mrf.mxu0
  %v202 = vadd.f32 0.0, %v201
  %v203 = vpop.f32.mrf.mxu0
  %204 = vdwg.mxu0
  %v205 = vpack.c.bf16 %v202, %v199
  %v207 = vunpack.c.l.b16 %v205
  %v208 = vunpack.c.h.b16 %v205
  %v209 = vpack.c.b16 %v207, %v207
  %v210 = vpack.c.b16 %v208, %v208
  %vm213 = vcmask 93184
  %214 = vst.msk [vmem:[%s3] sm:$0xf] %vm213, %v209
  %215 = vst.msk [vmem:[%s3 + $0x4] sm:$0xf] %vm213, %v210
  %v216 = vld [vmem:[%s2] sm:$0x1]
  %v218 = vlaneseq
  %v219 = vshrl.u32 %v218, 7
  %v220 = vsub.s32 0, %v219
  %v221 = vrot.slane %v216, %v220
  %v223 = vmul.f32 %v199, %v221
  %v224 = vmul.f32 %v202, %v221
  %vm225 = vcmask 97280
  %v226 = vsel %vm225, %v223, 0.0
  %227 = vadd.xlane.f32.xlu0 %v226
  %v228 = vpop.xlane.xlu0 %227
  %v229 = vsel %vm225, %v224, 0.0
  %230 = vadd.xlane.f32.xlu0 %v229
  %v231 = vpop.xlane.xlu0 %230
  %v232 = vmul.f32 %v228, 0.125
  %v233 = vmul.f32 %v231, 0.125
  %v234 = vsub.f32 %v199, %v232
  %v235 = vsub.f32 %v202, %v233
  %v236 = vmul.f32 %v234, %v221
  %v237 = vmul.f32 %v235, %v221
  %vm238 = vcmask 7168
  %239 = vst.msk [vmem:[%s4] sm:$0xff] %vm238, %v232
  %240 = vst.msk [vmem:[%s4 + $0x8] sm:$0xff] %vm238, %v233
  %v241 = vmul.f32 %v236, %v236
  %v242 = vmul.f32 %v237, %v237
  %v243 = vsel %vm225, %v241, 0.0
  %244 = vadd.xlane.f32.xlu0 %v243
  %v245 = vpop.xlane.xlu0 %244
  %v246 = vsel %vm225, %v242, 0.0
  %247 = vadd.xlane.f32.xlu0 %v246
  %v248 = vpop.xlane.xlu0 %247
  %249 = vst.msk [vmem:[%s5] sm:$0xff] %vm238, %v245
  %250 = vst.msk [vmem:[%s5 + $0x8] sm:$0xff] %vm238, %v248
  // Predicated region
  $region14: #{encoder_forward.12} parent=0 // pred_check
    _
  $region15: #{encoder_forward.12} parent=0 // pred_check_branch
    %252 = sbr.rel (0) target = $region17
  $region16: #{encoder_forward.12} parent=0 // pred_region
    _
  $region17: #{encoder_forward.12} parent=0 // pred_fallthru
    _
  // Predicated region
  $region18: #{encoder_forward.12} parent=0 // pred_check
    _
  $region19: #{encoder_forward.12} parent=0 // pred_check_branch
    %254 = sbr.rel (0) target = $region21
  $region20: #{encoder_forward.12} parent=0 // pred_region
    _
  $region21: #{encoder_forward.12} parent=0 // pred_fallthru
    _
  // Predicated region
  $region22: #{encoder_forward.12} parent=0 // pred_check
    _
  $region23: #{encoder_forward.12} parent=0 // pred_check_branch
    %256 = sbr.rel (0) target = $region25
  $region24: #{encoder_forward.12} parent=0 // pred_region
    _
  $region25: #{encoder_forward.12} parent=0 // pred_fallthru
    _
  // Predicated region
  $region26: #{encoder_forward.12} parent=0 // pred_check
    _
  $region27: #{encoder_forward.12} parent=0 // pred_check_branch
    %258 = sbr.rel (0) target = $region29
  $region28: #{encoder_forward.12} parent=0 // pred_region
    _
  $region29: #{encoder_forward.12} parent=0 // pred_fallthru
    _
  // Predicated region
  $region30: #{encoder_forward.12} parent=0 // pred_check
    _
  $region31: #{encoder_forward.12} parent=0 // pred_check_branch
    %260 = sbr.rel (0) target = $region33
  $region32: #{encoder_forward.12} parent=0 // pred_region
    _
  $region33: #{encoder_forward.12} parent=0 // pred_fallthru
    _
  // Predicated region
  $region34: #{encoder_forward.12} parent=0 // pred_check
    _
  $region35: #{encoder_forward.12} parent=0 // pred_check_branch
    %262 = sbr.rel (0) target = $region37
  $region36: #{encoder_forward.12} parent=0 // pred_region
    _
  $region37: #{encoder_forward.12} parent=0 // pred_fallthru
    _

// kernel: encoder_forward.14
$region0: #{encoder_forward.14}
  #allocation0 [shape = 'u32[]', space=smem, size = 0x4, offset = 0x4, fixed_abs, tag = 'smem constant byte address 0x4 - core index']
  #allocation1 [shape = 'u32[144,128]{1,0:T(1,128)}', space=vmem, size = 0x12000, scoped, tag = 'internal scratch']
  #allocation2 [shape = 'bf16[144,4]{1,0:T(8,128)(2,1)}', space=vmem, size = 0x9000, scoped, tag = 'scratch operand']
  %s0 = inlined_call_operand.vmem [shape: bf16[2,64,6], index: 0, kind: input, shape index: {}]
  %s1 = inlined_call_operand.vmem [shape: bf16[32,144], index: 1, kind: input, shape index: {}]
  %s2 = inlined_call_operand.vmem [shape: f32[1,4], index: 2, kind: input, shape index: {}]
  %s3 = inlined_call_operand.vmem [shape: bf16[1,32,4], index: 3, kind: output, shape index: {0}]
  %s4 = inlined_call_operand.vmem [shape: f32[1,32,1], index: 4, kind: output, shape index: {1}]
  %s5 = inlined_call_operand.vmem [shape: f32[1,32,1], index: 5, kind: output, shape index: {2}]
  %6 = xla_tuple %s3, %s4, %s5
  %s7 = sld [smem:[#allocation0]]
  $region38: #{encoder_forward.14} parent=0
    _
  %s9 = ssub.s32 1, %s7
  %s10 = scalar_select 0, %s9, %s7
  // Predicated region
  $region2: #{encoder_forward.14} parent=0 // pred_check
    _
  $region3: #{encoder_forward.14} parent=0 // pred_check_branch
    %12 = sbr.rel (0) target = $region5
  $region4: #{encoder_forward.14} parent=0 // pred_region
    _
  $region5: #{encoder_forward.14} parent=0 // pred_fallthru
    _
  // Predicated region
  $region6: #{encoder_forward.14} parent=0 // pred_check
    _
  $region7: #{encoder_forward.14} parent=0 // pred_check_branch
    %14 = sbr.rel (0) target = $region9
  $region8: #{encoder_forward.14} parent=0 // pred_region
    _
  $region9: #{encoder_forward.14} parent=0 // pred_fallthru
    _
  // Predicated region
  $region10: #{encoder_forward.14} parent=0 // pred_check
    _
  $region11: #{encoder_forward.14} parent=0 // pred_check_branch
    %16 = sbr.rel (0) target = $region13
  $region12: #{encoder_forward.14} parent=0 // pred_region
    _
  $region13: #{encoder_forward.14} parent=0 // pred_fallthru
    _
  %v18 = vld [vmem:[%s0] sm:$0xf]
  %v19 = vld [vmem:[%s0 + $0x4] sm:$0xf]
  %v20 = vld [vmem:[%s0 + $0x8] sm:$0xf]
  %v21 = vld [vmem:[%s0 + $0xc] sm:$0xf]
  %v22 = vld [vmem:[%s0 + $0x10] sm:$0xf]
  %v23 = vld [vmem:[%s0 + $0x14] sm:$0xf]
  %v24 = vld [vmem:[%s0 + $0x18] sm:$0xf]
  %v25 = vld [vmem:[%s0 + $0x1c] sm:$0xf]
  %vm26 = vcmask 11264
  %27 = vst.msk [vmem:[#allocation2] sm:$0xf] %vm26, %v18
  %28 = vst.msk [vmem:[#allocation2 + $0x4] sm:$0xf] %vm26, %v19
  %29 = vst.msk [vmem:[#allocation2 + $0x8] sm:$0xf] %vm26, %v20
  %30 = vst.msk [vmem:[#allocation2 + $0xc] sm:$0xf] %vm26, %v21
  %31 = vst.msk [vmem:[#allocation2 + $0x10] sm:$0xf] %vm26, %v22
  %32 = vst.msk [vmem:[#allocation2 + $0x14] sm:$0xf] %vm26, %v23
  %33 = vst.msk [vmem:[#allocation2 + $0x18] sm:$0xf] %vm26, %v24
  %34 = vst.msk [vmem:[#allocation2 + $0x1c] sm:$0xf] %vm26, %v25
  %v35 = vld [vmem:[%s0 + $0x8] sm:$0xf]
  %v36 = vld [vmem:[%s0 + $0xc] sm:$0xf]
  %v37 = vld [vmem:[%s0 + $0x10] sm:$0xf]
  %v38 = vld [vmem:[%s0 + $0x14] sm:$0xf]
  %43 = vrot.lane.b32.xlu0 %v35, 127
  %v44 = vpop.permute.xlu0 %43
  %45 = vrot.lane.b32.xlu0 %v36, 127
  %v46 = vpop.permute.xlu0 %45
  %47 = vrot.lane.b32.xlu0 %v37, 127
  %v48 = vpop.permute.xlu0 %47
  %49 = vrot.lane.b32.xlu0 %v38, 127
  %v50 = vpop.permute.xlu0 %49
  %55 = vst.msk [vmem:[#allocation2 + $0x20] sm:$0xf] %vm26, %v44
  %56 = vst.msk [vmem:[#allocation2 + $0x24] sm:$0xf] %vm26, %v46
  %57 = vst.msk [vmem:[#allocation2 + $0x28] sm:$0xf] %vm26, %v48
  %58 = vst.msk [vmem:[#allocation2 + $0x2c] sm:$0xf] %vm26, %v50
  %v59 = vld [vmem:[%s0] sm:$0xf]
  %v60 = vld [vmem:[%s0 + $0x4] sm:$0xf]
  %v61 = vld [vmem:[%s0 + $0x8] sm:$0xf]
  %v62 = vld [vmem:[%s0 + $0xc] sm:$0xf]
  %67 = vrot.lane.b32.xlu0 %v59, 126
  %v68 = vpop.permute.xlu0 %67
  %69 = vrot.lane.b32.xlu0 %v60, 126
  %v70 = vpop.permute.xlu0 %69
  %71 = vrot.lane.b32.xlu0 %v61, 126
  %v72 = vpop.permute.xlu0 %71
  %73 = vrot.lane.b32.xlu0 %v62, 126
  %v74 = vpop.permute.xlu0 %73
  %79 = vst.msk [vmem:[#allocation2 + $0x30] sm:$0xf] %vm26, %v68
  %80 = vst.msk [vmem:[#allocation2 + $0x34] sm:$0xf] %vm26, %v70
  %81 = vst.msk [vmem:[#allocation2 + $0x38] sm:$0xf] %vm26, %v72
  %82 = vst.msk [vmem:[#allocation2 + $0x3c] sm:$0xf] %vm26, %v74
  %v83 = vld [vmem:[%s0 + $0x8] sm:$0xf]
  %v84 = vld [vmem:[%s0 + $0xc] sm:$0xf]
  %87 = vrot.lane.b32.xlu0 %v83, 125
  %v88 = vpop.permute.xlu0 %87
  %89 = vrot.lane.b32.xlu0 %v84, 125
  %v90 = vpop.permute.xlu0 %89
  %93 = vst.msk [vmem:[#allocation2 + $0x40] sm:$0xf] %vm26, %v88
  %94 = vst.msk [vmem:[#allocation2 + $0x44] sm:$0xf] %vm26, %v90
  %s95 = scalar_lea.vmem %s0, 32
  %v96 = vld [vmem:[%s95] sm:$0xf]
  %v97 = vld [vmem:[%s95 + $0x4] sm:$0xf]
  %v98 = vld [vmem:[%s95 + $0x8] sm:$0xf]
  %v99 = vld [vmem:[%s95 + $0xc] sm:$0xf]
  %v100 = vld [vmem:[%s95 + $0x10] sm:$0xf]
  %v101 = vld [vmem:[%s95 + $0x14] sm:$0xf]
  %v102 = vld [vmem:[%s95 + $0x18] sm:$0xf]
  %v103 = vld [vmem:[%s95 + $0x1c] sm:$0xf]
  %112 = vrot.lane.b32.xlu0 %v96, 2
  %v113 = vpop.permute.xlu0 %112
  %114 = vrot.lane.b32.xlu0 %v97, 2
  %v115 = vpop.permute.xlu0 %114
  %116 = vrot.lane.b32.xlu0 %v98, 2
  %v117 = vpop.permute.xlu0 %116
  %118 = vrot.lane.b32.xlu0 %v99, 2
  %v119 = vpop.permute.xlu0 %118
  %120 = vrot.lane.b32.xlu0 %v100, 2
  %v121 = vpop.permute.xlu0 %120
  %122 = vrot.lane.b32.xlu0 %v101, 2
  %v123 = vpop.permute.xlu0 %122
  %124 = vrot.lane.b32.xlu0 %v102, 2
  %v125 = vpop.permute.xlu0 %124
  %126 = vrot.lane.b32.xlu0 %v103, 2
  %v127 = vpop.permute.xlu0 %126
  %vm136 = vcmask 27664
  %137 = vst.msk [vmem:[#allocation2] sm:$0xf] %vm136, %v113
  %138 = vst.msk [vmem:[#allocation2 + $0x4] sm:$0xf] %vm136, %v115
  %139 = vst.msk [vmem:[#allocation2 + $0x8] sm:$0xf] %vm136, %v117
  %140 = vst.msk [vmem:[#allocation2 + $0xc] sm:$0xf] %vm136, %v119
  %141 = vst.msk [vmem:[#allocation2 + $0x10] sm:$0xf] %vm136, %v121
  %142 = vst.msk [vmem:[#allocation2 + $0x14] sm:$0xf] %vm136, %v123
  %143 = vst.msk [vmem:[#allocation2 + $0x18] sm:$0xf] %vm136, %v125
  %144 = vst.msk [vmem:[#allocation2 + $0x1c] sm:$0xf] %vm136, %v127
  %v145 = vld [vmem:[%s95 + $0x8] sm:$0xf]
  %v146 = vld [vmem:[%s95 + $0xc] sm:$0xf]
  %v147 = vld [vmem:[%s95 + $0x10] sm:$0xf]
  %v148 = vld [vmem:[%s95 + $0x14] sm:$0xf]
  %153 = vrot.lane.b32.xlu0 %v145, 1
  %v154 = vpop.permute.xlu0 %153
  %155 = vrot.lane.b32.xlu0 %v146, 1
  %v156 = vpop.permute.xlu0 %155
  %157 = vrot.lane.b32.xlu0 %v147, 1
  %v158 = vpop.permute.xlu0 %157
  %159 = vrot.lane.b32.xlu0 %v148, 1
  %v160 = vpop.permute.xlu0 %159
  %165 = vst.msk [vmem:[#allocation2 + $0x20] sm:$0xf] %vm136, %v154
  %166 = vst.msk [vmem:[#allocation2 + $0x24] sm:$0xf] %vm136, %v156
  %167 = vst.msk [vmem:[#allocation2 + $0x28] sm:$0xf] %vm136, %v158
  %168 = vst.msk [vmem:[#allocation2 + $0x2c] sm:$0xf] %vm136, %v160
  %v169 = vld [vmem:[%s95] sm:$0xf]
  %v170 = vld [vmem:[%s95 + $0x4] sm:$0xf]
  %v171 = vld [vmem:[%s95 + $0x8] sm:$0xf]
  %v172 = vld [vmem:[%s95 + $0xc] sm:$0xf]
  %173 = vst.msk [vmem:[#allocation2 + $0x30] sm:$0xf] %vm136, %v169
  %174 = vst.msk [vmem:[#allocation2 + $0x34] sm:$0xf] %vm136, %v170
  %175 = vst.msk [vmem:[#allocation2 + $0x38] sm:$0xf] %vm136, %v171
  %176 = vst.msk [vmem:[#allocation2 + $0x3c] sm:$0xf] %vm136, %v172
  %v177 = vld [vmem:[%s95 + $0x8] sm:$0xf]
  %v178 = vld [vmem:[%s95 + $0xc] sm:$0xf]
  %181 = vrot.lane.b32.xlu0 %v177, 127
  %v182 = vpop.permute.xlu0 %181
  %183 = vrot.lane.b32.xlu0 %v178, 127
  %v184 = vpop.permute.xlu0 %183
  %187 = vst.msk [vmem:[#allocation2 + $0x40] sm:$0xf] %vm136, %v182
  %188 = vst.msk [vmem:[#allocation2 + $0x44] sm:$0xf] %vm136, %v184
  %v189 = vld [vmem:[%s1] sm:$0xff]
  %v190 = vld [vmem:[%s1 + $0x8] sm:$0xff]
  %v191 = vld [vmem:[%s1 + $0x10] sm:$0xff]
  %v192 = vld [vmem:[%s1 + $0x18] sm:$0xff]
  %v193 = vld [vmem:[#allocation2] sm:$0xf]
  %v194 = vld [vmem:[#allocation2 + $0x4] sm:$0xf]
  %v195 = vld [vmem:[#allocation2 + $0x8] sm:$0xf]
  %v196 = vld [vmem:[#allocation2 + $0xc] sm:$0xf]
  %v197 = vld [vmem:[#allocation2 + $0x10] sm:$0xf]
  %v198 = vld [vmem:[#allocation2 + $0x14] sm:$0xf]
  %v199 = vld [vmem:[#allocation2 + $0x18] sm:$0xf]
  %v200 = vld [vmem:[#allocation2 + $0x1c] sm:$0xf]
  %v201 = vld [vmem:[#allocation2 + $0x20] sm:$0xf]
  %v202 = vld [vmem:[#allocation2 + $0x24] sm:$0xf]
  %v203 = vld [vmem:[#allocation2 + $0x28] sm:$0xf]
  %v204 = vld [vmem:[#allocation2 + $0x2c] sm:$0xf]
  %v205 = vld [vmem:[#allocation2 + $0x30] sm:$0xf]
  %v206 = vld [vmem:[#allocation2 + $0x34] sm:$0xf]
  %v207 = vld [vmem:[#allocation2 + $0x38] sm:$0xf]
  %v208 = vld [vmem:[#allocation2 + $0x3c] sm:$0xf]
  %v209 = vld [vmem:[#allocation2 + $0x40] sm:$0xf]
  %v210 = vld [vmem:[#allocation2 + $0x44] sm:$0xf]
  %v215 = vunpack.c.l.b16 %v189
  %v216 = vunpack.c.h.b16 %v189
  %v217 = vunpack.c.l.b16 %v190
  %v218 = vunpack.c.h.b16 %v190
  %v219 = vunpack.c.l.b16 %v191
  %v220 = vunpack.c.h.b16 %v191
  %v221 = vunpack.c.l.b16 %v192
  %v222 = vunpack.c.h.b16 %v192
  %v223 = vpack.c.b16 %v217, %v215
  %v224 = vpack.c.b16 %v218, %v216
  %v225 = vpack.c.b16 %v221, %v219
  %v226 = vpack.c.b16 %v222, %v220
  %v247 = vunpack.c.l.b16 %v193
  %v248 = vunpack.c.l.b16 %v194
  %v249 = vunpack.c.l.b16 %v195
  %v250 = vunpack.c.l.b16 %v196
  %v251 = vunpack.c.l.b16 %v197
  %v252 = vunpack.c.l.b16 %v198
  %v253 = vunpack.c.l.b16 %v199
  %v254 = vunpack.c.l.b16 %v200
  %v255 = vunpack.c.l.b16 %v201
  %v256 = vunpack.c.l.b16 %v202
  %v257 = vunpack.c.l.b16 %v203
  %v258 = vunpack.c.l.b16 %v204
  %v259 = vunpack.c.l.b16 %v205
  %v260 = vunpack.c.l.b16 %v206
  %v261 = vunpack.c.l.b16 %v207
  %v262 = vunpack.c.l.b16 %v208
  %v263 = vunpack.c.l.b16 %v209
  %v264 = vunpack.c.l.b16 %v210
  %v265 = vpack.c.b16 %v248, %v247
  %v266 = vpack.c.b16 %v250, %v249
  %v267 = vpack.c.b16 %v252, %v251
  %v268 = vpack.c.b16 %v254, %v253
  %v269 = vpack.c.b16 %v256, %v255
  %v270 = vpack.c.b16 %v258, %v257
  %v271 = vpack.c.b16 %v260, %v259
  %v272 = vpack.c.b16 %v262, %v261
  %v273 = vpack.c.b16 %v264, %v263
  %vm283 = vcmask 130048
  %v285 = vsel %vm283, %v224, 0
  %v288 = vsel %vm283, %v226, 0
  %290 = vmatprep.subr.bf16.mxu0 0
  %291 = vmatpush1.bf16.msra.mxu0 %v272
  %292 = vmatprep.subr.bf16.mxu0 0
  %293 = vmatpush1.bf16.msra.mxu0 %v271
  %294 = vmatprep.subr.bf16.mxu0 0
  %295 = vmatpush1.bf16.msra.mxu0 %v270
  %296 = vmatprep.subr.bf16.mxu0 0
  %297 = vmatpush1.bf16.msra.mxu0 %v269
  %298 = vmatprep.subr.bf16.mxu0 0
  %299 = vmatpush1.bf16.msra.mxu0 %v268
  %300 = vmatprep.subr.bf16.mxu0 0
  %301 = vmatpush1.bf16.msra.mxu0 %v267
  %302 = vmatprep.subr.bf16.mxu0 0
  %303 = vmatpush1.bf16.msra.mxu0 %v266
  %304 = vmatprep.subr.bf16.mxu0 0
  %305 = vmatpush1.bf16.msra.mxu0 %v265
  %306 = vmatprep.subr.bf16.mxu0 0
  %307 = vmatpush2.bf16.msra.mxu0 0
  %308 = vmatprep.subr.bf16.mxu0 0
  %309 = vmatpush2.bf16.msra.mxu0 0
  %310 = vmatprep.subr.bf16.mxu0 0
  %311 = vmatpush2.bf16.msra.mxu0 0
  %312 = vmatprep.subr.bf16.mxu0 0
  %313 = vmatpush2.bf16.msra.mxu0 0
  %314 = vmatprep.subr.bf16.mxu0 0
  %315 = vmatpush2.bf16.msra.mxu0 0
  %316 = vmatprep.subr.bf16.mxu0 0
  %317 = vmatpush2.bf16.msra.mxu0 0
  %318 = vmatprep.subr.bf16.mxu0 0
  %319 = vmatpush2.bf16.msra.mxu0 0
  %320 = vmatprep.subr.bf16.mxu0 0
  %321 = vmatpush2.bf16.msra.mxu0 %v273
  %322 = vmatprep.mubr.bf16.mxu0 %v285
  %323 = vmatmul.mubr.bf16.gmra.mxu0 %v223
  %v324 = vpop.f32.mrf.mxu0
  %v325 = vadd.f32 0.0, %v324
  %v326 = vpop.f32.mrf.mxu0
  %v327 = vpop.f32.mrf.mxu0
  %v328 = vadd.f32 0.0, %v327
  %v329 = vpop.f32.mrf.mxu0
  %330 = vmatprep.mubr.bf16.mxu0 %v288
  %331 = vmatmul.mubr.bf16.gmra.mxu0 %v225
  %v332 = vpop.f32.mrf.mxu0
  %v333 = vadd.f32 0.0, %v332
  %v334 = vpop.f32.mrf.mxu0
  %v335 = vpop.f32.mrf.mxu0
  %v336 = vadd.f32 0.0, %v335
  %v337 = vpop.f32.mrf.mxu0
  %338 = vdwg.mxu0
  %v339 = vpack.c.bf16 %v328, %v325
  %v340 = vpack.c.bf16 %v336, %v333
  %v343 = vunpack.c.l.b16 %v339
  %v344 = vunpack.c.h.b16 %v339
  %v345 = vunpack.c.l.b16 %v340
  %v346 = vunpack.c.h.b16 %v340
  %v347 = vpack.c.b16 %v343, %v343
  %v348 = vpack.c.b16 %v344, %v344
  %v349 = vpack.c.b16 %v345, %v345
  %v350 = vpack.c.b16 %v346, %v346
  %vm355 = vcmask 27648
  %356 = vst.msk [vmem:[%s3] sm:$0xf] %vm355, %v347
  %357 = vst.msk [vmem:[%s3 + $0x4] sm:$0xf] %vm355, %v348
  %358 = vst.msk [vmem:[%s3 + $0x8] sm:$0xf] %vm355, %v349
  %359 = vst.msk [vmem:[%s3 + $0xc] sm:$0xf] %vm355, %v350
  %v360 = vld [vmem:[%s2] sm:$0x1]
  %v362 = vlaneseq
  %v363 = vshrl.u32 %v362, 7
  %v364 = vsub.s32 0, %v363
  %v365 = vrot.slane %v360, %v364
  %v367 = vmul.f32 %v325, %v365
  %v368 = vmul.f32 %v328, %v365
  %v369 = vmul.f32 %v333, %v365
  %v370 = vmul.f32 %v336, %v365
  %vm371 = vcmask 31744
  %v372 = vsel %vm371, %v367, 0.0
  %373 = vadd.xlane.f32.xlu0 %v372
  %v374 = vpop.xlane.xlu0 %373
  %v375 = vsel %vm371, %v368, 0.0
  %376 = vadd.xlane.f32.xlu0 %v375
  %v377 = vpop.xlane.xlu0 %376
  %v378 = vsel %vm371, %v369, 0.0
  %379 = vadd.xlane.f32.xlu0 %v378
  %v380 = vpop.xlane.xlu0 %379
  %v381 = vsel %vm371, %v370, 0.0
  %382 = vadd.xlane.f32.xlu0 %v381
  %v383 = vpop.xlane.xlu0 %382
  %v384 = vmul.f32 %v374, 0.5
  %v385 = vmul.f32 %v377, 0.5
  %v386 = vmul.f32 %v380, 0.5
  %v387 = vmul.f32 %v383, 0.5
  %v388 = vsub.f32 %v325, %v384
  %v389 = vsub.f32 %v328, %v385
  %v390 = vsub.f32 %v333, %v386
  %v391 = vsub.f32 %v336, %v387
  %v392 = vmul.f32 %v388, %v365
  %v393 = vmul.f32 %v389, %v365
  %v394 = vmul.f32 %v390, %v365
  %v395 = vmul.f32 %v391, %v365
  %vm396 = vcmask 7168
  %397 = vst.msk [vmem:[%s4] sm:$0xff] %vm396, %v384
  %398 = vst.msk [vmem:[%s4 + $0x8] sm:$0xff] %vm396, %v385
  %399 = vst.msk [vmem:[%s4 + $0x10] sm:$0xff] %vm396, %v386
  %400 = vst.msk [vmem:[%s4 + $0x18] sm:$0xff] %vm396, %v387
  %v401 = vmul.f32 %v392, %v392
  %v402 = vmul.f32 %v393, %v393
  %v403 = vmul.f32 %v394, %v394
  %v404 = vmul.f32 %v395, %v395
  %v405 = vsel %vm371, %v401, 0.0
  %406 = vadd.xlane.f32.xlu0 %v405
  %v407 = vpop.xlane.xlu0 %406
  %v408 = vsel %vm371, %v402, 0.0
  %409 = vadd.xlane.f32.xlu0 %v408
  %v410 = vpop.xlane.xlu0 %409
  %v411 = vsel %vm371, %v403, 0.0
  %412 = vadd.xlane.f32.xlu0 %v411
  %v413 = vpop.xlane.xlu0 %412
  %v414 = vsel %vm371, %v404, 0.0
  %415 = vadd.xlane.f32.xlu0 %v414
  %v416 = vpop.xlane.xlu0 %415
  %417 = vst.msk [vmem:[%s5] sm:$0xff] %vm396, %v407
  %418 = vst.msk [vmem:[%s5 + $0x8] sm:$0xff] %vm396, %v410
  %419 = vst.msk [vmem:[%s5 + $0x10] sm:$0xff] %vm396, %v413
  %420 = vst.msk [vmem:[%s5 + $0x18] sm:$0xff] %vm396, %v416
  // Predicated region
  $region14: #{encoder_forward.14} parent=0 // pred_check
    _
  $region15: #{encoder_forward.14} parent=0 // pred_check_branch
    %422 = sbr.rel (0) target = $region17
  $region16: #{encoder_forward.14} parent=0 // pred_region
    _
  $region17: #{encoder_forward.14} parent=0 // pred_fallthru
    _
  // Predicated region
  $region18: #{encoder_forward.14} parent=0 // pred_check
    _
  $region19: #{encoder_forward.14} parent=0 // pred_check_branch
    %424 = sbr.rel (0) target = $region21
  $region20: #{encoder_forward.14} parent=0 // pred_region
    _
  $region21: #{encoder_forward.14} parent=0 // pred_fallthru
    _
  // Predicated region
  $region22: #{encoder_forward.14} parent=0 // pred_check
    _
  $region23: #{encoder_forward.14} parent=0 // pred_check_branch
    %426 = sbr.rel (0) target = $region25
  $region24: #{encoder_forward.14} parent=0 // pred_region
    _
  $region25: #{encoder_forward.14} parent=0 // pred_fallthru
    _
  // Predicated region
  $region26: #{encoder_forward.14} parent=0 // pred_check
    _
  $region27: #{encoder_forward.14} parent=0 // pred_check_branch
    %428 = sbr.rel (0) target = $region29
  $region28: #{encoder_forward.14} parent=0 // pred_region
    _
  $region29: #{encoder_forward.14} parent=0 // pred_fallthru
    _
  // Predicated region
  $region30: #{encoder_forward.14} parent=0 // pred_check
    _
  $region31: #{encoder_forward.14} parent=0 // pred_check_branch
    %430 = sbr.rel (0) target = $region33
  $region32: #{encoder_forward.14} parent=0 // pred_region
    _
  $region33: #{encoder_forward.14} parent=0 // pred_fallthru
    _
  // Predicated region
  $region34: #{encoder_forward.14} parent=0 // pred_check
    _
  $region35: #{encoder_forward.14} parent=0 // pred_check_branch
    %432 = sbr.rel (0) target = $region37
  $region36: #{encoder_forward.14} parent=0 // pred_region
    _
  $region37: #{encoder_forward.14} parent=0 // pred_fallthru
    _

// kernel: encoder_forward.15
$region0: #{encoder_forward.15}
  #allocation0 [shape = 'u32[]', space=smem, size = 0x4, offset = 0x4, fixed_abs, tag = 'smem constant byte address 0x4 - core index']
  #allocation1 [shape = 'u32[144,128]{1,0:T(1,128)}', space=vmem, size = 0x12000, scoped, tag = 'internal scratch']
  %s0 = inlined_call_operand.vmem [shape: bf16[1,32,4], index: 0, kind: input, shape index: {}]
  %s1 = inlined_call_operand.vmem [shape: f32[32,1], index: 1, kind: input, shape index: {}]
  %s2 = inlined_call_operand.vmem [shape: f32[32,1], index: 2, kind: input, shape index: {}]
  %s3 = inlined_call_operand.vmem [shape: f32[4,2], index: 3, kind: input, shape index: {}]
  %s4 = inlined_call_operand.vmem [shape: f32[16,32], index: 4, kind: input, shape index: {}]
  %s5 = inlined_call_operand.vmem [shape: f32[16,1], index: 5, kind: input, shape index: {}]
  %s6 = inlined_call_operand.vmem [shape: f32[1,16,2], index: 6, kind: output, shape index: {}]
  %s7 = sld [smem:[#allocation0]]
  $region34: #{encoder_forward.15} parent=0
    _
  %s9 = ssub.s32 1, %s7
  %s10 = scalar_select 0, %s9, %s7
  // Predicated region
  $region2: #{encoder_forward.15} parent=0 // pred_check
    _
  $region3: #{encoder_forward.15} parent=0 // pred_check_branch
    %12 = sbr.rel (0) target = $region5
  $region4: #{encoder_forward.15} parent=0 // pred_region
    _
  $region5: #{encoder_forward.15} parent=0 // pred_fallthru
    _
  // Predicated region
  $region6: #{encoder_forward.15} parent=0 // pred_check
    _
  $region7: #{encoder_forward.15} parent=0 // pred_check_branch
    %14 = sbr.rel (0) target = $region9
  $region8: #{encoder_forward.15} parent=0 // pred_region
    _
  $region9: #{encoder_forward.15} parent=0 // pred_fallthru
    _
  // Predicated region
  $region10: #{encoder_forward.15} parent=0 // pred_check
    _
  $region11: #{encoder_forward.15} parent=0 // pred_check_branch
    %16 = sbr.rel (0) target = $region13
  $region12: #{encoder_forward.15} parent=0 // pred_region
    _
  $region13: #{encoder_forward.15} parent=0 // pred_fallthru
    _
  // Predicated region
  $region14: #{encoder_forward.15} parent=0 // pred_check
    _
  $region15: #{encoder_forward.15} parent=0 // pred_check_branch
    %18 = sbr.rel (0) target = $region17
  $region16: #{encoder_forward.15} parent=0 // pred_region
    _
  $region17: #{encoder_forward.15} parent=0 // pred_fallthru
    _
  // Predicated region
  $region18: #{encoder_forward.15} parent=0 // pred_check
    _
  $region19: #{encoder_forward.15} parent=0 // pred_check_branch
    %20 = sbr.rel (0) target = $region21
  $region20: #{encoder_forward.15} parent=0 // pred_region
    _
  $region21: #{encoder_forward.15} parent=0 // pred_fallthru
    _
  // Predicated region
  $region22: #{encoder_forward.15} parent=0 // pred_check
    _
  $region23: #{encoder_forward.15} parent=0 // pred_check_branch
    %22 = sbr.rel (0) target = $region25
  $region24: #{encoder_forward.15} parent=0 // pred_region
    _
  $region25: #{encoder_forward.15} parent=0 // pred_fallthru
    _
  %v23 = vld [vmem:[%s0] sm:$0xf]
  %v24 = vld [vmem:[%s0 + $0x4] sm:$0xf]
  %v25 = vld [vmem:[%s0 + $0x8] sm:$0xf]
  %v26 = vld [vmem:[%s0 + $0xc] sm:$0xf]
  %v27 = vunpack.c.l.bf16 %v23
  %v28 = vunpack.c.l.bf16 %v24
  %v29 = vunpack.c.l.bf16 %v25
  %v30 = vunpack.c.l.bf16 %v26
  %v31 = vld [vmem:[%s1] sm:$0xff]
  %v32 = vld [vmem:[%s1 + $0x8] sm:$0xff]
  %v33 = vld [vmem:[%s1 + $0x10] sm:$0xff]
  %v34 = vld [vmem:[%s1 + $0x18] sm:$0xff]
  %36 = vset.pattern.permute.xlu0 0
  %37 = vperm.xlu0 %36, %v31
  %v38 = vpop.permute.xlu0 %37
  %41 = vset.pattern.permute.xlu0 0
  %42 = vperm.xlu0 %41, %v32
  %v43 = vpop.permute.xlu0 %42
  %46 = vset.pattern.permute.xlu0 0
  %47 = vperm.xlu0 %46, %v33
  %v48 = vpop.permute.xlu0 %47
  %51 = vset.pattern.permute.xlu0 0
  %52 = vperm.xlu0 %51, %v34
  %v53 = vpop.permute.xlu0 %52
  %v55 = vmul.f32 %v27, %v38
  %v56 = vmul.f32 %v28, %v43
  %v57 = vmul.f32 %v29, %v48
  %v58 = vmul.f32 %v30, %v53
  %v59 = vld [vmem:[%s2] sm:$0xff]
  %v60 = vld [vmem:[%s2 + $0x8] sm:$0xff]
  %v61 = vld [vmem:[%s2 + $0x10] sm:$0xff]
  %v62 = vld [vmem:[%s2 + $0x18] sm:$0xff]
  %64 = vset.pattern.permute.xlu0 0
  %65 = vperm.xlu0 %64, %v59
  %v66 = vpop.permute.xlu0 %65
  %69 = vset.pattern.permute.xlu0 0
  %70 = vperm.xlu0 %69, %v60
  %v71 = vpop.permute.xlu0 %70
  %74 = vset.pattern.permute.xlu0 0
  %75 = vperm.xlu0 %74, %v61
  %v76 = vpop.permute.xlu0 %75
  %79 = vset.pattern.permute.xlu0 0
  %80 = vperm.xlu0 %79, %v62
  %v81 = vpop.permute.xlu0 %80
  %v83 = vadd.f32 %v55, %v66
  %v84 = vadd.f32 %v56, %v71
  %v85 = vadd.f32 %v57, %v76
  %v86 = vadd.f32 %v58, %v81
  %vm87 = vcmp.gt.f32.partialorder %v83, 0.0
  %vm88 = vcmp.gt.f32.partialorder %v84, 0.0
  %vm89 = vcmp.gt.f32.partialorder %v85, 0.0
  %vm90 = vcmp.gt.f32.partialorder %v86, 0.0
  %v91 = vmul.f32 %v83, 0.2
  %v92 = vmul.f32 %v84, 0.2
  %v93 = vmul.f32 %v85, 0.2
  %v94 = vmul.f32 %v86, 0.2
  %v95 = vsel %vm87, %v83, %v91
  %v96 = vsel %vm88, %v84, %v92
  %v97 = vsel %vm89, %v85, %v93
  %v98 = vsel %vm90, %v86, %v94
  %v99 = vld [vmem:[%s3] sm:$0xf]
  %vm100 = vcmask 31744
  %v102 = vsel %vm100, %v95, 0
  %v105 = vsel %vm100, %v96, 0
  %v108 = vsel %vm100, %v97, 0
  %v111 = vsel %vm100, %v98, 0
  %vm113 = vcmask 1043456
  %v115 = vsel %vm113, %v99, 0
  %117 = vmatprep.subr.mxu0 0.0
  %118 = vmatpush1.msra.mxu0 0.0
  %119 = vmatprep.subr.mxu0 0.0
  %120 = vmatpush1.msra.mxu0 0.0
  %121 = vmatprep.subr.mxu0 0.0
  %122 = vmatpush1.msra.mxu0 0.0
  %123 = vmatprep.subr.mxu0 0.0
  %124 = vmatpush1.msra.mxu0 0.0
  %125 = vmatprep.subr.mxu0 0.0
  %126 = vmatpush1.msra.mxu0 0.0
  %127 = vmatprep.subr.mxu0 0.0
  %128 = vmatpush1.msra.mxu0 0.0
  %129 = vmatprep.subr.mxu0 0.0
  %130 = vmatpush1.msra.mxu0 0.0
  %131 = vmatprep.subr.mxu0 0.0
  %132 = vmatpush1.msra.mxu0 0.0
  %133 = vmatprep.subr.mxu0 0.0
  %134 = vmatpush1.msra.mxu0 0.0
  %135 = vmatprep.subr.mxu0 0.0
  %136 = vmatpush1.msra.mxu0 0.0
  %137 = vmatprep.subr.mxu0 0.0
  %138 = vmatpush1.msra.mxu0 0.0
  %139 = vmatprep.subr.mxu0 0.0
  %140 = vmatpush1.msra.mxu0 0.0
  %141 = vmatprep.subr.mxu0 0.0
  %142 = vmatpush1.msra.mxu0 0.0
  %143 = vmatprep.subr.mxu0 0.0
  %144 = vmatpush1.msra.mxu0 0.0
  %145 = vmatprep.subr.mxu0 0.0
  %146 = vmatpush1.msra.mxu0 0.0
  %147 = vmatprep.subr.mxu0 0.0
  %148 = vmatpush1.msra.mxu0 %v115
  %149 = vmatprep.subr.mxu0 0.0
  %150 = vmatpush2.msra.mxu0 0.0
  %151 = vmatprep.subr.mxu0 0.0
  %152 = vmatpush2.msra.mxu0 0.0
  %153 = vmatprep.subr.mxu0 0.0
  %154 = vmatpush2.msra.mxu0 0.0
  %155 = vmatprep.subr.mxu0 0.0
  %156 = vmatpush2.msra.mxu0 0.0
  %157 = vmatprep.subr.mxu0 0.0
  %158 = vmatpush2.msra.mxu0 0.0
  %159 = vmatprep.subr.mxu0 0.0
  %160 = vmatpush2.msra.mxu0 0.0
  %161 = vmatprep.subr.mxu0 0.0
  %162 = vmatpush2.msra.mxu0 0.0
  %163 = vmatprep.subr.mxu0 0.0
  %164 = vmatpush2.msra.mxu0 0.0
  %165 = vmatprep.subr.mxu0 0.0
  %166 = vmatpush2.msra.mxu0 0.0
  %167 = vmatprep.subr.mxu0 0.0
  %168 = vmatpush2.msra.mxu0 0.0
  %169 = vmatprep.subr.mxu0 0.0
  %170 = vmatpush2.msra.mxu0 0.0
  %171 = vmatprep.subr.mxu0 0.0
  %172 = vmatpush2.msra.mxu0 0.0
  %173 = vmatprep.subr.mxu0 0.0
  %174 = vmatpush2.msra.mxu0 0.0
  %175 = vmatprep.subr.mxu0 0.0
  %176 = vmatpush2.msra.mxu0 0.0
  %177 = vmatprep.subr.mxu0 0.0
  %178 = vmatpush2.msra.mxu0 0.0
  %179 = vmatprep.subr.mxu0 0.0
  %180 = vmatpush2.msra.mxu0 0.0
  %181 = vmatprep.mubr.f32.mxu0 0.0
  %182 = vmatmul.mubr.f32.gmra.mxu0 %v102
  %v183 = vpop.f32.mrf.mxu0
  %v184 = vadd.f32 0.0, %v183
  %v185 = vpop.f32.mrf.mxu0
  %186 = vmatprep.mubr.f32.mxu0 0.0
  %187 = vmatmul.mubr.f32.gmra.mxu0 %v105
  %v188 = vpop.f32.mrf.mxu0
  %v189 = vadd.f32 0.0, %v188
  %v190 = vpop.f32.mrf.mxu0
  %191 = vmatprep.mubr.f32.mxu0 0.0
  %192 = vmatmul.mubr.f32.gmra.mxu0 %v108
  %v193 = vpop.f32.mrf.mxu0
  %v194 = vadd.f32 0.0, %v193
  %v195 = vpop.f32.mrf.mxu0
  %196 = vmatprep.mubr.f32.mxu0 0.0
  %197 = vmatmul.mubr.f32.gmra.mxu0 %v111
  %v198 = vpop.f32.mrf.mxu0
  %v199 = vadd.f32 0.0, %v198
  %v200 = vpop.f32.mrf.mxu0
  %201 = vdwg.mxu0
  %v202 = vld [vmem:[%s4] sm:$0xff]
  %v203 = vld [vmem:[%s4 + $0x8] sm:$0xff]
  %v204 = vld [vmem:[%s5] sm:$0xff]
  %v205 = vld [vmem:[%s5 + $0x8] sm:$0xff]
  %207 = vset.pattern.permute.xlu0 0
  %208 = vperm.xlu0 %207, %v204
  %v209 = vpop.permute.xlu0 %208
  %212 = vset.pattern.permute.xlu0 0
  %213 = vperm.xlu0 %212, %v205
  %v214 = vpop.permute.xlu0 %213
  %vm216 = vcmask 261120
  %v218 = vsel %vm216, %v202, 0
  %v221 = vsel %vm216, %v203, 0
  %223 = vmatprep.subr.mxu0 0.0
  %224 = vmatpush1.msra.mxu0 0.0
  %225 = vmatprep.subr.mxu0 0.0
  %226 = vmatpush1.msra.mxu0 0.0
  %227 = vmatprep.subr.mxu0 0.0
  %228 = vmatpush1.msra.mxu0 0.0
  %229 = vmatprep.subr.mxu0 0.0
  %230 = vmatpush1.msra.mxu0 0.0
  %231 = vmatprep.subr.mxu0 0.0
  %232 = vmatpush1.msra.mxu0 0.0
  %233 = vmatprep.subr.mxu0 0.0
  %234 = vmatpush1.msra.mxu0 0.0
  %235 = vmatprep.subr.mxu0 0.0
  %236 = vmatpush1.msra.mxu0 0.0
  %237 = vmatprep.subr.mxu0 0.0
  %238 = vmatpush1.msra.mxu0 0.0
  %239 = vmatprep.subr.mxu0 0.0
  %240 = vmatpush1.msra.mxu0 0.0
  %241 = vmatprep.subr.mxu0 0.0
  %242 = vmatpush1.msra.mxu0 0.0
  %243 = vmatprep.subr.mxu0 0.0
  %244 = vmatpush1.msra.mxu0 0.0
  %245 = vmatprep.subr.mxu0 0.0
  %246 = vmatpush1.msra.mxu0 0.0
  %247 = vmatprep.subr.mxu0 0.0
  %248 = vmatpush1.msra.mxu0 %v199
  %249 = vmatprep.subr.mxu0 0.0
  %250 = vmatpush1.msra.mxu0 %v194
  %251 = vmatprep.subr.mxu0 0.0
  %252 = vmatpush1.msra.mxu0 %v189
  %253 = vmatprep.subr.mxu0 0.0
  %254 = vmatpush1.msra.mxu0 %v184
  %255 = vmatprep.subr.mxu0 0.0
  %256 = vmatpush2.msra.mxu0 0.0
  %257 = vmatprep.subr.mxu0 0.0
  %258 = vmatpush2.msra.mxu0 0.0
  %259 = vmatprep.subr.mxu0 0.0
  %260 = vmatpush2.msra.mxu0 0.0
  %261 = vmatprep.subr.mxu0 0.0
  %262 = vmatpush2.msra.mxu0 0.0
  %263 = vmatprep.subr.mxu0 0.0
  %264 = vmatpush2.msra.mxu0 0.0
  %265 = vmatprep.subr.mxu0 0.0
  %266 = vmatpush2.msra.mxu0 0.0
  %267 = vmatprep.subr.mxu0 0.0
  %268 = vmatpush2.msra.mxu0 0.0
  %269 = vmatprep.subr.mxu0 0.0
  %270 = vmatpush2.msra.mxu0 0.0
  %271 = vmatprep.subr.mxu0 0.0
  %272 = vmatpush2.msra.mxu0 0.0
  %273 = vmatprep.subr.mxu0 0.0
  %274 = vmatpush2.msra.mxu0 0.0
  %275 = vmatprep.subr.mxu0 0.0
  %276 = vmatpush2.msra.mxu0 0.0
  %277 = vmatprep.subr.mxu0 0.0
  %278 = vmatpush2.msra.mxu0 0.0
  %279 = vmatprep.subr.mxu0 0.0
  %280 = vmatpush2.msra.mxu0 0.0
  %281 = vmatprep.subr.mxu0 0.0
  %282 = vmatpush2.msra.mxu0 0.0
  %283 = vmatprep.subr.mxu0 0.0
  %284 = vmatpush2.msra.mxu0 0.0
  %285 = vmatprep.subr.mxu0 0.0
  %286 = vmatpush2.msra.mxu0 0.0
  %287 = vmatprep.mubr.f32.mxu0 0.0
  %288 = vmatmul.mubr.f32.gmra.mxu0 %v218
  %v289 = vpop.f32.mrf.mxu0
  %v290 = vadd.f32 %v209, %v289
  %v291 = vpop.f32.mrf.mxu0
  %292 = vmatprep.mubr.f32.mxu0 0.0
  %293 = vmatmul.mubr.f32.gmra.mxu0 %v221
  %v294 = vpop.f32.mrf.mxu0
  %v295 = vadd.f32 %v214, %v294
  %v296 = vpop.f32.mrf.mxu0
  %297 = vdwg.mxu0
  %vm298 = vcmask 15360
  %299 = vst.msk [vmem:[%s6] sm:$0xff] %vm298, %v290
  %300 = vst.msk [vmem:[%s6 + $0x8] sm:$0xff] %vm298, %v295
  // Predicated region
  $region26: #{encoder_forward.15} parent=0 // pred_check
    _
  $region27: #{encoder_forward.15} parent=0 // pred_check_branch
    %302 = sbr.rel (0) target = $region29
  $region28: #{encoder_forward.15} parent=0 // pred_region
    _
  $region29: #{encoder_forward.15} parent=0 // pred_fallthru
    _
  // Predicated region
  $region30: #{encoder_forward.15} parent=0 // pred_check
    _
  $region31: #{encoder_forward.15} parent=0 // pred_check_branch
    %304 = sbr.rel (0) target = $region33
  $region32: #{encoder_forward.15} parent=0 // pred_region
    _
  $region33: #{encoder_forward.15} parent=0 // pred_fallthru
    _

</llo_original>
